<compile_context>
chip_gen: v7x
topology: tpu7x:2x2x1
jax: 0.10.0
libtpu: 0.0.40
codegen_flags: <defaults>
</compile_context>

<pallas_src>
import functools

import jax
import jax.numpy as jnp
from jax import lax
from jax.experimental import pallas as pl
from jax.experimental.pallas import tpu as pltpu


def _make_conv_relu_kernel(k, OH, OW, Kin, C_out):
    """kernel operating on one image per grid step."""

    def kernel(x_ref, w_ref, b_ref, o_ref):
        # x_ref: (1, H, Kin)          f32   one image, rows = H, lanes = C_in*W
        # w_ref: (k, Kin, OW*C_out)   bf16  banded (Toeplitz) weights, resident
        # b_ref: (1, OW*C_out)        f32   bias tiled over OW, resident
        # o_ref: (1, OH, OW*C_out)    f32   relu(conv + bias), lane-dense
        acc = jnp.zeros((OH, OW * C_out), jnp.float32)
        for kh in range(k):  # unrolled: 9 small MXU matmuls, f32 accumulate
            xs = x_ref[0, kh:kh + OH, :].astype(jnp.bfloat16)      # (OH, Kin)
            acc = acc + jnp.dot(xs, w_ref[kh],
                                preferred_element_type=jnp.float32)
        o_ref[0, :, :] = jnp.maximum(acc + b_ref[...], 0.0)

    return kernel


@functools.partial(jax.jit, static_argnames=("kernel_size",))
def conv_layer_forward(x_nchw, weight, bias, *, kernel_size):
    """relu(conv2d(x, weight, bias, stride=1, padding=VALID)), NCHW in/out."""
    N, C_in, H, W = x_nchw.shape
    C_out = weight.shape[0]
    k = kernel_size
    OH, OW = H - k + 1, W - k + 1
    Kin = C_in * W  # contraction width per kh

    # ---- tiny, fused-by-XLA preprocessing (all under jit) ------------------
    # x rows laid out as (N, H, C_in*W):  x_rows[n, h, c*W + j] = x[n, c, h, j]
    x_rows = x_nchw.transpose(0, 2, 1, 3).reshape(N, H, Kin)

    # Banded / Toeplitz-expanded weight:
    #   Wb[kh, c*W + j, ow*C_out + cout] = weight[cout, c, kh, j - ow]
    #   (zero where j - ow is outside [0, k)), so that
    #   sum_j x[n, c, oh+kh, j] * Wb[kh, c*W+j, ow*C_out+cout]
    #     = sum_kw x[n, c, oh+kh, ow+kw] * weight[cout, c, kh, kw]
    w_k = weight.transpose(2, 1, 3, 0)                       # (k, C_in, k, C_out)
    rel = jnp.arange(W)[:, None] - jnp.arange(OW)[None, :]   # (W, OW): j - ow
    valid = (rel >= 0) & (rel < k)
    rel_c = jnp.clip(rel, 0, k - 1)
    wb = w_k[:, :, rel_c, :]                                 # (k, C_in, W, OW, C_out)
    wb = jnp.where(valid[None, None, :, :, None], wb, 0.0)
    wb = wb.reshape(k, Kin, OW * C_out).astype(jnp.bfloat16)  # bf16 MXU inputs

    # Bias tiled to match the (ow*C_out + cout) output lane layout.
    b_t = jnp.tile(bias.astype(jnp.float32), OW).reshape(1, OW * C_out)

    kernel = _make_conv_relu_kernel(k, OH, OW, Kin, C_out)

    flops = 2 * N * k * OH * Kin * (OW * C_out)
    bytes_accessed = (x_rows.size * 4 + wb.size * 2 + b_t.size * 4
                      + N * OH * OW * C_out * 4)

    out = pl.pallas_call(
        kernel,
        out_shape=jax.ShapeDtypeStruct((N, OH, OW * C_out), jnp.float32),
        grid_spec=pltpu.PrefetchScalarGridSpec(
            num_scalar_prefetch=0,
            grid=(N,),                                        # one image per step
            in_specs=[
                pl.BlockSpec((1, H, Kin), lambda n: (n, 0, 0)),          # x
                pl.BlockSpec((k, Kin, OW * C_out), lambda n: (0, 0, 0)),  # Wb (resident)
                pl.BlockSpec((1, OW * C_out), lambda n: (0, 0)),          # bias (resident)
            ],
            out_specs=pl.BlockSpec((1, OH, OW * C_out), lambda n: (n, 0, 0)),
        ),
        compiler_params=pltpu.CompilerParams(
            dimension_semantics=("parallel",)),               # v7x: 2 TCs split batch
        cost_estimate=pl.CostEstimate(
            flops=flops, transcendentals=0, bytes_accessed=bytes_accessed),
    )(x_rows, wb, b_t)

    # Lane-dense kernel output -> NCHW (single XLA transpose, outside kernel).
    out = out.reshape(N, OH, OW, C_out).transpose(0, 3, 1, 2)
    return out


if __name__ == "__main__":
    # Module config: Conv2d(1, 256, kernel_size=9, stride=1) + ReLU.
    in_channels, out_channels, kernel_size = 1, 256, 9
    N, H, W = 2, 16, 16
    OH = OW = H - kernel_size + 1

    key = jax.random.PRNGKey(0)
    kx, kw_, kb = jax.random.split(key, 3)

    # Deterministic PyTorch-style init: uniform(-1/sqrt(fan_in), 1/sqrt(fan_in)).
    fan_in = in_channels * kernel_size * kernel_size
    bound = 1.0 / (fan_in ** 0.5)
    weight = jax.random.uniform(
        kw_, (out_channels, in_channels, kernel_size, kernel_size),
        jnp.float32, -bound, bound)
    bias = jax.random.uniform(kb, (out_channels,), jnp.float32, -bound, bound)
    x = jax.random.normal(kx, (N, in_channels, H, W), jnp.float32)

    y = conv_layer_forward(x, weight, bias, kernel_size=kernel_size)
    y = jax.block_until_ready(y)
    assert y.shape == (N, out_channels, OH, OW)

    # Reference 1: full-f32 module semantics (loose tol covers the bf16 input
    # quantization the kernel intentionally performs for MXU throughput).
    ref = lax.conv_general_dilated(
        x, weight, window_strides=(1, 1), padding="VALID",
        dimension_numbers=("NCHW", "OIHW", "NCHW"))
    ref = jnp.maximum(ref + bias.reshape(1, -1, 1, 1), 0.0)
    assert jnp.allclose(y, ref, atol=3e-2, rtol=3e-2)

    # Reference 2: same bf16 input quantization, f32 math -> tight tolerance.
    ref_bf = lax.conv_general_dilated(
        x.astype(jnp.bfloat16).astype(jnp.float32),
        weight.astype(jnp.bfloat16).astype(jnp.float32),
        window_strides=(1, 1), padding="VALID",
        dimension_numbers=("NCHW", "OIHW", "NCHW"))
    ref_bf = jnp.maximum(ref_bf + bias.reshape(1, -1, 1, 1), 0.0)
    assert jnp.allclose(y, ref_bf, atol=1e-3, rtol=1e-3)

    print("KERNEL_OK")
</pallas_src>

<mosaic_0001>
module attributes {stable_mosaic.version = 11 : i64} {
  func.func @kernel(%arg0: i32, %arg1: memref<1x16x16xf32, #tpu.memory_space<vmem>>, %arg2: memref<9x16x2048xbf16, #tpu.memory_space<vmem>>, %arg3: memref<1x2048xf32, #tpu.memory_space<vmem>>, %arg4: memref<1x8x2048xf32, #tpu.memory_space<vmem>>) attributes {dimension_semantics = [#tpu.dimension_semantics<parallel>], iteration_bounds = array<i64: 2>, scalar_prefetch = 0 : i64, scratch_operands = 0 : i64, tpu.core_type = #tpu.core_type<tc>, window_params = [{transform_indices = @transform_0, window_bounds = array<i64: 1, 16, 16>}, {pipeline_mode = #tpu.pipeline_mode<synchronous>, transform_indices = @transform_1, window_bounds = array<i64: 9, 16, 2048>}, {pipeline_mode = #tpu.pipeline_mode<synchronous>, transform_indices = @transform_2, window_bounds = array<i64: 1, 2048>}, {transform_indices = @transform_3, window_bounds = array<i64: 1, 8, 2048>}]} {
    %cst = arith.constant 0.000000e+00 : f32
    %0 = vector.broadcast %cst : f32 to vector<8x2048xf32>
    %c0 = arith.constant 0 : index
    %c0_0 = arith.constant 0 : index
    %c0_1 = arith.constant 0 : index
    %1 = vector.load %arg1[%c0, %c0_0, %c0_1] : memref<1x16x16xf32, #tpu.memory_space<vmem>>, vector<1x8x16xf32>
    %2 = vector.shape_cast %1 : vector<1x8x16xf32> to vector<8x16xf32>
    %3 = arith.truncf %2 : vector<8x16xf32> to vector<8x16xbf16>
    %c0_2 = arith.constant 0 : index
    %c0_3 = arith.constant 0 : index
    %c0_4 = arith.constant 0 : index
    %4 = vector.load %arg2[%c0_2, %c0_3, %c0_4] : memref<9x16x2048xbf16, #tpu.memory_space<vmem>>, vector<1x16x2048xbf16>
    %5 = vector.shape_cast %4 : vector<1x16x2048xbf16> to vector<16x2048xbf16>
    %cst_5 = arith.constant dense<0.000000e+00> : vector<8x2048xf32>
    %6 = tpu.matmul %3, %5, %cst_5 {dimension_numbers = #tpu.dot_dimension_numbers<[1], [0], [0], [1], [0, 0, 1, 1], [], []>} : vector<8x16xbf16>, vector<16x2048xbf16>, vector<8x2048xf32> -> vector<8x2048xf32>
    %7 = arith.addf %0, %6 : vector<8x2048xf32>
    %c0_6 = arith.constant 0 : index
    %c1 = arith.constant 1 : index
    %c0_7 = arith.constant 0 : index
    %8 = vector.load %arg1[%c0_6, %c1, %c0_7] : memref<1x16x16xf32, #tpu.memory_space<vmem>>, vector<1x8x16xf32>
    %9 = vector.shape_cast %8 : vector<1x8x16xf32> to vector<8x16xf32>
    %10 = arith.truncf %9 : vector<8x16xf32> to vector<8x16xbf16>
    %c1_8 = arith.constant 1 : index
    %c0_9 = arith.constant 0 : index
    %c0_10 = arith.constant 0 : index
    %11 = vector.load %arg2[%c1_8, %c0_9, %c0_10] : memref<9x16x2048xbf16, #tpu.memory_space<vmem>>, vector<1x16x2048xbf16>
    %12 = vector.shape_cast %11 : vector<1x16x2048xbf16> to vector<16x2048xbf16>
    %cst_11 = arith.constant dense<0.000000e+00> : vector<8x2048xf32>
    %13 = tpu.matmul %10, %12, %cst_11 {dimension_numbers = #tpu.dot_dimension_numbers<[1], [0], [0], [1], [0, 0, 1, 1], [], []>} : vector<8x16xbf16>, vector<16x2048xbf16>, vector<8x2048xf32> -> vector<8x2048xf32>
    %14 = arith.addf %7, %13 : vector<8x2048xf32>
    %c0_12 = arith.constant 0 : index
    %c2 = arith.constant 2 : index
    %c0_13 = arith.constant 0 : index
    %15 = vector.load %arg1[%c0_12, %c2, %c0_13] : memref<1x16x16xf32, #tpu.memory_space<vmem>>, vector<1x8x16xf32>
    %16 = vector.shape_cast %15 : vector<1x8x16xf32> to vector<8x16xf32>
    %17 = arith.truncf %16 : vector<8x16xf32> to vector<8x16xbf16>
    %c2_14 = arith.constant 2 : index
    %c0_15 = arith.constant 0 : index
    %c0_16 = arith.constant 0 : index
    %18 = vector.load %arg2[%c2_14, %c0_15, %c0_16] : memref<9x16x2048xbf16, #tpu.memory_space<vmem>>, vector<1x16x2048xbf16>
    %19 = vector.shape_cast %18 : vector<1x16x2048xbf16> to vector<16x2048xbf16>
    %cst_17 = arith.constant dense<0.000000e+00> : vector<8x2048xf32>
    %20 = tpu.matmul %17, %19, %cst_17 {dimension_numbers = #tpu.dot_dimension_numbers<[1], [0], [0], [1], [0, 0, 1, 1], [], []>} : vector<8x16xbf16>, vector<16x2048xbf16>, vector<8x2048xf32> -> vector<8x2048xf32>
    %21 = arith.addf %14, %20 : vector<8x2048xf32>
    %c0_18 = arith.constant 0 : index
    %c3 = arith.constant 3 : index
    %c0_19 = arith.constant 0 : index
    %22 = vector.load %arg1[%c0_18, %c3, %c0_19] : memref<1x16x16xf32, #tpu.memory_space<vmem>>, vector<1x8x16xf32>
    %23 = vector.shape_cast %22 : vector<1x8x16xf32> to vector<8x16xf32>
    %24 = arith.truncf %23 : vector<8x16xf32> to vector<8x16xbf16>
    %c3_20 = arith.constant 3 : index
    %c0_21 = arith.constant 0 : index
    %c0_22 = arith.constant 0 : index
    %25 = vector.load %arg2[%c3_20, %c0_21, %c0_22] : memref<9x16x2048xbf16, #tpu.memory_space<vmem>>, vector<1x16x2048xbf16>
    %26 = vector.shape_cast %25 : vector<1x16x2048xbf16> to vector<16x2048xbf16>
    %cst_23 = arith.constant dense<0.000000e+00> : vector<8x2048xf32>
    %27 = tpu.matmul %24, %26, %cst_23 {dimension_numbers = #tpu.dot_dimension_numbers<[1], [0], [0], [1], [0, 0, 1, 1], [], []>} : vector<8x16xbf16>, vector<16x2048xbf16>, vector<8x2048xf32> -> vector<8x2048xf32>
    %28 = arith.addf %21, %27 : vector<8x2048xf32>
    %c0_24 = arith.constant 0 : index
    %c4 = arith.constant 4 : index
    %c0_25 = arith.constant 0 : index
    %29 = vector.load %arg1[%c0_24, %c4, %c0_25] : memref<1x16x16xf32, #tpu.memory_space<vmem>>, vector<1x8x16xf32>
    %30 = vector.shape_cast %29 : vector<1x8x16xf32> to vector<8x16xf32>
    %31 = arith.truncf %30 : vector<8x16xf32> to vector<8x16xbf16>
    %c4_26 = arith.constant 4 : index
    %c0_27 = arith.constant 0 : index
    %c0_28 = arith.constant 0 : index
    %32 = vector.load %arg2[%c4_26, %c0_27, %c0_28] : memref<9x16x2048xbf16, #tpu.memory_space<vmem>>, vector<1x16x2048xbf16>
    %33 = vector.shape_cast %32 : vector<1x16x2048xbf16> to vector<16x2048xbf16>
    %cst_29 = arith.constant dense<0.000000e+00> : vector<8x2048xf32>
    %34 = tpu.matmul %31, %33, %cst_29 {dimension_numbers = #tpu.dot_dimension_numbers<[1], [0], [0], [1], [0, 0, 1, 1], [], []>} : vector<8x16xbf16>, vector<16x2048xbf16>, vector<8x2048xf32> -> vector<8x2048xf32>
    %35 = arith.addf %28, %34 : vector<8x2048xf32>
    %c0_30 = arith.constant 0 : index
    %c5 = arith.constant 5 : index
    %c0_31 = arith.constant 0 : index
    %36 = vector.load %arg1[%c0_30, %c5, %c0_31] : memref<1x16x16xf32, #tpu.memory_space<vmem>>, vector<1x8x16xf32>
    %37 = vector.shape_cast %36 : vector<1x8x16xf32> to vector<8x16xf32>
    %38 = arith.truncf %37 : vector<8x16xf32> to vector<8x16xbf16>
    %c5_32 = arith.constant 5 : index
    %c0_33 = arith.constant 0 : index
    %c0_34 = arith.constant 0 : index
    %39 = vector.load %arg2[%c5_32, %c0_33, %c0_34] : memref<9x16x2048xbf16, #tpu.memory_space<vmem>>, vector<1x16x2048xbf16>
    %40 = vector.shape_cast %39 : vector<1x16x2048xbf16> to vector<16x2048xbf16>
    %cst_35 = arith.constant dense<0.000000e+00> : vector<8x2048xf32>
    %41 = tpu.matmul %38, %40, %cst_35 {dimension_numbers = #tpu.dot_dimension_numbers<[1], [0], [0], [1], [0, 0, 1, 1], [], []>} : vector<8x16xbf16>, vector<16x2048xbf16>, vector<8x2048xf32> -> vector<8x2048xf32>
    %42 = arith.addf %35, %41 : vector<8x2048xf32>
    %c0_36 = arith.constant 0 : index
    %c6 = arith.constant 6 : index
    %c0_37 = arith.constant 0 : index
    %43 = vector.load %arg1[%c0_36, %c6, %c0_37] : memref<1x16x16xf32, #tpu.memory_space<vmem>>, vector<1x8x16xf32>
    %44 = vector.shape_cast %43 : vector<1x8x16xf32> to vector<8x16xf32>
    %45 = arith.truncf %44 : vector<8x16xf32> to vector<8x16xbf16>
    %c6_38 = arith.constant 6 : index
    %c0_39 = arith.constant 0 : index
    %c0_40 = arith.constant 0 : index
    %46 = vector.load %arg2[%c6_38, %c0_39, %c0_40] : memref<9x16x2048xbf16, #tpu.memory_space<vmem>>, vector<1x16x2048xbf16>
    %47 = vector.shape_cast %46 : vector<1x16x2048xbf16> to vector<16x2048xbf16>
    %cst_41 = arith.constant dense<0.000000e+00> : vector<8x2048xf32>
    %48 = tpu.matmul %45, %47, %cst_41 {dimension_numbers = #tpu.dot_dimension_numbers<[1], [0], [0], [1], [0, 0, 1, 1], [], []>} : vector<8x16xbf16>, vector<16x2048xbf16>, vector<8x2048xf32> -> vector<8x2048xf32>
    %49 = arith.addf %42, %48 : vector<8x2048xf32>
    %c0_42 = arith.constant 0 : index
    %c7 = arith.constant 7 : index
    %c0_43 = arith.constant 0 : index
    %50 = vector.load %arg1[%c0_42, %c7, %c0_43] : memref<1x16x16xf32, #tpu.memory_space<vmem>>, vector<1x8x16xf32>
    %51 = vector.shape_cast %50 : vector<1x8x16xf32> to vector<8x16xf32>
    %52 = arith.truncf %51 : vector<8x16xf32> to vector<8x16xbf16>
    %c7_44 = arith.constant 7 : index
    %c0_45 = arith.constant 0 : index
    %c0_46 = arith.constant 0 : index
    %53 = vector.load %arg2[%c7_44, %c0_45, %c0_46] : memref<9x16x2048xbf16, #tpu.memory_space<vmem>>, vector<1x16x2048xbf16>
    %54 = vector.shape_cast %53 : vector<1x16x2048xbf16> to vector<16x2048xbf16>
    %cst_47 = arith.constant dense<0.000000e+00> : vector<8x2048xf32>
    %55 = tpu.matmul %52, %54, %cst_47 {dimension_numbers = #tpu.dot_dimension_numbers<[1], [0], [0], [1], [0, 0, 1, 1], [], []>} : vector<8x16xbf16>, vector<16x2048xbf16>, vector<8x2048xf32> -> vector<8x2048xf32>
    %56 = arith.addf %49, %55 : vector<8x2048xf32>
    %c0_48 = arith.constant 0 : index
    %c8 = arith.constant 8 : index
    %c0_49 = arith.constant 0 : index
    %57 = vector.load %arg1[%c0_48, %c8, %c0_49] : memref<1x16x16xf32, #tpu.memory_space<vmem>>, vector<1x8x16xf32>
    %58 = vector.shape_cast %57 : vector<1x8x16xf32> to vector<8x16xf32>
    %59 = arith.truncf %58 : vector<8x16xf32> to vector<8x16xbf16>
    %c8_50 = arith.constant 8 : index
    %c0_51 = arith.constant 0 : index
    %c0_52 = arith.constant 0 : index
    %60 = vector.load %arg2[%c8_50, %c0_51, %c0_52] : memref<9x16x2048xbf16, #tpu.memory_space<vmem>>, vector<1x16x2048xbf16>
    %61 = vector.shape_cast %60 : vector<1x16x2048xbf16> to vector<16x2048xbf16>
    %cst_53 = arith.constant dense<0.000000e+00> : vector<8x2048xf32>
    %62 = tpu.matmul %59, %61, %cst_53 {dimension_numbers = #tpu.dot_dimension_numbers<[1], [0], [0], [1], [0, 0, 1, 1], [], []>} : vector<8x16xbf16>, vector<16x2048xbf16>, vector<8x2048xf32> -> vector<8x2048xf32>
    %63 = arith.addf %56, %62 : vector<8x2048xf32>
    %c0_54 = arith.constant 0 : index
    %c0_55 = arith.constant 0 : index
    %64 = vector.load %arg3[%c0_54, %c0_55] : memref<1x2048xf32, #tpu.memory_space<vmem>>, vector<1x2048xf32>
    %65 = vector.broadcast %64 : vector<1x2048xf32> to vector<8x2048xf32>
    %66 = arith.addf %63, %65 : vector<8x2048xf32>
    %cst_56 = arith.constant 0.000000e+00 : f32
    %67 = vector.broadcast %cst_56 : f32 to vector<8x2048xf32>
    %68 = arith.maximumf %66, %67 : vector<8x2048xf32>
    %c0_57 = arith.constant 0 : index
    %c0_58 = arith.constant 0 : index
    %c0_59 = arith.constant 0 : index
    %69 = vector.load %arg4[%c0_57, %c0_58, %c0_59] : memref<1x8x2048xf32, #tpu.memory_space<vmem>>, vector<1x8x2048xf32>
    %70 = vector.shape_cast %69 : vector<1x8x2048xf32> to vector<8x2048xf32>
    %71 = vector.shape_cast %68 : vector<8x2048xf32> to vector<1x8x2048xf32>
    tpu.vector_store %arg4[%c0_57, %c0_58, %c0_59], %71 {strides = array<i32>} : memref<1x8x2048xf32, #tpu.memory_space<vmem>>, vector<1x8x2048xf32>,
    return
  }
  func.func @transform_0(%arg0: i32) -> (i32, i32, i32) {
    %c0_i32 = arith.constant 0 : i32
    %c0_i32_0 = arith.constant 0 : i32
    %c0_i32_1 = arith.constant 0 : i32
    return %arg0, %c0_i32, %c0_i32_0 : i32, i32, i32
  }
  func.func @transform_1(%arg0: i32) -> (i32, i32, i32) {
    %c0_i32 = arith.constant 0 : i32
    %c0_i32_0 = arith.constant 0 : i32
    %c0_i32_1 = arith.constant 0 : i32
    %c0_i32_2 = arith.constant 0 : i32
    return %c0_i32, %c0_i32_0, %c0_i32_1 : i32, i32, i32
  }
  func.func @transform_2(%arg0: i32) -> (i32, i32) {
    %c0_i32 = arith.constant 0 : i32
    %c0_i32_0 = arith.constant 0 : i32
    %c0_i32_1 = arith.constant 0 : i32
    return %c0_i32, %c0_i32_0 : i32, i32
  }
  func.func @transform_3(%arg0: i32) -> (i32, i32, i32) {
    %c0_i32 = arith.constant 0 : i32
    %c0_i32_0 = arith.constant 0 : i32
    %c0_i32_1 = arith.constant 0 : i32
    return %arg0, %c0_i32, %c0_i32_0 : i32, i32, i32
  }
}

</mosaic_0001>

<llo_original>
// kernel: conv_layer_forward.1
$region0: #{conv_layer_forward.1}
  #allocation0 [shape = 'u32[]', space=smem, size = 0x4, offset = 0x4, fixed_abs, tag = 'smem constant byte address 0x4 - core index']
  #allocation1 [shape = 'u32[144,128]{1,0:T(1,128)}', space=vmem, size = 0x12000, scoped, tag = 'internal scratch']
  %s0 = inlined_call_operand.vmem [shape: f32[2,16,16], index: 0, kind: input, shape index: {}]
  %s1 = inlined_call_operand.vmem [shape: bf16[9,16,2048], index: 1, kind: input, shape index: {}]
  %s2 = inlined_call_operand.vmem [shape: f32[1,2048], index: 2, kind: input, shape index: {}]
  %s3 = inlined_call_operand.vmem [shape: f32[2,8,2048], index: 3, kind: output, shape index: {}]
  %s4 = sld [smem:[#allocation0]]
  $region45: #{conv_layer_forward.1} parent=0
    _
  %s6 = ssub.s32 1, %s4
  %s7 = scalar_select 0, %s6, %s4
  loop: start=0, step=1, limit=4
  $region2: #{conv_layer_forward.1} parent=0 // loop_pre_header
    _
  $region3: #{conv_layer_forward.1} parent=0 // loop_header
    %s9 = sphi 0, %s13
    %p10 = scmp.ge.s32.totalorder %s9, 4
    %s19 = sphi 0, %s21
    %s22 = sphi 0, %s19
    %s23 = sphi 0, %s22
    %s39 = sphi 0, %s23
    %s43 = sphi 0, %s43
    %s45 = sphi 0, %s43
    %s46 = sphi 0, %s45
    %s60 = sphi 0, %s46
    %s64 = sphi 0, %s64
    %s66 = sphi 0, %s64
    %s67 = sphi 0, %s66
    %s81 = sphi 0, %s67
    %s87 = sphi 0, %s89
    %s90 = sphi 0, %s87
    %s91 = sphi 0, %s90
    %s107 = sphi 0, %s91
  $region4: #{conv_layer_forward.1} parent=0 // loop_header_branch
    %12 = sbr.rel (%p10) target = $region8
  $region5: #{conv_layer_forward.1} parent=0 // loop_body
    %s14 = ssub.s32 %s9, 1
    %s15 = ssub.s32 %s9, 2
    %s16 = sadd.s32 %s9, 1
    %s17 = ssub.s32 %s9, %s16
    %p18 = scmp.eq.s32.totalorder %s17, 0
    %s20 = sadd.s32 %s19, 1
    %s21 = scalar_select %p18, %s19, %s20
    %p24 = pneg %p18
    %p25 = scmp.eq.s32.totalorder %s9, 1
    %p26 = por %p24, %p25
    %p27 = scmp.ne.s32.totalorder %s19, %s22
    %p28 = scmp.eq.s32.totalorder %s9, 0
    %p29 = por %p27, %p28
    %p30 = scmp.ne.s32.totalorder %s19, %s22
    %p31 = scmp.eq.s32.totalorder %s14, 1
    %p32 = por %p30, %p31
    %p33 = scmp.ne.s32.totalorder %s22, %s23
    %p34 = scmp.eq.s32.totalorder %s14, 0
    %p35 = por %p33, %p34
    %p36 = scmp.ne.s32.totalorder %s22, %s23
    %p37 = scmp.eq.s32.totalorder %s15, 1
    %p38 = por %p36, %p37
    %p40 = scmp.ne.s32.totalorder %s23, %s39
    %p41 = scmp.eq.s32.totalorder %s15, 0
    %p42 = por %p40, %p41
    %s44 = sadd.s32 %s43, 1
    %p47 = scmp.eq.s32.totalorder %s9, 1
    %p48 = scmp.ne.s32.totalorder %s43, %s45
    %p49 = scmp.eq.s32.totalorder %s9, 0
    %p50 = por %p48, %p49
    %p51 = scmp.ne.s32.totalorder %s43, %s45
    %p52 = scmp.eq.s32.totalorder %s14, 1
    %p53 = por %p51, %p52
    %p54 = scmp.ne.s32.totalorder %s45, %s46
    %p55 = scmp.eq.s32.totalorder %s14, 0
    %p56 = por %p54, %p55
    %p57 = scmp.ne.s32.totalorder %s45, %s46
    %p58 = scmp.eq.s32.totalorder %s15, 1
    %p59 = por %p57, %p58
    %p61 = scmp.ne.s32.totalorder %s46, %s60
    %p62 = scmp.eq.s32.totalorder %s15, 0
    %p63 = por %p61, %p62
    %s65 = sadd.s32 %s64, 1
    %p68 = scmp.eq.s32.totalorder %s9, 1
    %p69 = scmp.ne.s32.totalorder %s64, %s66
    %p70 = scmp.eq.s32.totalorder %s9, 0
    %p71 = por %p69, %p70
    %p72 = scmp.ne.s32.totalorder %s64, %s66
    %p73 = scmp.eq.s32.totalorder %s14, 1
    %p74 = por %p72, %p73
    %p75 = scmp.ne.s32.totalorder %s66, %s67
    %p76 = scmp.eq.s32.totalorder %s14, 0
    %p77 = por %p75, %p76
    %p78 = scmp.ne.s32.totalorder %s66, %s67
    %p79 = scmp.eq.s32.totalorder %s15, 1
    %p80 = por %p78, %p79
    %p82 = scmp.ne.s32.totalorder %s67, %s81
    %p83 = scmp.eq.s32.totalorder %s15, 0
    %p84 = por %p82, %p83
    %s85 = ssub.s32 %s9, %s16
    %p86 = scmp.eq.s32.totalorder %s85, 0
    %s88 = sadd.s32 %s87, 1
    %s89 = scalar_select %p86, %s87, %s88
    %p92 = pneg %p86
    %p93 = scmp.eq.s32.totalorder %s9, 1
    %p94 = por %p92, %p93
    %p95 = scmp.ne.s32.totalorder %s87, %s90
    %p96 = scmp.eq.s32.totalorder %s9, 0
    %p97 = por %p95, %p96
    %p98 = scmp.ne.s32.totalorder %s87, %s90
    %p99 = scmp.eq.s32.totalorder %s14, 1
    %p100 = por %p98, %p99
    %p101 = scmp.ne.s32.totalorder %s90, %s91
    %p102 = scmp.eq.s32.totalorder %s14, 0
    %p103 = por %p101, %p102
    %p104 = scmp.ne.s32.totalorder %s90, %s91
    %p105 = scmp.eq.s32.totalorder %s15, 1
    %p106 = por %p104, %p105
    %p108 = scmp.ne.s32.totalorder %s91, %s107
    %p109 = scmp.eq.s32.totalorder %s15, 0
    %p110 = por %p108, %p109
    %p111 = scmp.le.s32.totalorder 1, %s9
    %p112 = scmp.lt.s32.totalorder %s9, 3
    %p113 = pnand %p111, %p112
    %p114 = pneg %p113
    // Predicated region
    $region9: #{conv_layer_forward.1} parent=5 // pred_check
      _
    $region10: #{conv_layer_forward.1} parent=5 // pred_check_branch
      %116 = sbr.rel (%p113) target = $region12
    $region11: #{conv_layer_forward.1} parent=5 // pred_region
      %s117 = ssub.s32 %s9, 1
      // Predicated region
      $region13: #{conv_layer_forward.1} parent=11 // pred_check
        %p118 = pneg %p56
      $region14: #{conv_layer_forward.1} parent=11 // pred_check_branch
        %120 = sbr.rel (%p118) target = $region16
      $region15: #{conv_layer_forward.1} parent=11 // pred_region
        _
      $region16: #{conv_layer_forward.1} parent=11 // pred_fallthru
        _
      // Predicated region
      $region17: #{conv_layer_forward.1} parent=11 // pred_check
        %p121 = pneg %p77
      $region18: #{conv_layer_forward.1} parent=11 // pred_check_branch
        %123 = sbr.rel (%p121) target = $region20
      $region19: #{conv_layer_forward.1} parent=11 // pred_region
        _
      $region20: #{conv_layer_forward.1} parent=11 // pred_fallthru
        _
    $region12: #{conv_layer_forward.1} parent=5 // pred_fallthru
      _
    %p124 = scmp.lt.s32.totalorder %s9, 2
    // Predicated region
    $region21: #{conv_layer_forward.1} parent=5 // pred_check
      %p125 = pneg %p124
    $region22: #{conv_layer_forward.1} parent=5 // pred_check_branch
      %127 = sbr.rel (%p125) target = $region24
    $region23: #{conv_layer_forward.1} parent=5 // pred_region
      // Predicated region
      $region25: #{conv_layer_forward.1} parent=23 // pred_check
        %p128 = pneg %p29
      $region26: #{conv_layer_forward.1} parent=23 // pred_check_branch
        %130 = sbr.rel (%p128) target = $region28
      $region27: #{conv_layer_forward.1} parent=23 // pred_region
        %p131 = scmp.lt.s32.totalorder %s9, 1
        %s132 = scalar_select %p131, %s9, 1
        %s133 = smul.addr %s132, 2
        %s134 = smul.addr %s133, 8
        %s135 = scalar_lea.vmem %s0, %s134
      $region28: #{conv_layer_forward.1} parent=23 // pred_fallthru
        _
    $region24: #{conv_layer_forward.1} parent=5 // pred_fallthru
      _
    %p136 = scmp.le.s32.totalorder 1, %s9
    %p137 = scmp.lt.s32.totalorder %s9, 3
    %p138 = pnand %p136, %p137
    %p139 = pneg %p138
    // Predicated region
    $region29: #{conv_layer_forward.1} parent=5 // pred_check
      _
    $region30: #{conv_layer_forward.1} parent=5 // pred_check_branch
      %141 = sbr.rel (%p138) target = $region32
    $region31: #{conv_layer_forward.1} parent=5 // pred_region
      %s142 = ssub.s32 %s9, 1
      %p143 = scmp.lt.s32.totalorder %s14, 1
      %s144 = scalar_select %p143, %s14, 1
      %s145 = smul.addr %s144, 2
      %s146 = smul.addr %s145, 8
      %s147 = scalar_lea.vmem %s0, %s146
      %p148 = pneg %p35
      %p149 = pneg %p32
      %p150 = pneg %p56
      %p151 = pneg %p53
      %p152 = pneg %p77
      %p153 = pneg %p74
      %p154 = pneg %p103
      %p155 = pneg %p100
      %p156 = scmp.lt.s32.totalorder %s14, 1
      %s157 = scalar_select %p156, %s14, 1
      %s158 = smul.addr %s157, 16
      %s159 = smul.addr %s158, 8
      %s160 = scalar_lea.vmem %s3, %s159
      %p161 = scmp.lt.s32.totalorder %s14, 1
      %s162 = scalar_select %p161, %s14, 1
      %s163 = smul.addr %s162, 2
      %s164 = smul.addr %s163, 8
      %s165 = scalar_lea.vmem %s0, %s164
      %p166 = scmp.lt.s32.totalorder %s14, 1
      %s167 = scalar_select %p166, %s14, 1
      %s168 = smul.addr %s167, 16
      %s169 = smul.addr %s168, 8
      %s170 = scalar_lea.vmem %s3, %s169
      %v172 = vld [vmem:[%s165] sm:$0xff]
      %v173 = vpack.c.bf16 %v172, %v172
      %v174 = vld [vmem:[%s1] sm:$0xff]
      %v175 = vld [vmem:[%s1 + $0x8] sm:$0xff]
      %v176 = vld [vmem:[%s1 + $0x10] sm:$0xff]
      %v177 = vld [vmem:[%s1 + $0x18] sm:$0xff]
      %v178 = vld [vmem:[%s1 + $0x20] sm:$0xff]
      %v179 = vld [vmem:[%s1 + $0x28] sm:$0xff]
      %v180 = vld [vmem:[%s1 + $0x30] sm:$0xff]
      %v181 = vld [vmem:[%s1 + $0x38] sm:$0xff]
      %v182 = vld [vmem:[%s1 + $0x40] sm:$0xff]
      %v183 = vld [vmem:[%s1 + $0x48] sm:$0xff]
      %v184 = vld [vmem:[%s1 + $0x50] sm:$0xff]
      %v185 = vld [vmem:[%s1 + $0x58] sm:$0xff]
      %v186 = vld [vmem:[%s1 + $0x60] sm:$0xff]
      %v187 = vld [vmem:[%s1 + $0x68] sm:$0xff]
      %v188 = vld [vmem:[%s1 + $0x70] sm:$0xff]
      %v189 = vld [vmem:[%s1 + $0x78] sm:$0xff]
      %v190 = vld [vmem:[%s165 + $0x1] sm:$0xff]
      %v191 = vpack.c.bf16 %v190, %v190
      %s192 = scalar_lea.vmem %s1, 128
      %v193 = vld [vmem:[%s192] sm:$0xff]
      %v194 = vld [vmem:[%s192 + $0x8] sm:$0xff]
      %v195 = vld [vmem:[%s192 + $0x10] sm:$0xff]
      %v196 = vld [vmem:[%s192 + $0x18] sm:$0xff]
      %v197 = vld [vmem:[%s192 + $0x20] sm:$0xff]
      %v198 = vld [vmem:[%s192 + $0x28] sm:$0xff]
      %v199 = vld [vmem:[%s192 + $0x30] sm:$0xff]
      %v200 = vld [vmem:[%s192 + $0x38] sm:$0xff]
      %v201 = vld [vmem:[%s192 + $0x40] sm:$0xff]
      %v202 = vld [vmem:[%s192 + $0x48] sm:$0xff]
      %v203 = vld [vmem:[%s192 + $0x50] sm:$0xff]
      %v204 = vld [vmem:[%s192 + $0x58] sm:$0xff]
      %v205 = vld [vmem:[%s192 + $0x60] sm:$0xff]
      %v206 = vld [vmem:[%s192 + $0x68] sm:$0xff]
      %v207 = vld [vmem:[%s192 + $0x70] sm:$0xff]
      %v208 = vld [vmem:[%s192 + $0x78] sm:$0xff]
      %v225 = vunpack.c.l.b16 %v193
      %v226 = vunpack.c.h.b16 %v193
      %v227 = vunpack.c.l.b16 %v194
      %v228 = vunpack.c.h.b16 %v194
      %v229 = vunpack.c.l.b16 %v195
      %v230 = vunpack.c.h.b16 %v195
      %v231 = vunpack.c.l.b16 %v196
      %v232 = vunpack.c.h.b16 %v196
      %v233 = vunpack.c.l.b16 %v197
      %v234 = vunpack.c.h.b16 %v197
      %v235 = vunpack.c.l.b16 %v198
      %v236 = vunpack.c.h.b16 %v198
      %v237 = vunpack.c.l.b16 %v199
      %v238 = vunpack.c.h.b16 %v199
      %v239 = vunpack.c.l.b16 %v200
      %v240 = vunpack.c.h.b16 %v200
      %v241 = vunpack.c.l.b16 %v201
      %v242 = vunpack.c.h.b16 %v201
      %v243 = vunpack.c.l.b16 %v202
      %v244 = vunpack.c.h.b16 %v202
      %v245 = vunpack.c.l.b16 %v203
      %v246 = vunpack.c.h.b16 %v203
      %v247 = vunpack.c.l.b16 %v204
      %v248 = vunpack.c.h.b16 %v204
      %v249 = vunpack.c.l.b16 %v205
      %v250 = vunpack.c.h.b16 %v205
      %v251 = vunpack.c.l.b16 %v206
      %v252 = vunpack.c.h.b16 %v206
      %v253 = vunpack.c.l.b16 %v207
      %v254 = vunpack.c.h.b16 %v207
      %v255 = vunpack.c.l.b16 %v208
      %v256 = vunpack.c.h.b16 %v208
      %v257 = vpack.c.b16 %v241, %v225
      %v258 = vpack.c.b16 %v242, %v226
      %v259 = vpack.c.b16 %v243, %v227
      %v260 = vpack.c.b16 %v244, %v228
      %v261 = vpack.c.b16 %v245, %v229
      %v262 = vpack.c.b16 %v246, %v230
      %v263 = vpack.c.b16 %v247, %v231
      %v264 = vpack.c.b16 %v248, %v232
      %v265 = vpack.c.b16 %v249, %v233
      %v266 = vpack.c.b16 %v250, %v234
      %v267 = vpack.c.b16 %v251, %v235
      %v268 = vpack.c.b16 %v252, %v236
      %v269 = vpack.c.b16 %v253, %v237
      %v270 = vpack.c.b16 %v254, %v238
      %v271 = vpack.c.b16 %v255, %v239
      %v272 = vpack.c.b16 %v256, %v240
      %vm289 = vcmask 130048
      %v291 = vsel %vm289, %v191, 0
      %293 = vmatprep.subr.bf16.mxu0 %v258
      %294 = vmatpush1.bf16.msra.mxu0 %v257
      %295 = vmatprep.subr.bf16.mxu0 0
      %296 = vmatpush1.bf16.msra.mxu0 0
      %297 = vmatprep.subr.bf16.mxu0 0
      %298 = vmatpush1.bf16.msra.mxu0 0
      %299 = vmatprep.subr.bf16.mxu0 0
      %300 = vmatpush1.bf16.msra.mxu0 0
      %301 = vmatprep.subr.bf16.mxu0 0
      %302 = vmatpush1.bf16.msra.mxu0 0
      %303 = vmatprep.subr.bf16.mxu0 0
      %304 = vmatpush1.bf16.msra.mxu0 0
      %305 = vmatprep.subr.bf16.mxu0 0
      %306 = vmatpush1.bf16.msra.mxu0 0
      %307 = vmatprep.subr.bf16.mxu0 0
      %308 = vmatpush1.bf16.msra.mxu0 0
      %309 = vmatprep.subr.bf16.mxu0 0
      %310 = vmatpush1.bf16.msra.mxu0 0
      %311 = vmatprep.subr.bf16.mxu0 0
      %312 = vmatpush1.bf16.msra.mxu0 0
      %313 = vmatprep.subr.bf16.mxu0 0
      %314 = vmatpush1.bf16.msra.mxu0 0
      %315 = vmatprep.subr.bf16.mxu0 0
      %316 = vmatpush1.bf16.msra.mxu0 0
      %317 = vmatprep.subr.bf16.mxu0 0
      %318 = vmatpush1.bf16.msra.mxu0 0
      %319 = vmatprep.subr.bf16.mxu0 0
      %320 = vmatpush1.bf16.msra.mxu0 0
      %321 = vmatprep.subr.bf16.mxu0 0
      %322 = vmatpush1.bf16.msra.mxu0 0
      %323 = vmatprep.subr.bf16.mxu0 0
      %324 = vmatpush1.bf16.msra.mxu0 0
      %325 = vmatprep.mubr.bf16.mxu0 0
      %326 = vmatmul.mubr.bf16.gmra.mrb[0].mxu0 %v291
      %v327 = vpop.f32.mrb[0].mxu0
      %v328 = vadd.f32 0.0, %v327
      %v329 = vpop.f32.mrb[0].mxu0
      %v330 = vadd.f32 0.0, %v329
      %v331 = vpop.f32.mrb[0].mxu0
      %v332 = vpop.f32.mrb[0].mxu0
      %333 = vdwg.mxu0
      %334 = vmatprep.subr.bf16.mxu0 %v260
      %335 = vmatpush1.bf16.msra.mxu0 %v259
      %336 = vmatprep.subr.bf16.mxu0 0
      %337 = vmatpush1.bf16.msra.mxu0 0
      %338 = vmatprep.subr.bf16.mxu0 0
      %339 = vmatpush1.bf16.msra.mxu0 0
      %340 = vmatprep.subr.bf16.mxu0 0
      %341 = vmatpush1.bf16.msra.mxu0 0
      %342 = vmatprep.subr.bf16.mxu0 0
      %343 = vmatpush1.bf16.msra.mxu0 0
      %344 = vmatprep.subr.bf16.mxu0 0
      %345 = vmatpush1.bf16.msra.mxu0 0
      %346 = vmatprep.subr.bf16.mxu0 0
      %347 = vmatpush1.bf16.msra.mxu0 0
      %348 = vmatprep.subr.bf16.mxu0 0
      %349 = vmatpush1.bf16.msra.mxu0 0
      %350 = vmatprep.subr.bf16.mxu0 0
      %351 = vmatpush1.bf16.msra.mxu0 0
      %352 = vmatprep.subr.bf16.mxu0 0
      %353 = vmatpush1.bf16.msra.mxu0 0
      %354 = vmatprep.subr.bf16.mxu0 0
      %355 = vmatpush1.bf16.msra.mxu0 0
      %356 = vmatprep.subr.bf16.mxu0 0
      %357 = vmatpush1.bf16.msra.mxu0 0
      %358 = vmatprep.subr.bf16.mxu0 0
      %359 = vmatpush1.bf16.msra.mxu0 0
      %360 = vmatprep.subr.bf16.mxu0 0
      %361 = vmatpush1.bf16.msra.mxu0 0
      %362 = vmatprep.subr.bf16.mxu0 0
      %363 = vmatpush1.bf16.msra.mxu0 0
      %364 = vmatprep.subr.bf16.mxu0 0
      %365 = vmatpush1.bf16.msra.mxu0 0
      %366 = vmatprep.mubr.bf16.mxu0 0
      %367 = vmatmul.mubr.bf16.gmra.mrb[0].mxu0 %v291
      %v368 = vpop.f32.mrb[0].mxu0
      %v369 = vadd.f32 0.0, %v368
      %v370 = vpop.f32.mrb[0].mxu0
      %v371 = vadd.f32 0.0, %v370
      %v372 = vpop.f32.mrb[0].mxu0
      %v373 = vpop.f32.mrb[0].mxu0
      %374 = vdwg.mxu0
      %375 = vmatprep.subr.bf16.mxu0 %v262
      %376 = vmatpush1.bf16.msra.mxu0 %v261
      %377 = vmatprep.subr.bf16.mxu0 0
      %378 = vmatpush1.bf16.msra.mxu0 0
      %379 = vmatprep.subr.bf16.mxu0 0
      %380 = vmatpush1.bf16.msra.mxu0 0
      %381 = vmatprep.subr.bf16.mxu0 0
      %382 = vmatpush1.bf16.msra.mxu0 0
      %383 = vmatprep.subr.bf16.mxu0 0
      %384 = vmatpush1.bf16.msra.mxu0 0
      %385 = vmatprep.subr.bf16.mxu0 0
      %386 = vmatpush1.bf16.msra.mxu0 0
      %387 = vmatprep.subr.bf16.mxu0 0
      %388 = vmatpush1.bf16.msra.mxu0 0
      %389 = vmatprep.subr.bf16.mxu0 0
      %390 = vmatpush1.bf16.msra.mxu0 0
      %391 = vmatprep.subr.bf16.mxu0 0
      %392 = vmatpush1.bf16.msra.mxu0 0
      %393 = vmatprep.subr.bf16.mxu0 0
      %394 = vmatpush1.bf16.msra.mxu0 0
      %395 = vmatprep.subr.bf16.mxu0 0
      %396 = vmatpush1.bf16.msra.mxu0 0
      %397 = vmatprep.subr.bf16.mxu0 0
      %398 = vmatpush1.bf16.msra.mxu0 0
      %399 = vmatprep.subr.bf16.mxu0 0
      %400 = vmatpush1.bf16.msra.mxu0 0
      %401 = vmatprep.subr.bf16.mxu0 0
      %402 = vmatpush1.bf16.msra.mxu0 0
      %403 = vmatprep.subr.bf16.mxu0 0
      %404 = vmatpush1.bf16.msra.mxu0 0
      %405 = vmatprep.subr.bf16.mxu0 0
      %406 = vmatpush1.bf16.msra.mxu0 0
      %407 = vmatprep.mubr.bf16.mxu0 0
      %408 = vmatmul.mubr.bf16.gmra.mrb[0].mxu0 %v291
      %v409 = vpop.f32.mrb[0].mxu0
      %v410 = vadd.f32 0.0, %v409
      %v411 = vpop.f32.mrb[0].mxu0
      %v412 = vadd.f32 0.0, %v411
      %v413 = vpop.f32.mrb[0].mxu0
      %v414 = vpop.f32.mrb[0].mxu0
      %415 = vdwg.mxu0
      %416 = vmatprep.subr.bf16.mxu0 %v264
      %417 = vmatpush1.bf16.msra.mxu0 %v263
      %418 = vmatprep.subr.bf16.mxu0 0
      %419 = vmatpush1.bf16.msra.mxu0 0
      %420 = vmatprep.subr.bf16.mxu0 0
      %421 = vmatpush1.bf16.msra.mxu0 0
      %422 = vmatprep.subr.bf16.mxu0 0
      %423 = vmatpush1.bf16.msra.mxu0 0
      %424 = vmatprep.subr.bf16.mxu0 0
      %425 = vmatpush1.bf16.msra.mxu0 0
      %426 = vmatprep.subr.bf16.mxu0 0
      %427 = vmatpush1.bf16.msra.mxu0 0
      %428 = vmatprep.subr.bf16.mxu0 0
      %429 = vmatpush1.bf16.msra.mxu0 0
      %430 = vmatprep.subr.bf16.mxu0 0
      %431 = vmatpush1.bf16.msra.mxu0 0
      %432 = vmatprep.subr.bf16.mxu0 0
      %433 = vmatpush1.bf16.msra.mxu0 0
      %434 = vmatprep.subr.bf16.mxu0 0
      %435 = vmatpush1.bf16.msra.mxu0 0
      %436 = vmatprep.subr.bf16.mxu0 0
      %437 = vmatpush1.bf16.msra.mxu0 0
      %438 = vmatprep.subr.bf16.mxu0 0
      %439 = vmatpush1.bf16.msra.mxu0 0
      %440 = vmatprep.subr.bf16.mxu0 0
      %441 = vmatpush1.bf16.msra.mxu0 0
      %442 = vmatprep.subr.bf16.mxu0 0
      %443 = vmatpush1.bf16.msra.mxu0 0
      %444 = vmatprep.subr.bf16.mxu0 0
      %445 = vmatpush1.bf16.msra.mxu0 0
      %446 = vmatprep.subr.bf16.mxu0 0
      %447 = vmatpush1.bf16.msra.mxu0 0
      %448 = vmatprep.mubr.bf16.mxu0 0
      %449 = vmatmul.mubr.bf16.gmra.mrb[0].mxu0 %v291
      %v450 = vpop.f32.mrb[0].mxu0
      %v451 = vadd.f32 0.0, %v450
      %v452 = vpop.f32.mrb[0].mxu0
      %v453 = vadd.f32 0.0, %v452
      %v454 = vpop.f32.mrb[0].mxu0
      %v455 = vpop.f32.mrb[0].mxu0
      %456 = vdwg.mxu0
      %457 = vmatprep.subr.bf16.mxu0 %v266
      %458 = vmatpush1.bf16.msra.mxu0 %v265
      %459 = vmatprep.subr.bf16.mxu0 0
      %460 = vmatpush1.bf16.msra.mxu0 0
      %461 = vmatprep.subr.bf16.mxu0 0
      %462 = vmatpush1.bf16.msra.mxu0 0
      %463 = vmatprep.subr.bf16.mxu0 0
      %464 = vmatpush1.bf16.msra.mxu0 0
      %465 = vmatprep.subr.bf16.mxu0 0
      %466 = vmatpush1.bf16.msra.mxu0 0
      %467 = vmatprep.subr.bf16.mxu0 0
      %468 = vmatpush1.bf16.msra.mxu0 0
      %469 = vmatprep.subr.bf16.mxu0 0
      %470 = vmatpush1.bf16.msra.mxu0 0
      %471 = vmatprep.subr.bf16.mxu0 0
      %472 = vmatpush1.bf16.msra.mxu0 0
      %473 = vmatprep.subr.bf16.mxu0 0
      %474 = vmatpush1.bf16.msra.mxu0 0
      %475 = vmatprep.subr.bf16.mxu0 0
      %476 = vmatpush1.bf16.msra.mxu0 0
      %477 = vmatprep.subr.bf16.mxu0 0
      %478 = vmatpush1.bf16.msra.mxu0 0
      %479 = vmatprep.subr.bf16.mxu0 0
      %480 = vmatpush1.bf16.msra.mxu0 0
      %481 = vmatprep.subr.bf16.mxu0 0
      %482 = vmatpush1.bf16.msra.mxu0 0
      %483 = vmatprep.subr.bf16.mxu0 0
      %484 = vmatpush1.bf16.msra.mxu0 0
      %485 = vmatprep.subr.bf16.mxu0 0
      %486 = vmatpush1.bf16.msra.mxu0 0
      %487 = vmatprep.subr.bf16.mxu0 0
      %488 = vmatpush1.bf16.msra.mxu0 0
      %489 = vmatprep.mubr.bf16.mxu0 0
      %490 = vmatmul.mubr.bf16.gmra.mrb[0].mxu0 %v291
      %v491 = vpop.f32.mrb[0].mxu0
      %v492 = vadd.f32 0.0, %v491
      %v493 = vpop.f32.mrb[0].mxu0
      %v494 = vadd.f32 0.0, %v493
      %v495 = vpop.f32.mrb[0].mxu0
      %v496 = vpop.f32.mrb[0].mxu0
      %497 = vdwg.mxu0
      %498 = vmatprep.subr.bf16.mxu0 %v268
      %499 = vmatpush1.bf16.msra.mxu0 %v267
      %500 = vmatprep.subr.bf16.mxu0 0
      %501 = vmatpush1.bf16.msra.mxu0 0
      %502 = vmatprep.subr.bf16.mxu0 0
      %503 = vmatpush1.bf16.msra.mxu0 0
      %504 = vmatprep.subr.bf16.mxu0 0
      %505 = vmatpush1.bf16.msra.mxu0 0
      %506 = vmatprep.subr.bf16.mxu0 0
      %507 = vmatpush1.bf16.msra.mxu0 0
      %508 = vmatprep.subr.bf16.mxu0 0
      %509 = vmatpush1.bf16.msra.mxu0 0
      %510 = vmatprep.subr.bf16.mxu0 0
      %511 = vmatpush1.bf16.msra.mxu0 0
      %512 = vmatprep.subr.bf16.mxu0 0
      %513 = vmatpush1.bf16.msra.mxu0 0
      %514 = vmatprep.subr.bf16.mxu0 0
      %515 = vmatpush1.bf16.msra.mxu0 0
      %516 = vmatprep.subr.bf16.mxu0 0
      %517 = vmatpush1.bf16.msra.mxu0 0
      %518 = vmatprep.subr.bf16.mxu0 0
      %519 = vmatpush1.bf16.msra.mxu0 0
      %520 = vmatprep.subr.bf16.mxu0 0
      %521 = vmatpush1.bf16.msra.mxu0 0
      %522 = vmatprep.subr.bf16.mxu0 0
      %523 = vmatpush1.bf16.msra.mxu0 0
      %524 = vmatprep.subr.bf16.mxu0 0
      %525 = vmatpush1.bf16.msra.mxu0 0
      %526 = vmatprep.subr.bf16.mxu0 0
      %527 = vmatpush1.bf16.msra.mxu0 0
      %528 = vmatprep.subr.bf16.mxu0 0
      %529 = vmatpush1.bf16.msra.mxu0 0
      %530 = vmatprep.mubr.bf16.mxu0 0
      %531 = vmatmul.mubr.bf16.gmra.mrb[0].mxu0 %v291
      %v532 = vpop.f32.mrb[0].mxu0
      %v533 = vadd.f32 0.0, %v532
      %v534 = vpop.f32.mrb[0].mxu0
      %v535 = vadd.f32 0.0, %v534
      %v536 = vpop.f32.mrb[0].mxu0
      %v537 = vpop.f32.mrb[0].mxu0
      %538 = vdwg.mxu0
      %539 = vmatprep.subr.bf16.mxu0 %v270
      %540 = vmatpush1.bf16.msra.mxu0 %v269
      %541 = vmatprep.subr.bf16.mxu0 0
      %542 = vmatpush1.bf16.msra.mxu0 0
      %543 = vmatprep.subr.bf16.mxu0 0
      %544 = vmatpush1.bf16.msra.mxu0 0
      %545 = vmatprep.subr.bf16.mxu0 0
      %546 = vmatpush1.bf16.msra.mxu0 0
      %547 = vmatprep.subr.bf16.mxu0 0
      %548 = vmatpush1.bf16.msra.mxu0 0
      %549 = vmatprep.subr.bf16.mxu0 0
      %550 = vmatpush1.bf16.msra.mxu0 0
      %551 = vmatprep.subr.bf16.mxu0 0
      %552 = vmatpush1.bf16.msra.mxu0 0
      %553 = vmatprep.subr.bf16.mxu0 0
      %554 = vmatpush1.bf16.msra.mxu0 0
      %555 = vmatprep.subr.bf16.mxu0 0
      %556 = vmatpush1.bf16.msra.mxu0 0
      %557 = vmatprep.subr.bf16.mxu0 0
      %558 = vmatpush1.bf16.msra.mxu0 0
      %559 = vmatprep.subr.bf16.mxu0 0
      %560 = vmatpush1.bf16.msra.mxu0 0
      %561 = vmatprep.subr.bf16.mxu0 0
      %562 = vmatpush1.bf16.msra.mxu0 0
      %563 = vmatprep.subr.bf16.mxu0 0
      %564 = vmatpush1.bf16.msra.mxu0 0
      %565 = vmatprep.subr.bf16.mxu0 0
      %566 = vmatpush1.bf16.msra.mxu0 0
      %567 = vmatprep.subr.bf16.mxu0 0
      %568 = vmatpush1.bf16.msra.mxu0 0
      %569 = vmatprep.subr.bf16.mxu0 0
      %570 = vmatpush1.bf16.msra.mxu0 0
      %571 = vmatprep.mubr.bf16.mxu0 0
      %572 = vmatmul.mubr.bf16.gmra.mrb[0].mxu0 %v291
      %v573 = vpop.f32.mrb[0].mxu0
      %v574 = vadd.f32 0.0, %v573
      %v575 = vpop.f32.mrb[0].mxu0
      %v576 = vadd.f32 0.0, %v575
      %v577 = vpop.f32.mrb[0].mxu0
      %v578 = vpop.f32.mrb[0].mxu0
      %579 = vdwg.mxu0
      %580 = vmatprep.subr.bf16.mxu0 %v272
      %581 = vmatpush1.bf16.msra.mxu0 %v271
      %582 = vmatprep.subr.bf16.mxu0 0
      %583 = vmatpush1.bf16.msra.mxu0 0
      %584 = vmatprep.subr.bf16.mxu0 0
      %585 = vmatpush1.bf16.msra.mxu0 0
      %586 = vmatprep.subr.bf16.mxu0 0
      %587 = vmatpush1.bf16.msra.mxu0 0
      %588 = vmatprep.subr.bf16.mxu0 0
      %589 = vmatpush1.bf16.msra.mxu0 0
      %590 = vmatprep.subr.bf16.mxu0 0
      %591 = vmatpush1.bf16.msra.mxu0 0
      %592 = vmatprep.subr.bf16.mxu0 0
      %593 = vmatpush1.bf16.msra.mxu0 0
      %594 = vmatprep.subr.bf16.mxu0 0
      %595 = vmatpush1.bf16.msra.mxu0 0
      %596 = vmatprep.subr.bf16.mxu0 0
      %597 = vmatpush1.bf16.msra.mxu0 0
      %598 = vmatprep.subr.bf16.mxu0 0
      %599 = vmatpush1.bf16.msra.mxu0 0
      %600 = vmatprep.subr.bf16.mxu0 0
      %601 = vmatpush1.bf16.msra.mxu0 0
      %602 = vmatprep.subr.bf16.mxu0 0
      %603 = vmatpush1.bf16.msra.mxu0 0
      %604 = vmatprep.subr.bf16.mxu0 0
      %605 = vmatpush1.bf16.msra.mxu0 0
      %606 = vmatprep.subr.bf16.mxu0 0
      %607 = vmatpush1.bf16.msra.mxu0 0
      %608 = vmatprep.subr.bf16.mxu0 0
      %609 = vmatpush1.bf16.msra.mxu0 0
      %610 = vmatprep.subr.bf16.mxu0 0
      %611 = vmatpush1.bf16.msra.mxu0 0
      %612 = vmatprep.mubr.bf16.mxu0 0
      %613 = vmatmul.mubr.bf16.gmra.mrb[0].mxu0 %v291
      %v614 = vpop.f32.mrb[0].mxu0
      %v615 = vadd.f32 0.0, %v614
      %v616 = vpop.f32.mrb[0].mxu0
      %v617 = vadd.f32 0.0, %v616
      %v618 = vpop.f32.mrb[0].mxu0
      %v619 = vpop.f32.mrb[0].mxu0
      %620 = vdwg.mxu0
      %v637 = vunpack.c.l.b16 %v174
      %v638 = vunpack.c.h.b16 %v174
      %v639 = vunpack.c.l.b16 %v175
      %v640 = vunpack.c.h.b16 %v175
      %v641 = vunpack.c.l.b16 %v176
      %v642 = vunpack.c.h.b16 %v176
      %v643 = vunpack.c.l.b16 %v177
      %v644 = vunpack.c.h.b16 %v177
      %v645 = vunpack.c.l.b16 %v178
      %v646 = vunpack.c.h.b16 %v178
      %v647 = vunpack.c.l.b16 %v179
      %v648 = vunpack.c.h.b16 %v179
      %v649 = vunpack.c.l.b16 %v180
      %v650 = vunpack.c.h.b16 %v180
      %v651 = vunpack.c.l.b16 %v181
      %v652 = vunpack.c.h.b16 %v181
      %v653 = vunpack.c.l.b16 %v182
      %v654 = vunpack.c.h.b16 %v182
      %v655 = vunpack.c.l.b16 %v183
      %v656 = vunpack.c.h.b16 %v183
      %v657 = vunpack.c.l.b16 %v184
      %v658 = vunpack.c.h.b16 %v184
      %v659 = vunpack.c.l.b16 %v185
      %v660 = vunpack.c.h.b16 %v185
      %v661 = vunpack.c.l.b16 %v186
      %v662 = vunpack.c.h.b16 %v186
      %v663 = vunpack.c.l.b16 %v187
      %v664 = vunpack.c.h.b16 %v187
      %v665 = vunpack.c.l.b16 %v188
      %v666 = vunpack.c.h.b16 %v188
      %v667 = vunpack.c.l.b16 %v189
      %v668 = vunpack.c.h.b16 %v189
      %v669 = vpack.c.b16 %v653, %v637
      %v670 = vpack.c.b16 %v654, %v638
      %v671 = vpack.c.b16 %v655, %v639
      %v672 = vpack.c.b16 %v656, %v640
      %v673 = vpack.c.b16 %v657, %v641
      %v674 = vpack.c.b16 %v658, %v642
      %v675 = vpack.c.b16 %v659, %v643
      %v676 = vpack.c.b16 %v660, %v644
      %v677 = vpack.c.b16 %v661, %v645
      %v678 = vpack.c.b16 %v662, %v646
      %v679 = vpack.c.b16 %v663, %v647
      %v680 = vpack.c.b16 %v664, %v648
      %v681 = vpack.c.b16 %v665, %v649
      %v682 = vpack.c.b16 %v666, %v650
      %v683 = vpack.c.b16 %v667, %v651
      %v684 = vpack.c.b16 %v668, %v652
      %v702 = vsel %vm289, %v173, 0
      %704 = vmatprep.subr.bf16.mxu0 %v670
      %705 = vmatpush1.bf16.msra.mxu0 %v669
      %706 = vmatprep.subr.bf16.mxu0 0
      %707 = vmatpush1.bf16.msra.mxu0 0
      %708 = vmatprep.subr.bf16.mxu0 0
      %709 = vmatpush1.bf16.msra.mxu0 0
      %710 = vmatprep.subr.bf16.mxu0 0
      %711 = vmatpush1.bf16.msra.mxu0 0
      %712 = vmatprep.subr.bf16.mxu0 0
      %713 = vmatpush1.bf16.msra.mxu0 0
      %714 = vmatprep.subr.bf16.mxu0 0
      %715 = vmatpush1.bf16.msra.mxu0 0
      %716 = vmatprep.subr.bf16.mxu0 0
      %717 = vmatpush1.bf16.msra.mxu0 0
      %718 = vmatprep.subr.bf16.mxu0 0
      %719 = vmatpush1.bf16.msra.mxu0 0
      %720 = vmatprep.subr.bf16.mxu0 0
      %721 = vmatpush1.bf16.msra.mxu0 0
      %722 = vmatprep.subr.bf16.mxu0 0
      %723 = vmatpush1.bf16.msra.mxu0 0
      %724 = vmatprep.subr.bf16.mxu0 0
      %725 = vmatpush1.bf16.msra.mxu0 0
      %726 = vmatprep.subr.bf16.mxu0 0
      %727 = vmatpush1.bf16.msra.mxu0 0
      %728 = vmatprep.subr.bf16.mxu0 0
      %729 = vmatpush1.bf16.msra.mxu0 0
      %730 = vmatprep.subr.bf16.mxu0 0
      %731 = vmatpush1.bf16.msra.mxu0 0
      %732 = vmatprep.subr.bf16.mxu0 0
      %733 = vmatpush1.bf16.msra.mxu0 0
      %734 = vmatprep.subr.bf16.mxu0 0
      %735 = vmatpush1.bf16.msra.mxu0 0
      %736 = vmatprep.mubr.bf16.mxu0 0
      %737 = vmatmul.mubr.bf16.gmra.mrb[0].mxu0 %v702
      %v738 = vpop.f32.mrb[0].mxu0
      %v739 = vadd.f32 %v328, %v738
      %v740 = vpop.f32.mrb[0].mxu0
      %v741 = vadd.f32 %v330, %v740
      %v742 = vpop.f32.mrb[0].mxu0
      %v743 = vpop.f32.mrb[0].mxu0
      %744 = vdwg.mxu0
      %745 = vmatprep.subr.bf16.mxu0 %v672
      %746 = vmatpush1.bf16.msra.mxu0 %v671
      %747 = vmatprep.subr.bf16.mxu0 0
      %748 = vmatpush1.bf16.msra.mxu0 0
      %749 = vmatprep.subr.bf16.mxu0 0
      %750 = vmatpush1.bf16.msra.mxu0 0
      %751 = vmatprep.subr.bf16.mxu0 0
      %752 = vmatpush1.bf16.msra.mxu0 0
      %753 = vmatprep.subr.bf16.mxu0 0
      %754 = vmatpush1.bf16.msra.mxu0 0
      %755 = vmatprep.subr.bf16.mxu0 0
      %756 = vmatpush1.bf16.msra.mxu0 0
      %757 = vmatprep.subr.bf16.mxu0 0
      %758 = vmatpush1.bf16.msra.mxu0 0
      %759 = vmatprep.subr.bf16.mxu0 0
      %760 = vmatpush1.bf16.msra.mxu0 0
      %761 = vmatprep.subr.bf16.mxu0 0
      %762 = vmatpush1.bf16.msra.mxu0 0
      %763 = vmatprep.subr.bf16.mxu0 0
      %764 = vmatpush1.bf16.msra.mxu0 0
      %765 = vmatprep.subr.bf16.mxu0 0
      %766 = vmatpush1.bf16.msra.mxu0 0
      %767 = vmatprep.subr.bf16.mxu0 0
      %768 = vmatpush1.bf16.msra.mxu0 0
      %769 = vmatprep.subr.bf16.mxu0 0
      %770 = vmatpush1.bf16.msra.mxu0 0
      %771 = vmatprep.subr.bf16.mxu0 0
      %772 = vmatpush1.bf16.msra.mxu0 0
      %773 = vmatprep.subr.bf16.mxu0 0
      %774 = vmatpush1.bf16.msra.mxu0 0
      %775 = vmatprep.subr.bf16.mxu0 0
      %776 = vmatpush1.bf16.msra.mxu0 0
      %777 = vmatprep.mubr.bf16.mxu0 0
      %778 = vmatmul.mubr.bf16.gmra.mrb[0].mxu0 %v702
      %v779 = vpop.f32.mrb[0].mxu0
      %v780 = vadd.f32 %v369, %v779
      %v781 = vpop.f32.mrb[0].mxu0
      %v782 = vadd.f32 %v371, %v781
      %v783 = vpop.f32.mrb[0].mxu0
      %v784 = vpop.f32.mrb[0].mxu0
      %785 = vdwg.mxu0
      %786 = vmatprep.subr.bf16.mxu0 %v674
      %787 = vmatpush1.bf16.msra.mxu0 %v673
      %788 = vmatprep.subr.bf16.mxu0 0
      %789 = vmatpush1.bf16.msra.mxu0 0
      %790 = vmatprep.subr.bf16.mxu0 0
      %791 = vmatpush1.bf16.msra.mxu0 0
      %792 = vmatprep.subr.bf16.mxu0 0
      %793 = vmatpush1.bf16.msra.mxu0 0
      %794 = vmatprep.subr.bf16.mxu0 0
      %795 = vmatpush1.bf16.msra.mxu0 0
      %796 = vmatprep.subr.bf16.mxu0 0
      %797 = vmatpush1.bf16.msra.mxu0 0
      %798 = vmatprep.subr.bf16.mxu0 0
      %799 = vmatpush1.bf16.msra.mxu0 0
      %800 = vmatprep.subr.bf16.mxu0 0
      %801 = vmatpush1.bf16.msra.mxu0 0
      %802 = vmatprep.subr.bf16.mxu0 0
      %803 = vmatpush1.bf16.msra.mxu0 0
      %804 = vmatprep.subr.bf16.mxu0 0
      %805 = vmatpush1.bf16.msra.mxu0 0
      %806 = vmatprep.subr.bf16.mxu0 0
      %807 = vmatpush1.bf16.msra.mxu0 0
      %808 = vmatprep.subr.bf16.mxu0 0
      %809 = vmatpush1.bf16.msra.mxu0 0
      %810 = vmatprep.subr.bf16.mxu0 0
      %811 = vmatpush1.bf16.msra.mxu0 0
      %812 = vmatprep.subr.bf16.mxu0 0
      %813 = vmatpush1.bf16.msra.mxu0 0
      %814 = vmatprep.subr.bf16.mxu0 0
      %815 = vmatpush1.bf16.msra.mxu0 0
      %816 = vmatprep.subr.bf16.mxu0 0
      %817 = vmatpush1.bf16.msra.mxu0 0
      %818 = vmatprep.mubr.bf16.mxu0 0
      %819 = vmatmul.mubr.bf16.gmra.mrb[0].mxu0 %v702
      %v820 = vpop.f32.mrb[0].mxu0
      %v821 = vadd.f32 %v410, %v820
      %v822 = vpop.f32.mrb[0].mxu0
      %v823 = vadd.f32 %v412, %v822
      %v824 = vpop.f32.mrb[0].mxu0
      %v825 = vpop.f32.mrb[0].mxu0
      %826 = vdwg.mxu0
      %827 = vmatprep.subr.bf16.mxu0 %v676
      %828 = vmatpush1.bf16.msra.mxu0 %v675
      %829 = vmatprep.subr.bf16.mxu0 0
      %830 = vmatpush1.bf16.msra.mxu0 0
      %831 = vmatprep.subr.bf16.mxu0 0
      %832 = vmatpush1.bf16.msra.mxu0 0
      %833 = vmatprep.subr.bf16.mxu0 0
      %834 = vmatpush1.bf16.msra.mxu0 0
      %835 = vmatprep.subr.bf16.mxu0 0
      %836 = vmatpush1.bf16.msra.mxu0 0
      %837 = vmatprep.subr.bf16.mxu0 0
      %838 = vmatpush1.bf16.msra.mxu0 0
      %839 = vmatprep.subr.bf16.mxu0 0
      %840 = vmatpush1.bf16.msra.mxu0 0
      %841 = vmatprep.subr.bf16.mxu0 0
      %842 = vmatpush1.bf16.msra.mxu0 0
      %843 = vmatprep.subr.bf16.mxu0 0
      %844 = vmatpush1.bf16.msra.mxu0 0
      %845 = vmatprep.subr.bf16.mxu0 0
      %846 = vmatpush1.bf16.msra.mxu0 0
      %847 = vmatprep.subr.bf16.mxu0 0
      %848 = vmatpush1.bf16.msra.mxu0 0
      %849 = vmatprep.subr.bf16.mxu0 0
      %850 = vmatpush1.bf16.msra.mxu0 0
      %851 = vmatprep.subr.bf16.mxu0 0
      %852 = vmatpush1.bf16.msra.mxu0 0
      %853 = vmatprep.subr.bf16.mxu0 0
      %854 = vmatpush1.bf16.msra.mxu0 0
      %855 = vmatprep.subr.bf16.mxu0 0
      %856 = vmatpush1.bf16.msra.mxu0 0
      %857 = vmatprep.subr.bf16.mxu0 0
      %858 = vmatpush1.bf16.msra.mxu0 0
      %859 = vmatprep.mubr.bf16.mxu0 0
      %860 = vmatmul.mubr.bf16.gmra.mrb[0].mxu0 %v702
      %v861 = vpop.f32.mrb[0].mxu0
      %v862 = vadd.f32 %v451, %v861
      %v863 = vpop.f32.mrb[0].mxu0
      %v864 = vadd.f32 %v453, %v863
      %v865 = vpop.f32.mrb[0].mxu0
      %v866 = vpop.f32.mrb[0].mxu0
      %867 = vdwg.mxu0
      %868 = vmatprep.subr.bf16.mxu0 %v678
      %869 = vmatpush1.bf16.msra.mxu0 %v677
      %870 = vmatprep.subr.bf16.mxu0 0
      %871 = vmatpush1.bf16.msra.mxu0 0
      %872 = vmatprep.subr.bf16.mxu0 0
      %873 = vmatpush1.bf16.msra.mxu0 0
      %874 = vmatprep.subr.bf16.mxu0 0
      %875 = vmatpush1.bf16.msra.mxu0 0
      %876 = vmatprep.subr.bf16.mxu0 0
      %877 = vmatpush1.bf16.msra.mxu0 0
      %878 = vmatprep.subr.bf16.mxu0 0
      %879 = vmatpush1.bf16.msra.mxu0 0
      %880 = vmatprep.subr.bf16.mxu0 0
      %881 = vmatpush1.bf16.msra.mxu0 0
      %882 = vmatprep.subr.bf16.mxu0 0
      %883 = vmatpush1.bf16.msra.mxu0 0
      %884 = vmatprep.subr.bf16.mxu0 0
      %885 = vmatpush1.bf16.msra.mxu0 0
      %886 = vmatprep.subr.bf16.mxu0 0
      %887 = vmatpush1.bf16.msra.mxu0 0
      %888 = vmatprep.subr.bf16.mxu0 0
      %889 = vmatpush1.bf16.msra.mxu0 0
      %890 = vmatprep.subr.bf16.mxu0 0
      %891 = vmatpush1.bf16.msra.mxu0 0
      %892 = vmatprep.subr.bf16.mxu0 0
      %893 = vmatpush1.bf16.msra.mxu0 0
      %894 = vmatprep.subr.bf16.mxu0 0
      %895 = vmatpush1.bf16.msra.mxu0 0
      %896 = vmatprep.subr.bf16.mxu0 0
      %897 = vmatpush1.bf16.msra.mxu0 0
      %898 = vmatprep.subr.bf16.mxu0 0
      %899 = vmatpush1.bf16.msra.mxu0 0
      %900 = vmatprep.mubr.bf16.mxu0 0
      %901 = vmatmul.mubr.bf16.gmra.mrb[0].mxu0 %v702
      %v902 = vpop.f32.mrb[0].mxu0
      %v903 = vadd.f32 %v492, %v902
      %v904 = vpop.f32.mrb[0].mxu0
      %v905 = vadd.f32 %v494, %v904
      %v906 = vpop.f32.mrb[0].mxu0
      %v907 = vpop.f32.mrb[0].mxu0
      %908 = vdwg.mxu0
      %909 = vmatprep.subr.bf16.mxu0 %v680
      %910 = vmatpush1.bf16.msra.mxu0 %v679
      %911 = vmatprep.subr.bf16.mxu0 0
      %912 = vmatpush1.bf16.msra.mxu0 0
      %913 = vmatprep.subr.bf16.mxu0 0
      %914 = vmatpush1.bf16.msra.mxu0 0
      %915 = vmatprep.subr.bf16.mxu0 0
      %916 = vmatpush1.bf16.msra.mxu0 0
      %917 = vmatprep.subr.bf16.mxu0 0
      %918 = vmatpush1.bf16.msra.mxu0 0
      %919 = vmatprep.subr.bf16.mxu0 0
      %920 = vmatpush1.bf16.msra.mxu0 0
      %921 = vmatprep.subr.bf16.mxu0 0
      %922 = vmatpush1.bf16.msra.mxu0 0
      %923 = vmatprep.subr.bf16.mxu0 0
      %924 = vmatpush1.bf16.msra.mxu0 0
      %925 = vmatprep.subr.bf16.mxu0 0
      %926 = vmatpush1.bf16.msra.mxu0 0
      %927 = vmatprep.subr.bf16.mxu0 0
      %928 = vmatpush1.bf16.msra.mxu0 0
      %929 = vmatprep.subr.bf16.mxu0 0
      %930 = vmatpush1.bf16.msra.mxu0 0
      %931 = vmatprep.subr.bf16.mxu0 0
      %932 = vmatpush1.bf16.msra.mxu0 0
      %933 = vmatprep.subr.bf16.mxu0 0
      %934 = vmatpush1.bf16.msra.mxu0 0
      %935 = vmatprep.subr.bf16.mxu0 0
      %936 = vmatpush1.bf16.msra.mxu0 0
      %937 = vmatprep.subr.bf16.mxu0 0
      %938 = vmatpush1.bf16.msra.mxu0 0
      %939 = vmatprep.subr.bf16.mxu0 0
      %940 = vmatpush1.bf16.msra.mxu0 0
      %941 = vmatprep.mubr.bf16.mxu0 0
      %942 = vmatmul.mubr.bf16.gmra.mrb[0].mxu0 %v702
      %v943 = vpop.f32.mrb[0].mxu0
      %v944 = vadd.f32 %v533, %v943
      %v945 = vpop.f32.mrb[0].mxu0
      %v946 = vadd.f32 %v535, %v945
      %v947 = vpop.f32.mrb[0].mxu0
      %v948 = vpop.f32.mrb[0].mxu0
      %949 = vdwg.mxu0
      %950 = vmatprep.subr.bf16.mxu0 %v682
      %951 = vmatpush1.bf16.msra.mxu0 %v681
      %952 = vmatprep.subr.bf16.mxu0 0
      %953 = vmatpush1.bf16.msra.mxu0 0
      %954 = vmatprep.subr.bf16.mxu0 0
      %955 = vmatpush1.bf16.msra.mxu0 0
      %956 = vmatprep.subr.bf16.mxu0 0
      %957 = vmatpush1.bf16.msra.mxu0 0
      %958 = vmatprep.subr.bf16.mxu0 0
      %959 = vmatpush1.bf16.msra.mxu0 0
      %960 = vmatprep.subr.bf16.mxu0 0
      %961 = vmatpush1.bf16.msra.mxu0 0
      %962 = vmatprep.subr.bf16.mxu0 0
      %963 = vmatpush1.bf16.msra.mxu0 0
      %964 = vmatprep.subr.bf16.mxu0 0
      %965 = vmatpush1.bf16.msra.mxu0 0
      %966 = vmatprep.subr.bf16.mxu0 0
      %967 = vmatpush1.bf16.msra.mxu0 0
      %968 = vmatprep.subr.bf16.mxu0 0
      %969 = vmatpush1.bf16.msra.mxu0 0
      %970 = vmatprep.subr.bf16.mxu0 0
      %971 = vmatpush1.bf16.msra.mxu0 0
      %972 = vmatprep.subr.bf16.mxu0 0
      %973 = vmatpush1.bf16.msra.mxu0 0
      %974 = vmatprep.subr.bf16.mxu0 0
      %975 = vmatpush1.bf16.msra.mxu0 0
      %976 = vmatprep.subr.bf16.mxu0 0
      %977 = vmatpush1.bf16.msra.mxu0 0
      %978 = vmatprep.subr.bf16.mxu0 0
      %979 = vmatpush1.bf16.msra.mxu0 0
      %980 = vmatprep.subr.bf16.mxu0 0
      %981 = vmatpush1.bf16.msra.mxu0 0
      %982 = vmatprep.mubr.bf16.mxu0 0
      %983 = vmatmul.mubr.bf16.gmra.mrb[0].mxu0 %v702
      %v984 = vpop.f32.mrb[0].mxu0
      %v985 = vadd.f32 %v574, %v984
      %v986 = vpop.f32.mrb[0].mxu0
      %v987 = vadd.f32 %v576, %v986
      %v988 = vpop.f32.mrb[0].mxu0
      %v989 = vpop.f32.mrb[0].mxu0
      %990 = vdwg.mxu0
      %991 = vmatprep.subr.bf16.mxu0 %v684
      %992 = vmatpush1.bf16.msra.mxu0 %v683
      %993 = vmatprep.subr.bf16.mxu0 0
      %994 = vmatpush1.bf16.msra.mxu0 0
      %995 = vmatprep.subr.bf16.mxu0 0
      %996 = vmatpush1.bf16.msra.mxu0 0
      %997 = vmatprep.subr.bf16.mxu0 0
      %998 = vmatpush1.bf16.msra.mxu0 0
      %999 = vmatprep.subr.bf16.mxu0 0
      %1000 = vmatpush1.bf16.msra.mxu0 0
      %1001 = vmatprep.subr.bf16.mxu0 0
      %1002 = vmatpush1.bf16.msra.mxu0 0
      %1003 = vmatprep.subr.bf16.mxu0 0
      %1004 = vmatpush1.bf16.msra.mxu0 0
      %1005 = vmatprep.subr.bf16.mxu0 0
      %1006 = vmatpush1.bf16.msra.mxu0 0
      %1007 = vmatprep.subr.bf16.mxu0 0
      %1008 = vmatpush1.bf16.msra.mxu0 0
      %1009 = vmatprep.subr.bf16.mxu0 0
      %1010 = vmatpush1.bf16.msra.mxu0 0
      %1011 = vmatprep.subr.bf16.mxu0 0
      %1012 = vmatpush1.bf16.msra.mxu0 0
      %1013 = vmatprep.subr.bf16.mxu0 0
      %1014 = vmatpush1.bf16.msra.mxu0 0
      %1015 = vmatprep.subr.bf16.mxu0 0
      %1016 = vmatpush1.bf16.msra.mxu0 0
      %1017 = vmatprep.subr.bf16.mxu0 0
      %1018 = vmatpush1.bf16.msra.mxu0 0
      %1019 = vmatprep.subr.bf16.mxu0 0
      %1020 = vmatpush1.bf16.msra.mxu0 0
      %1021 = vmatprep.subr.bf16.mxu0 0
      %1022 = vmatpush1.bf16.msra.mxu0 0
      %1023 = vmatprep.mubr.bf16.mxu0 0
      %1024 = vmatmul.mubr.bf16.gmra.mrb[0].mxu0 %v702
      %v1025 = vpop.f32.mrb[0].mxu0
      %v1026 = vadd.f32 %v615, %v1025
      %v1027 = vpop.f32.mrb[0].mxu0
      %v1028 = vadd.f32 %v617, %v1027
      %v1029 = vpop.f32.mrb[0].mxu0
      %v1030 = vpop.f32.mrb[0].mxu0
      %1031 = vdwg.mxu0
      %v1032 = vld [vmem:[%s165 + $0x2] sm:$0xff]
      %v1033 = vpack.c.bf16 %v1032, %v1032
      %s1034 = scalar_lea.vmem %s1, 256
      %v1035 = vld [vmem:[%s1034] sm:$0xff]
      %v1036 = vld [vmem:[%s1034 + $0x8] sm:$0xff]
      %v1037 = vld [vmem:[%s1034 + $0x10] sm:$0xff]
      %v1038 = vld [vmem:[%s1034 + $0x18] sm:$0xff]
      %v1039 = vld [vmem:[%s1034 + $0x20] sm:$0xff]
      %v1040 = vld [vmem:[%s1034 + $0x28] sm:$0xff]
      %v1041 = vld [vmem:[%s1034 + $0x30] sm:$0xff]
      %v1042 = vld [vmem:[%s1034 + $0x38] sm:$0xff]
      %v1043 = vld [vmem:[%s1034 + $0x40] sm:$0xff]
      %v1044 = vld [vmem:[%s1034 + $0x48] sm:$0xff]
      %v1045 = vld [vmem:[%s1034 + $0x50] sm:$0xff]
      %v1046 = vld [vmem:[%s1034 + $0x58] sm:$0xff]
      %v1047 = vld [vmem:[%s1034 + $0x60] sm:$0xff]
      %v1048 = vld [vmem:[%s1034 + $0x68] sm:$0xff]
      %v1049 = vld [vmem:[%s1034 + $0x70] sm:$0xff]
      %v1050 = vld [vmem:[%s1034 + $0x78] sm:$0xff]
      %v1067 = vunpack.c.l.b16 %v1035
      %v1068 = vunpack.c.h.b16 %v1035
      %v1069 = vunpack.c.l.b16 %v1036
      %v1070 = vunpack.c.h.b16 %v1036
      %v1071 = vunpack.c.l.b16 %v1037
      %v1072 = vunpack.c.h.b16 %v1037
      %v1073 = vunpack.c.l.b16 %v1038
      %v1074 = vunpack.c.h.b16 %v1038
      %v1075 = vunpack.c.l.b16 %v1039
      %v1076 = vunpack.c.h.b16 %v1039
      %v1077 = vunpack.c.l.b16 %v1040
      %v1078 = vunpack.c.h.b16 %v1040
      %v1079 = vunpack.c.l.b16 %v1041
      %v1080 = vunpack.c.h.b16 %v1041
      %v1081 = vunpack.c.l.b16 %v1042
      %v1082 = vunpack.c.h.b16 %v1042
      %v1083 = vunpack.c.l.b16 %v1043
      %v1084 = vunpack.c.h.b16 %v1043
      %v1085 = vunpack.c.l.b16 %v1044
      %v1086 = vunpack.c.h.b16 %v1044
      %v1087 = vunpack.c.l.b16 %v1045
      %v1088 = vunpack.c.h.b16 %v1045
      %v1089 = vunpack.c.l.b16 %v1046
      %v1090 = vunpack.c.h.b16 %v1046
      %v1091 = vunpack.c.l.b16 %v1047
      %v1092 = vunpack.c.h.b16 %v1047
      %v1093 = vunpack.c.l.b16 %v1048
      %v1094 = vunpack.c.h.b16 %v1048
      %v1095 = vunpack.c.l.b16 %v1049
      %v1096 = vunpack.c.h.b16 %v1049
      %v1097 = vunpack.c.l.b16 %v1050
      %v1098 = vunpack.c.h.b16 %v1050
      %v1099 = vpack.c.b16 %v1083, %v1067
      %v1100 = vpack.c.b16 %v1084, %v1068
      %v1101 = vpack.c.b16 %v1085, %v1069
      %v1102 = vpack.c.b16 %v1086, %v1070
      %v1103 = vpack.c.b16 %v1087, %v1071
      %v1104 = vpack.c.b16 %v1088, %v1072
      %v1105 = vpack.c.b16 %v1089, %v1073
      %v1106 = vpack.c.b16 %v1090, %v1074
      %v1107 = vpack.c.b16 %v1091, %v1075
      %v1108 = vpack.c.b16 %v1092, %v1076
      %v1109 = vpack.c.b16 %v1093, %v1077
      %v1110 = vpack.c.b16 %v1094, %v1078
      %v1111 = vpack.c.b16 %v1095, %v1079
      %v1112 = vpack.c.b16 %v1096, %v1080
      %v1113 = vpack.c.b16 %v1097, %v1081
      %v1114 = vpack.c.b16 %v1098, %v1082
      %v1132 = vsel %vm289, %v1033, 0
      %1134 = vmatprep.subr.bf16.mxu0 %v1100
      %1135 = vmatpush1.bf16.msra.mxu0 %v1099
      %1136 = vmatprep.subr.bf16.mxu0 0
      %1137 = vmatpush1.bf16.msra.mxu0 0
      %1138 = vmatprep.subr.bf16.mxu0 0
      %1139 = vmatpush1.bf16.msra.mxu0 0
      %1140 = vmatprep.subr.bf16.mxu0 0
      %1141 = vmatpush1.bf16.msra.mxu0 0
      %1142 = vmatprep.subr.bf16.mxu0 0
      %1143 = vmatpush1.bf16.msra.mxu0 0
      %1144 = vmatprep.subr.bf16.mxu0 0
      %1145 = vmatpush1.bf16.msra.mxu0 0
      %1146 = vmatprep.subr.bf16.mxu0 0
      %1147 = vmatpush1.bf16.msra.mxu0 0
      %1148 = vmatprep.subr.bf16.mxu0 0
      %1149 = vmatpush1.bf16.msra.mxu0 0
      %1150 = vmatprep.subr.bf16.mxu0 0
      %1151 = vmatpush1.bf16.msra.mxu0 0
      %1152 = vmatprep.subr.bf16.mxu0 0
      %1153 = vmatpush1.bf16.msra.mxu0 0
      %1154 = vmatprep.subr.bf16.mxu0 0
      %1155 = vmatpush1.bf16.msra.mxu0 0
      %1156 = vmatprep.subr.bf16.mxu0 0
      %1157 = vmatpush1.bf16.msra.mxu0 0
      %1158 = vmatprep.subr.bf16.mxu0 0
      %1159 = vmatpush1.bf16.msra.mxu0 0
      %1160 = vmatprep.subr.bf16.mxu0 0
      %1161 = vmatpush1.bf16.msra.mxu0 0
      %1162 = vmatprep.subr.bf16.mxu0 0
      %1163 = vmatpush1.bf16.msra.mxu0 0
      %1164 = vmatprep.subr.bf16.mxu0 0
      %1165 = vmatpush1.bf16.msra.mxu0 0
      %1166 = vmatprep.mubr.bf16.mxu0 0
      %1167 = vmatmul.mubr.bf16.gmra.mrb[0].mxu0 %v1132
      %v1168 = vpop.f32.mrb[0].mxu0
      %v1169 = vadd.f32 0.0, %v1168
      %v1170 = vpop.f32.mrb[0].mxu0
      %v1171 = vadd.f32 0.0, %v1170
      %v1172 = vpop.f32.mrb[0].mxu0
      %v1173 = vpop.f32.mrb[0].mxu0
      %1174 = vdwg.mxu0
      %1175 = vmatprep.subr.bf16.mxu0 %v1102
      %1176 = vmatpush1.bf16.msra.mxu0 %v1101
      %1177 = vmatprep.subr.bf16.mxu0 0
      %1178 = vmatpush1.bf16.msra.mxu0 0
      %1179 = vmatprep.subr.bf16.mxu0 0
      %1180 = vmatpush1.bf16.msra.mxu0 0
      %1181 = vmatprep.subr.bf16.mxu0 0
      %1182 = vmatpush1.bf16.msra.mxu0 0
      %1183 = vmatprep.subr.bf16.mxu0 0
      %1184 = vmatpush1.bf16.msra.mxu0 0
      %1185 = vmatprep.subr.bf16.mxu0 0
      %1186 = vmatpush1.bf16.msra.mxu0 0
      %1187 = vmatprep.subr.bf16.mxu0 0
      %1188 = vmatpush1.bf16.msra.mxu0 0
      %1189 = vmatprep.subr.bf16.mxu0 0
      %1190 = vmatpush1.bf16.msra.mxu0 0
      %1191 = vmatprep.subr.bf16.mxu0 0
      %1192 = vmatpush1.bf16.msra.mxu0 0
      %1193 = vmatprep.subr.bf16.mxu0 0
      %1194 = vmatpush1.bf16.msra.mxu0 0
      %1195 = vmatprep.subr.bf16.mxu0 0
      %1196 = vmatpush1.bf16.msra.mxu0 0
      %1197 = vmatprep.subr.bf16.mxu0 0
      %1198 = vmatpush1.bf16.msra.mxu0 0
      %1199 = vmatprep.subr.bf16.mxu0 0
      %1200 = vmatpush1.bf16.msra.mxu0 0
      %1201 = vmatprep.subr.bf16.mxu0 0
      %1202 = vmatpush1.bf16.msra.mxu0 0
      %1203 = vmatprep.subr.bf16.mxu0 0
      %1204 = vmatpush1.bf16.msra.mxu0 0
      %1205 = vmatprep.subr.bf16.mxu0 0
      %1206 = vmatpush1.bf16.msra.mxu0 0
      %1207 = vmatprep.mubr.bf16.mxu0 0
      %1208 = vmatmul.mubr.bf16.gmra.mrb[0].mxu0 %v1132
      %v1209 = vpop.f32.mrb[0].mxu0
      %v1210 = vadd.f32 0.0, %v1209
      %v1211 = vpop.f32.mrb[0].mxu0
      %v1212 = vadd.f32 0.0, %v1211
      %v1213 = vpop.f32.mrb[0].mxu0
      %v1214 = vpop.f32.mrb[0].mxu0
      %1215 = vdwg.mxu0
      %1216 = vmatprep.subr.bf16.mxu0 %v1104
      %1217 = vmatpush1.bf16.msra.mxu0 %v1103
      %1218 = vmatprep.subr.bf16.mxu0 0
      %1219 = vmatpush1.bf16.msra.mxu0 0
      %1220 = vmatprep.subr.bf16.mxu0 0
      %1221 = vmatpush1.bf16.msra.mxu0 0
      %1222 = vmatprep.subr.bf16.mxu0 0
      %1223 = vmatpush1.bf16.msra.mxu0 0
      %1224 = vmatprep.subr.bf16.mxu0 0
      %1225 = vmatpush1.bf16.msra.mxu0 0
      %1226 = vmatprep.subr.bf16.mxu0 0
      %1227 = vmatpush1.bf16.msra.mxu0 0
      %1228 = vmatprep.subr.bf16.mxu0 0
      %1229 = vmatpush1.bf16.msra.mxu0 0
      %1230 = vmatprep.subr.bf16.mxu0 0
      %1231 = vmatpush1.bf16.msra.mxu0 0
      %1232 = vmatprep.subr.bf16.mxu0 0
      %1233 = vmatpush1.bf16.msra.mxu0 0
      %1234 = vmatprep.subr.bf16.mxu0 0
      %1235 = vmatpush1.bf16.msra.mxu0 0
      %1236 = vmatprep.subr.bf16.mxu0 0
      %1237 = vmatpush1.bf16.msra.mxu0 0
      %1238 = vmatprep.subr.bf16.mxu0 0
      %1239 = vmatpush1.bf16.msra.mxu0 0
      %1240 = vmatprep.subr.bf16.mxu0 0
      %1241 = vmatpush1.bf16.msra.mxu0 0
      %1242 = vmatprep.subr.bf16.mxu0 0
      %1243 = vmatpush1.bf16.msra.mxu0 0
      %1244 = vmatprep.subr.bf16.mxu0 0
      %1245 = vmatpush1.bf16.msra.mxu0 0
      %1246 = vmatprep.subr.bf16.mxu0 0
      %1247 = vmatpush1.bf16.msra.mxu0 0
      %1248 = vmatprep.mubr.bf16.mxu0 0
      %1249 = vmatmul.mubr.bf16.gmra.mrb[0].mxu0 %v1132
      %v1250 = vpop.f32.mrb[0].mxu0
      %v1251 = vadd.f32 0.0, %v1250
      %v1252 = vpop.f32.mrb[0].mxu0
      %v1253 = vadd.f32 0.0, %v1252
      %v1254 = vpop.f32.mrb[0].mxu0
      %v1255 = vpop.f32.mrb[0].mxu0
      %1256 = vdwg.mxu0
      %1257 = vmatprep.subr.bf16.mxu0 %v1106
      %1258 = vmatpush1.bf16.msra.mxu0 %v1105
      %1259 = vmatprep.subr.bf16.mxu0 0
      %1260 = vmatpush1.bf16.msra.mxu0 0
      %1261 = vmatprep.subr.bf16.mxu0 0
      %1262 = vmatpush1.bf16.msra.mxu0 0
      %1263 = vmatprep.subr.bf16.mxu0 0
      %1264 = vmatpush1.bf16.msra.mxu0 0
      %1265 = vmatprep.subr.bf16.mxu0 0
      %1266 = vmatpush1.bf16.msra.mxu0 0
      %1267 = vmatprep.subr.bf16.mxu0 0
      %1268 = vmatpush1.bf16.msra.mxu0 0
      %1269 = vmatprep.subr.bf16.mxu0 0
      %1270 = vmatpush1.bf16.msra.mxu0 0
      %1271 = vmatprep.subr.bf16.mxu0 0
      %1272 = vmatpush1.bf16.msra.mxu0 0
      %1273 = vmatprep.subr.bf16.mxu0 0
      %1274 = vmatpush1.bf16.msra.mxu0 0
      %1275 = vmatprep.subr.bf16.mxu0 0
      %1276 = vmatpush1.bf16.msra.mxu0 0
      %1277 = vmatprep.subr.bf16.mxu0 0
      %1278 = vmatpush1.bf16.msra.mxu0 0
      %1279 = vmatprep.subr.bf16.mxu0 0
      %1280 = vmatpush1.bf16.msra.mxu0 0
      %1281 = vmatprep.subr.bf16.mxu0 0
      %1282 = vmatpush1.bf16.msra.mxu0 0
      %1283 = vmatprep.subr.bf16.mxu0 0
      %1284 = vmatpush1.bf16.msra.mxu0 0
      %1285 = vmatprep.subr.bf16.mxu0 0
      %1286 = vmatpush1.bf16.msra.mxu0 0
      %1287 = vmatprep.subr.bf16.mxu0 0
      %1288 = vmatpush1.bf16.msra.mxu0 0
      %1289 = vmatprep.mubr.bf16.mxu0 0
      %1290 = vmatmul.mubr.bf16.gmra.mrb[0].mxu0 %v1132
      %v1291 = vpop.f32.mrb[0].mxu0
      %v1292 = vadd.f32 0.0, %v1291
      %v1293 = vpop.f32.mrb[0].mxu0
      %v1294 = vadd.f32 0.0, %v1293
      %v1295 = vpop.f32.mrb[0].mxu0
      %v1296 = vpop.f32.mrb[0].mxu0
      %1297 = vdwg.mxu0
      %1298 = vmatprep.subr.bf16.mxu0 %v1108
      %1299 = vmatpush1.bf16.msra.mxu0 %v1107
      %1300 = vmatprep.subr.bf16.mxu0 0
      %1301 = vmatpush1.bf16.msra.mxu0 0
      %1302 = vmatprep.subr.bf16.mxu0 0
      %1303 = vmatpush1.bf16.msra.mxu0 0
      %1304 = vmatprep.subr.bf16.mxu0 0
      %1305 = vmatpush1.bf16.msra.mxu0 0
      %1306 = vmatprep.subr.bf16.mxu0 0
      %1307 = vmatpush1.bf16.msra.mxu0 0
      %1308 = vmatprep.subr.bf16.mxu0 0
      %1309 = vmatpush1.bf16.msra.mxu0 0
      %1310 = vmatprep.subr.bf16.mxu0 0
      %1311 = vmatpush1.bf16.msra.mxu0 0
      %1312 = vmatprep.subr.bf16.mxu0 0
      %1313 = vmatpush1.bf16.msra.mxu0 0
      %1314 = vmatprep.subr.bf16.mxu0 0
      %1315 = vmatpush1.bf16.msra.mxu0 0
      %1316 = vmatprep.subr.bf16.mxu0 0
      %1317 = vmatpush1.bf16.msra.mxu0 0
      %1318 = vmatprep.subr.bf16.mxu0 0
      %1319 = vmatpush1.bf16.msra.mxu0 0
      %1320 = vmatprep.subr.bf16.mxu0 0
      %1321 = vmatpush1.bf16.msra.mxu0 0
      %1322 = vmatprep.subr.bf16.mxu0 0
      %1323 = vmatpush1.bf16.msra.mxu0 0
      %1324 = vmatprep.subr.bf16.mxu0 0
      %1325 = vmatpush1.bf16.msra.mxu0 0
      %1326 = vmatprep.subr.bf16.mxu0 0
      %1327 = vmatpush1.bf16.msra.mxu0 0
      %1328 = vmatprep.subr.bf16.mxu0 0
      %1329 = vmatpush1.bf16.msra.mxu0 0
      %1330 = vmatprep.mubr.bf16.mxu0 0
      %1331 = vmatmul.mubr.bf16.gmra.mrb[0].mxu0 %v1132
      %v1332 = vpop.f32.mrb[0].mxu0
      %v1333 = vadd.f32 0.0, %v1332
      %v1334 = vpop.f32.mrb[0].mxu0
      %v1335 = vadd.f32 0.0, %v1334
      %v1336 = vpop.f32.mrb[0].mxu0
      %v1337 = vpop.f32.mrb[0].mxu0
      %1338 = vdwg.mxu0
      %1339 = vmatprep.subr.bf16.mxu0 %v1110
      %1340 = vmatpush1.bf16.msra.mxu0 %v1109
      %1341 = vmatprep.subr.bf16.mxu0 0
      %1342 = vmatpush1.bf16.msra.mxu0 0
      %1343 = vmatprep.subr.bf16.mxu0 0
      %1344 = vmatpush1.bf16.msra.mxu0 0
      %1345 = vmatprep.subr.bf16.mxu0 0
      %1346 = vmatpush1.bf16.msra.mxu0 0
      %1347 = vmatprep.subr.bf16.mxu0 0
      %1348 = vmatpush1.bf16.msra.mxu0 0
      %1349 = vmatprep.subr.bf16.mxu0 0
      %1350 = vmatpush1.bf16.msra.mxu0 0
      %1351 = vmatprep.subr.bf16.mxu0 0
      %1352 = vmatpush1.bf16.msra.mxu0 0
      %1353 = vmatprep.subr.bf16.mxu0 0
      %1354 = vmatpush1.bf16.msra.mxu0 0
      %1355 = vmatprep.subr.bf16.mxu0 0
      %1356 = vmatpush1.bf16.msra.mxu0 0
      %1357 = vmatprep.subr.bf16.mxu0 0
      %1358 = vmatpush1.bf16.msra.mxu0 0
      %1359 = vmatprep.subr.bf16.mxu0 0
      %1360 = vmatpush1.bf16.msra.mxu0 0
      %1361 = vmatprep.subr.bf16.mxu0 0
      %1362 = vmatpush1.bf16.msra.mxu0 0
      %1363 = vmatprep.subr.bf16.mxu0 0
      %1364 = vmatpush1.bf16.msra.mxu0 0
      %1365 = vmatprep.subr.bf16.mxu0 0
      %1366 = vmatpush1.bf16.msra.mxu0 0
      %1367 = vmatprep.subr.bf16.mxu0 0
      %1368 = vmatpush1.bf16.msra.mxu0 0
      %1369 = vmatprep.subr.bf16.mxu0 0
      %1370 = vmatpush1.bf16.msra.mxu0 0
      %1371 = vmatprep.mubr.bf16.mxu0 0
      %1372 = vmatmul.mubr.bf16.gmra.mrb[0].mxu0 %v1132
      %v1373 = vpop.f32.mrb[0].mxu0
      %v1374 = vadd.f32 0.0, %v1373
      %v1375 = vpop.f32.mrb[0].mxu0
      %v1376 = vadd.f32 0.0, %v1375
      %v1377 = vpop.f32.mrb[0].mxu0
      %v1378 = vpop.f32.mrb[0].mxu0
      %1379 = vdwg.mxu0
      %1380 = vmatprep.subr.bf16.mxu0 %v1112
      %1381 = vmatpush1.bf16.msra.mxu0 %v1111
      %1382 = vmatprep.subr.bf16.mxu0 0
      %1383 = vmatpush1.bf16.msra.mxu0 0
      %1384 = vmatprep.subr.bf16.mxu0 0
      %1385 = vmatpush1.bf16.msra.mxu0 0
      %1386 = vmatprep.subr.bf16.mxu0 0
      %1387 = vmatpush1.bf16.msra.mxu0 0
      %1388 = vmatprep.subr.bf16.mxu0 0
      %1389 = vmatpush1.bf16.msra.mxu0 0
      %1390 = vmatprep.subr.bf16.mxu0 0
      %1391 = vmatpush1.bf16.msra.mxu0 0
      %1392 = vmatprep.subr.bf16.mxu0 0
      %1393 = vmatpush1.bf16.msra.mxu0 0
      %1394 = vmatprep.subr.bf16.mxu0 0
      %1395 = vmatpush1.bf16.msra.mxu0 0
      %1396 = vmatprep.subr.bf16.mxu0 0
      %1397 = vmatpush1.bf16.msra.mxu0 0
      %1398 = vmatprep.subr.bf16.mxu0 0
      %1399 = vmatpush1.bf16.msra.mxu0 0
      %1400 = vmatprep.subr.bf16.mxu0 0
      %1401 = vmatpush1.bf16.msra.mxu0 0
      %1402 = vmatprep.subr.bf16.mxu0 0
      %1403 = vmatpush1.bf16.msra.mxu0 0
      %1404 = vmatprep.subr.bf16.mxu0 0
      %1405 = vmatpush1.bf16.msra.mxu0 0
      %1406 = vmatprep.subr.bf16.mxu0 0
      %1407 = vmatpush1.bf16.msra.mxu0 0
      %1408 = vmatprep.subr.bf16.mxu0 0
      %1409 = vmatpush1.bf16.msra.mxu0 0
      %1410 = vmatprep.subr.bf16.mxu0 0
      %1411 = vmatpush1.bf16.msra.mxu0 0
      %1412 = vmatprep.mubr.bf16.mxu0 0
      %1413 = vmatmul.mubr.bf16.gmra.mrb[0].mxu0 %v1132
      %v1414 = vpop.f32.mrb[0].mxu0
      %v1415 = vadd.f32 0.0, %v1414
      %v1416 = vpop.f32.mrb[0].mxu0
      %v1417 = vadd.f32 0.0, %v1416
      %v1418 = vpop.f32.mrb[0].mxu0
      %v1419 = vpop.f32.mrb[0].mxu0
      %1420 = vdwg.mxu0
      %1421 = vmatprep.subr.bf16.mxu0 %v1114
      %1422 = vmatpush1.bf16.msra.mxu0 %v1113
      %1423 = vmatprep.subr.bf16.mxu0 0
      %1424 = vmatpush1.bf16.msra.mxu0 0
      %1425 = vmatprep.subr.bf16.mxu0 0
      %1426 = vmatpush1.bf16.msra.mxu0 0
      %1427 = vmatprep.subr.bf16.mxu0 0
      %1428 = vmatpush1.bf16.msra.mxu0 0
      %1429 = vmatprep.subr.bf16.mxu0 0
      %1430 = vmatpush1.bf16.msra.mxu0 0
      %1431 = vmatprep.subr.bf16.mxu0 0
      %1432 = vmatpush1.bf16.msra.mxu0 0
      %1433 = vmatprep.subr.bf16.mxu0 0
      %1434 = vmatpush1.bf16.msra.mxu0 0
      %1435 = vmatprep.subr.bf16.mxu0 0
      %1436 = vmatpush1.bf16.msra.mxu0 0
      %1437 = vmatprep.subr.bf16.mxu0 0
      %1438 = vmatpush1.bf16.msra.mxu0 0
      %1439 = vmatprep.subr.bf16.mxu0 0
      %1440 = vmatpush1.bf16.msra.mxu0 0
      %1441 = vmatprep.subr.bf16.mxu0 0
      %1442 = vmatpush1.bf16.msra.mxu0 0
      %1443 = vmatprep.subr.bf16.mxu0 0
      %1444 = vmatpush1.bf16.msra.mxu0 0
      %1445 = vmatprep.subr.bf16.mxu0 0
      %1446 = vmatpush1.bf16.msra.mxu0 0
      %1447 = vmatprep.subr.bf16.mxu0 0
      %1448 = vmatpush1.bf16.msra.mxu0 0
      %1449 = vmatprep.subr.bf16.mxu0 0
      %1450 = vmatpush1.bf16.msra.mxu0 0
      %1451 = vmatprep.subr.bf16.mxu0 0
      %1452 = vmatpush1.bf16.msra.mxu0 0
      %1453 = vmatprep.mubr.bf16.mxu0 0
      %1454 = vmatmul.mubr.bf16.gmra.mrb[0].mxu0 %v1132
      %v1455 = vpop.f32.mrb[0].mxu0
      %v1456 = vadd.f32 0.0, %v1455
      %v1457 = vpop.f32.mrb[0].mxu0
      %v1458 = vadd.f32 0.0, %v1457
      %v1459 = vpop.f32.mrb[0].mxu0
      %v1460 = vpop.f32.mrb[0].mxu0
      %1461 = vdwg.mxu0
      %v1462 = vadd.f32 %v739, %v1169
      %v1463 = vadd.f32 %v741, %v1171
      %v1464 = vadd.f32 %v780, %v1210
      %v1465 = vadd.f32 %v782, %v1212
      %v1466 = vadd.f32 %v821, %v1251
      %v1467 = vadd.f32 %v823, %v1253
      %v1468 = vadd.f32 %v862, %v1292
      %v1469 = vadd.f32 %v864, %v1294
      %v1470 = vadd.f32 %v903, %v1333
      %v1471 = vadd.f32 %v905, %v1335
      %v1472 = vadd.f32 %v944, %v1374
      %v1473 = vadd.f32 %v946, %v1376
      %v1474 = vadd.f32 %v985, %v1415
      %v1475 = vadd.f32 %v987, %v1417
      %v1476 = vadd.f32 %v1026, %v1456
      %v1477 = vadd.f32 %v1028, %v1458
      %v1478 = vld [vmem:[%s165 + $0x3] sm:$0xff]
      %v1479 = vpack.c.bf16 %v1478, %v1478
      %s1480 = scalar_lea.vmem %s1, 384
      %v1481 = vld [vmem:[%s1480] sm:$0xff]
      %v1482 = vld [vmem:[%s1480 + $0x8] sm:$0xff]
      %v1483 = vld [vmem:[%s1480 + $0x10] sm:$0xff]
      %v1484 = vld [vmem:[%s1480 + $0x18] sm:$0xff]
      %v1485 = vld [vmem:[%s1480 + $0x20] sm:$0xff]
      %v1486 = vld [vmem:[%s1480 + $0x28] sm:$0xff]
      %v1487 = vld [vmem:[%s1480 + $0x30] sm:$0xff]
      %v1488 = vld [vmem:[%s1480 + $0x38] sm:$0xff]
      %v1489 = vld [vmem:[%s1480 + $0x40] sm:$0xff]
      %v1490 = vld [vmem:[%s1480 + $0x48] sm:$0xff]
      %v1491 = vld [vmem:[%s1480 + $0x50] sm:$0xff]
      %v1492 = vld [vmem:[%s1480 + $0x58] sm:$0xff]
      %v1493 = vld [vmem:[%s1480 + $0x60] sm:$0xff]
      %v1494 = vld [vmem:[%s1480 + $0x68] sm:$0xff]
      %v1495 = vld [vmem:[%s1480 + $0x70] sm:$0xff]
      %v1496 = vld [vmem:[%s1480 + $0x78] sm:$0xff]
      %v1513 = vunpack.c.l.b16 %v1481
      %v1514 = vunpack.c.h.b16 %v1481
      %v1515 = vunpack.c.l.b16 %v1482
      %v1516 = vunpack.c.h.b16 %v1482
      %v1517 = vunpack.c.l.b16 %v1483
      %v1518 = vunpack.c.h.b16 %v1483
      %v1519 = vunpack.c.l.b16 %v1484
      %v1520 = vunpack.c.h.b16 %v1484
      %v1521 = vunpack.c.l.b16 %v1485
      %v1522 = vunpack.c.h.b16 %v1485
      %v1523 = vunpack.c.l.b16 %v1486
      %v1524 = vunpack.c.h.b16 %v1486
      %v1525 = vunpack.c.l.b16 %v1487
      %v1526 = vunpack.c.h.b16 %v1487
      %v1527 = vunpack.c.l.b16 %v1488
      %v1528 = vunpack.c.h.b16 %v1488
      %v1529 = vunpack.c.l.b16 %v1489
      %v1530 = vunpack.c.h.b16 %v1489
      %v1531 = vunpack.c.l.b16 %v1490
      %v1532 = vunpack.c.h.b16 %v1490
      %v1533 = vunpack.c.l.b16 %v1491
      %v1534 = vunpack.c.h.b16 %v1491
      %v1535 = vunpack.c.l.b16 %v1492
      %v1536 = vunpack.c.h.b16 %v1492
      %v1537 = vunpack.c.l.b16 %v1493
      %v1538 = vunpack.c.h.b16 %v1493
      %v1539 = vunpack.c.l.b16 %v1494
      %v1540 = vunpack.c.h.b16 %v1494
      %v1541 = vunpack.c.l.b16 %v1495
      %v1542 = vunpack.c.h.b16 %v1495
      %v1543 = vunpack.c.l.b16 %v1496
      %v1544 = vunpack.c.h.b16 %v1496
      %v1545 = vpack.c.b16 %v1529, %v1513
      %v1546 = vpack.c.b16 %v1530, %v1514
      %v1547 = vpack.c.b16 %v1531, %v1515
      %v1548 = vpack.c.b16 %v1532, %v1516
      %v1549 = vpack.c.b16 %v1533, %v1517
      %v1550 = vpack.c.b16 %v1534, %v1518
      %v1551 = vpack.c.b16 %v1535, %v1519
      %v1552 = vpack.c.b16 %v1536, %v1520
      %v1553 = vpack.c.b16 %v1537, %v1521
      %v1554 = vpack.c.b16 %v1538, %v1522
      %v1555 = vpack.c.b16 %v1539, %v1523
      %v1556 = vpack.c.b16 %v1540, %v1524
      %v1557 = vpack.c.b16 %v1541, %v1525
      %v1558 = vpack.c.b16 %v1542, %v1526
      %v1559 = vpack.c.b16 %v1543, %v1527
      %v1560 = vpack.c.b16 %v1544, %v1528
      %v1578 = vsel %vm289, %v1479, 0
      %1580 = vmatprep.subr.bf16.mxu0 %v1546
      %1581 = vmatpush1.bf16.msra.mxu0 %v1545
      %1582 = vmatprep.subr.bf16.mxu0 0
      %1583 = vmatpush1.bf16.msra.mxu0 0
      %1584 = vmatprep.subr.bf16.mxu0 0
      %1585 = vmatpush1.bf16.msra.mxu0 0
      %1586 = vmatprep.subr.bf16.mxu0 0
      %1587 = vmatpush1.bf16.msra.mxu0 0
      %1588 = vmatprep.subr.bf16.mxu0 0
      %1589 = vmatpush1.bf16.msra.mxu0 0
      %1590 = vmatprep.subr.bf16.mxu0 0
      %1591 = vmatpush1.bf16.msra.mxu0 0
      %1592 = vmatprep.subr.bf16.mxu0 0
      %1593 = vmatpush1.bf16.msra.mxu0 0
      %1594 = vmatprep.subr.bf16.mxu0 0
      %1595 = vmatpush1.bf16.msra.mxu0 0
      %1596 = vmatprep.subr.bf16.mxu0 0
      %1597 = vmatpush1.bf16.msra.mxu0 0
      %1598 = vmatprep.subr.bf16.mxu0 0
      %1599 = vmatpush1.bf16.msra.mxu0 0
      %1600 = vmatprep.subr.bf16.mxu0 0
      %1601 = vmatpush1.bf16.msra.mxu0 0
      %1602 = vmatprep.subr.bf16.mxu0 0
      %1603 = vmatpush1.bf16.msra.mxu0 0
      %1604 = vmatprep.subr.bf16.mxu0 0
      %1605 = vmatpush1.bf16.msra.mxu0 0
      %1606 = vmatprep.subr.bf16.mxu0 0
      %1607 = vmatpush1.bf16.msra.mxu0 0
      %1608 = vmatprep.subr.bf16.mxu0 0
      %1609 = vmatpush1.bf16.msra.mxu0 0
      %1610 = vmatprep.subr.bf16.mxu0 0
      %1611 = vmatpush1.bf16.msra.mxu0 0
      %1612 = vmatprep.mubr.bf16.mxu0 0
      %1613 = vmatmul.mubr.bf16.gmra.mrb[0].mxu0 %v1578
      %v1614 = vpop.f32.mrb[0].mxu0
      %v1615 = vadd.f32 0.0, %v1614
      %v1616 = vpop.f32.mrb[0].mxu0
      %v1617 = vadd.f32 0.0, %v1616
      %v1618 = vpop.f32.mrb[0].mxu0
      %v1619 = vpop.f32.mrb[0].mxu0
      %1620 = vdwg.mxu0
      %1621 = vmatprep.subr.bf16.mxu0 %v1548
      %1622 = vmatpush1.bf16.msra.mxu0 %v1547
      %1623 = vmatprep.subr.bf16.mxu0 0
      %1624 = vmatpush1.bf16.msra.mxu0 0
      %1625 = vmatprep.subr.bf16.mxu0 0
      %1626 = vmatpush1.bf16.msra.mxu0 0
      %1627 = vmatprep.subr.bf16.mxu0 0
      %1628 = vmatpush1.bf16.msra.mxu0 0
      %1629 = vmatprep.subr.bf16.mxu0 0
      %1630 = vmatpush1.bf16.msra.mxu0 0
      %1631 = vmatprep.subr.bf16.mxu0 0
      %1632 = vmatpush1.bf16.msra.mxu0 0
      %1633 = vmatprep.subr.bf16.mxu0 0
      %1634 = vmatpush1.bf16.msra.mxu0 0
      %1635 = vmatprep.subr.bf16.mxu0 0
      %1636 = vmatpush1.bf16.msra.mxu0 0
      %1637 = vmatprep.subr.bf16.mxu0 0
      %1638 = vmatpush1.bf16.msra.mxu0 0
      %1639 = vmatprep.subr.bf16.mxu0 0
      %1640 = vmatpush1.bf16.msra.mxu0 0
      %1641 = vmatprep.subr.bf16.mxu0 0
      %1642 = vmatpush1.bf16.msra.mxu0 0
      %1643 = vmatprep.subr.bf16.mxu0 0
      %1644 = vmatpush1.bf16.msra.mxu0 0
      %1645 = vmatprep.subr.bf16.mxu0 0
      %1646 = vmatpush1.bf16.msra.mxu0 0
      %1647 = vmatprep.subr.bf16.mxu0 0
      %1648 = vmatpush1.bf16.msra.mxu0 0
      %1649 = vmatprep.subr.bf16.mxu0 0
      %1650 = vmatpush1.bf16.msra.mxu0 0
      %1651 = vmatprep.subr.bf16.mxu0 0
      %1652 = vmatpush1.bf16.msra.mxu0 0
      %1653 = vmatprep.mubr.bf16.mxu0 0
      %1654 = vmatmul.mubr.bf16.gmra.mrb[0].mxu0 %v1578
      %v1655 = vpop.f32.mrb[0].mxu0
      %v1656 = vadd.f32 0.0, %v1655
      %v1657 = vpop.f32.mrb[0].mxu0
      %v1658 = vadd.f32 0.0, %v1657
      %v1659 = vpop.f32.mrb[0].mxu0
      %v1660 = vpop.f32.mrb[0].mxu0
      %1661 = vdwg.mxu0
      %1662 = vmatprep.subr.bf16.mxu0 %v1550
      %1663 = vmatpush1.bf16.msra.mxu0 %v1549
      %1664 = vmatprep.subr.bf16.mxu0 0
      %1665 = vmatpush1.bf16.msra.mxu0 0
      %1666 = vmatprep.subr.bf16.mxu0 0
      %1667 = vmatpush1.bf16.msra.mxu0 0
      %1668 = vmatprep.subr.bf16.mxu0 0
      %1669 = vmatpush1.bf16.msra.mxu0 0
      %1670 = vmatprep.subr.bf16.mxu0 0
      %1671 = vmatpush1.bf16.msra.mxu0 0
      %1672 = vmatprep.subr.bf16.mxu0 0
      %1673 = vmatpush1.bf16.msra.mxu0 0
      %1674 = vmatprep.subr.bf16.mxu0 0
      %1675 = vmatpush1.bf16.msra.mxu0 0
      %1676 = vmatprep.subr.bf16.mxu0 0
      %1677 = vmatpush1.bf16.msra.mxu0 0
      %1678 = vmatprep.subr.bf16.mxu0 0
      %1679 = vmatpush1.bf16.msra.mxu0 0
      %1680 = vmatprep.subr.bf16.mxu0 0
      %1681 = vmatpush1.bf16.msra.mxu0 0
      %1682 = vmatprep.subr.bf16.mxu0 0
      %1683 = vmatpush1.bf16.msra.mxu0 0
      %1684 = vmatprep.subr.bf16.mxu0 0
      %1685 = vmatpush1.bf16.msra.mxu0 0
      %1686 = vmatprep.subr.bf16.mxu0 0
      %1687 = vmatpush1.bf16.msra.mxu0 0
      %1688 = vmatprep.subr.bf16.mxu0 0
      %1689 = vmatpush1.bf16.msra.mxu0 0
      %1690 = vmatprep.subr.bf16.mxu0 0
      %1691 = vmatpush1.bf16.msra.mxu0 0
      %1692 = vmatprep.subr.bf16.mxu0 0
      %1693 = vmatpush1.bf16.msra.mxu0 0
      %1694 = vmatprep.mubr.bf16.mxu0 0
      %1695 = vmatmul.mubr.bf16.gmra.mrb[0].mxu0 %v1578
      %v1696 = vpop.f32.mrb[0].mxu0
      %v1697 = vadd.f32 0.0, %v1696
      %v1698 = vpop.f32.mrb[0].mxu0
      %v1699 = vadd.f32 0.0, %v1698
      %v1700 = vpop.f32.mrb[0].mxu0
      %v1701 = vpop.f32.mrb[0].mxu0
      %1702 = vdwg.mxu0
      %1703 = vmatprep.subr.bf16.mxu0 %v1552
      %1704 = vmatpush1.bf16.msra.mxu0 %v1551
      %1705 = vmatprep.subr.bf16.mxu0 0
      %1706 = vmatpush1.bf16.msra.mxu0 0
      %1707 = vmatprep.subr.bf16.mxu0 0
      %1708 = vmatpush1.bf16.msra.mxu0 0
      %1709 = vmatprep.subr.bf16.mxu0 0
      %1710 = vmatpush1.bf16.msra.mxu0 0
      %1711 = vmatprep.subr.bf16.mxu0 0
      %1712 = vmatpush1.bf16.msra.mxu0 0
      %1713 = vmatprep.subr.bf16.mxu0 0
      %1714 = vmatpush1.bf16.msra.mxu0 0
      %1715 = vmatprep.subr.bf16.mxu0 0
      %1716 = vmatpush1.bf16.msra.mxu0 0
      %1717 = vmatprep.subr.bf16.mxu0 0
      %1718 = vmatpush1.bf16.msra.mxu0 0
      %1719 = vmatprep.subr.bf16.mxu0 0
      %1720 = vmatpush1.bf16.msra.mxu0 0
      %1721 = vmatprep.subr.bf16.mxu0 0
      %1722 = vmatpush1.bf16.msra.mxu0 0
      %1723 = vmatprep.subr.bf16.mxu0 0
      %1724 = vmatpush1.bf16.msra.mxu0 0
      %1725 = vmatprep.subr.bf16.mxu0 0
      %1726 = vmatpush1.bf16.msra.mxu0 0
      %1727 = vmatprep.subr.bf16.mxu0 0
      %1728 = vmatpush1.bf16.msra.mxu0 0
      %1729 = vmatprep.subr.bf16.mxu0 0
      %1730 = vmatpush1.bf16.msra.mxu0 0
      %1731 = vmatprep.subr.bf16.mxu0 0
      %1732 = vmatpush1.bf16.msra.mxu0 0
      %1733 = vmatprep.subr.bf16.mxu0 0
      %1734 = vmatpush1.bf16.msra.mxu0 0
      %1735 = vmatprep.mubr.bf16.mxu0 0
      %1736 = vmatmul.mubr.bf16.gmra.mrb[0].mxu0 %v1578
      %v1737 = vpop.f32.mrb[0].mxu0
      %v1738 = vadd.f32 0.0, %v1737
      %v1739 = vpop.f32.mrb[0].mxu0
      %v1740 = vadd.f32 0.0, %v1739
      %v1741 = vpop.f32.mrb[0].mxu0
      %v1742 = vpop.f32.mrb[0].mxu0
      %1743 = vdwg.mxu0
      %1744 = vmatprep.subr.bf16.mxu0 %v1554
      %1745 = vmatpush1.bf16.msra.mxu0 %v1553
      %1746 = vmatprep.subr.bf16.mxu0 0
      %1747 = vmatpush1.bf16.msra.mxu0 0
      %1748 = vmatprep.subr.bf16.mxu0 0
      %1749 = vmatpush1.bf16.msra.mxu0 0
      %1750 = vmatprep.subr.bf16.mxu0 0
      %1751 = vmatpush1.bf16.msra.mxu0 0
      %1752 = vmatprep.subr.bf16.mxu0 0
      %1753 = vmatpush1.bf16.msra.mxu0 0
      %1754 = vmatprep.subr.bf16.mxu0 0
      %1755 = vmatpush1.bf16.msra.mxu0 0
      %1756 = vmatprep.subr.bf16.mxu0 0
      %1757 = vmatpush1.bf16.msra.mxu0 0
      %1758 = vmatprep.subr.bf16.mxu0 0
      %1759 = vmatpush1.bf16.msra.mxu0 0
      %1760 = vmatprep.subr.bf16.mxu0 0
      %1761 = vmatpush1.bf16.msra.mxu0 0
      %1762 = vmatprep.subr.bf16.mxu0 0
      %1763 = vmatpush1.bf16.msra.mxu0 0
      %1764 = vmatprep.subr.bf16.mxu0 0
      %1765 = vmatpush1.bf16.msra.mxu0 0
      %1766 = vmatprep.subr.bf16.mxu0 0
      %1767 = vmatpush1.bf16.msra.mxu0 0
      %1768 = vmatprep.subr.bf16.mxu0 0
      %1769 = vmatpush1.bf16.msra.mxu0 0
      %1770 = vmatprep.subr.bf16.mxu0 0
      %1771 = vmatpush1.bf16.msra.mxu0 0
      %1772 = vmatprep.subr.bf16.mxu0 0
      %1773 = vmatpush1.bf16.msra.mxu0 0
      %1774 = vmatprep.subr.bf16.mxu0 0
      %1775 = vmatpush1.bf16.msra.mxu0 0
      %1776 = vmatprep.mubr.bf16.mxu0 0
      %1777 = vmatmul.mubr.bf16.gmra.mrb[0].mxu0 %v1578
      %v1778 = vpop.f32.mrb[0].mxu0
      %v1779 = vadd.f32 0.0, %v1778
      %v1780 = vpop.f32.mrb[0].mxu0
      %v1781 = vadd.f32 0.0, %v1780
      %v1782 = vpop.f32.mrb[0].mxu0
      %v1783 = vpop.f32.mrb[0].mxu0
      %1784 = vdwg.mxu0
      %1785 = vmatprep.subr.bf16.mxu0 %v1556
      %1786 = vmatpush1.bf16.msra.mxu0 %v1555
      %1787 = vmatprep.subr.bf16.mxu0 0
      %1788 = vmatpush1.bf16.msra.mxu0 0
      %1789 = vmatprep.subr.bf16.mxu0 0
      %1790 = vmatpush1.bf16.msra.mxu0 0
      %1791 = vmatprep.subr.bf16.mxu0 0
      %1792 = vmatpush1.bf16.msra.mxu0 0
      %1793 = vmatprep.subr.bf16.mxu0 0
      %1794 = vmatpush1.bf16.msra.mxu0 0
      %1795 = vmatprep.subr.bf16.mxu0 0
      %1796 = vmatpush1.bf16.msra.mxu0 0
      %1797 = vmatprep.subr.bf16.mxu0 0
      %1798 = vmatpush1.bf16.msra.mxu0 0
      %1799 = vmatprep.subr.bf16.mxu0 0
      %1800 = vmatpush1.bf16.msra.mxu0 0
      %1801 = vmatprep.subr.bf16.mxu0 0
      %1802 = vmatpush1.bf16.msra.mxu0 0
      %1803 = vmatprep.subr.bf16.mxu0 0
      %1804 = vmatpush1.bf16.msra.mxu0 0
      %1805 = vmatprep.subr.bf16.mxu0 0
      %1806 = vmatpush1.bf16.msra.mxu0 0
      %1807 = vmatprep.subr.bf16.mxu0 0
      %1808 = vmatpush1.bf16.msra.mxu0 0
      %1809 = vmatprep.subr.bf16.mxu0 0
      %1810 = vmatpush1.bf16.msra.mxu0 0
      %1811 = vmatprep.subr.bf16.mxu0 0
      %1812 = vmatpush1.bf16.msra.mxu0 0
      %1813 = vmatprep.subr.bf16.mxu0 0
      %1814 = vmatpush1.bf16.msra.mxu0 0
      %1815 = vmatprep.subr.bf16.mxu0 0
      %1816 = vmatpush1.bf16.msra.mxu0 0
      %1817 = vmatprep.mubr.bf16.mxu0 0
      %1818 = vmatmul.mubr.bf16.gmra.mrb[0].mxu0 %v1578
      %v1819 = vpop.f32.mrb[0].mxu0
      %v1820 = vadd.f32 0.0, %v1819
      %v1821 = vpop.f32.mrb[0].mxu0
      %v1822 = vadd.f32 0.0, %v1821
      %v1823 = vpop.f32.mrb[0].mxu0
      %v1824 = vpop.f32.mrb[0].mxu0
      %1825 = vdwg.mxu0
      %1826 = vmatprep.subr.bf16.mxu0 %v1558
      %1827 = vmatpush1.bf16.msra.mxu0 %v1557
      %1828 = vmatprep.subr.bf16.mxu0 0
      %1829 = vmatpush1.bf16.msra.mxu0 0
      %1830 = vmatprep.subr.bf16.mxu0 0
      %1831 = vmatpush1.bf16.msra.mxu0 0
      %1832 = vmatprep.subr.bf16.mxu0 0
      %1833 = vmatpush1.bf16.msra.mxu0 0
      %1834 = vmatprep.subr.bf16.mxu0 0
      %1835 = vmatpush1.bf16.msra.mxu0 0
      %1836 = vmatprep.subr.bf16.mxu0 0
      %1837 = vmatpush1.bf16.msra.mxu0 0
      %1838 = vmatprep.subr.bf16.mxu0 0
      %1839 = vmatpush1.bf16.msra.mxu0 0
      %1840 = vmatprep.subr.bf16.mxu0 0
      %1841 = vmatpush1.bf16.msra.mxu0 0
      %1842 = vmatprep.subr.bf16.mxu0 0
      %1843 = vmatpush1.bf16.msra.mxu0 0
      %1844 = vmatprep.subr.bf16.mxu0 0
      %1845 = vmatpush1.bf16.msra.mxu0 0
      %1846 = vmatprep.subr.bf16.mxu0 0
      %1847 = vmatpush1.bf16.msra.mxu0 0
      %1848 = vmatprep.subr.bf16.mxu0 0
      %1849 = vmatpush1.bf16.msra.mxu0 0
      %1850 = vmatprep.subr.bf16.mxu0 0
      %1851 = vmatpush1.bf16.msra.mxu0 0
      %1852 = vmatprep.subr.bf16.mxu0 0
      %1853 = vmatpush1.bf16.msra.mxu0 0
      %1854 = vmatprep.subr.bf16.mxu0 0
      %1855 = vmatpush1.bf16.msra.mxu0 0
      %1856 = vmatprep.subr.bf16.mxu0 0
      %1857 = vmatpush1.bf16.msra.mxu0 0
      %1858 = vmatprep.mubr.bf16.mxu0 0
      %1859 = vmatmul.mubr.bf16.gmra.mrb[0].mxu0 %v1578
      %v1860 = vpop.f32.mrb[0].mxu0
      %v1861 = vadd.f32 0.0, %v1860
      %v1862 = vpop.f32.mrb[0].mxu0
      %v1863 = vadd.f32 0.0, %v1862
      %v1864 = vpop.f32.mrb[0].mxu0
      %v1865 = vpop.f32.mrb[0].mxu0
      %1866 = vdwg.mxu0
      %1867 = vmatprep.subr.bf16.mxu0 %v1560
      %1868 = vmatpush1.bf16.msra.mxu0 %v1559
      %1869 = vmatprep.subr.bf16.mxu0 0
      %1870 = vmatpush1.bf16.msra.mxu0 0
      %1871 = vmatprep.subr.bf16.mxu0 0
      %1872 = vmatpush1.bf16.msra.mxu0 0
      %1873 = vmatprep.subr.bf16.mxu0 0
      %1874 = vmatpush1.bf16.msra.mxu0 0
      %1875 = vmatprep.subr.bf16.mxu0 0
      %1876 = vmatpush1.bf16.msra.mxu0 0
      %1877 = vmatprep.subr.bf16.mxu0 0
      %1878 = vmatpush1.bf16.msra.mxu0 0
      %1879 = vmatprep.subr.bf16.mxu0 0
      %1880 = vmatpush1.bf16.msra.mxu0 0
      %1881 = vmatprep.subr.bf16.mxu0 0
      %1882 = vmatpush1.bf16.msra.mxu0 0
      %1883 = vmatprep.subr.bf16.mxu0 0
      %1884 = vmatpush1.bf16.msra.mxu0 0
      %1885 = vmatprep.subr.bf16.mxu0 0
      %1886 = vmatpush1.bf16.msra.mxu0 0
      %1887 = vmatprep.subr.bf16.mxu0 0
      %1888 = vmatpush1.bf16.msra.mxu0 0
      %1889 = vmatprep.subr.bf16.mxu0 0
      %1890 = vmatpush1.bf16.msra.mxu0 0
      %1891 = vmatprep.subr.bf16.mxu0 0
      %1892 = vmatpush1.bf16.msra.mxu0 0
      %1893 = vmatprep.subr.bf16.mxu0 0
      %1894 = vmatpush1.bf16.msra.mxu0 0
      %1895 = vmatprep.subr.bf16.mxu0 0
      %1896 = vmatpush1.bf16.msra.mxu0 0
      %1897 = vmatprep.subr.bf16.mxu0 0
      %1898 = vmatpush1.bf16.msra.mxu0 0
      %1899 = vmatprep.mubr.bf16.mxu0 0
      %1900 = vmatmul.mubr.bf16.gmra.mrb[0].mxu0 %v1578
      %v1901 = vpop.f32.mrb[0].mxu0
      %v1902 = vadd.f32 0.0, %v1901
      %v1903 = vpop.f32.mrb[0].mxu0
      %v1904 = vadd.f32 0.0, %v1903
      %v1905 = vpop.f32.mrb[0].mxu0
      %v1906 = vpop.f32.mrb[0].mxu0
      %1907 = vdwg.mxu0
      %v1908 = vadd.f32 %v1462, %v1615
      %v1909 = vadd.f32 %v1463, %v1617
      %v1910 = vadd.f32 %v1464, %v1656
      %v1911 = vadd.f32 %v1465, %v1658
      %v1912 = vadd.f32 %v1466, %v1697
      %v1913 = vadd.f32 %v1467, %v1699
      %v1914 = vadd.f32 %v1468, %v1738
      %v1915 = vadd.f32 %v1469, %v1740
      %v1916 = vadd.f32 %v1470, %v1779
      %v1917 = vadd.f32 %v1471, %v1781
      %v1918 = vadd.f32 %v1472, %v1820
      %v1919 = vadd.f32 %v1473, %v1822
      %v1920 = vadd.f32 %v1474, %v1861
      %v1921 = vadd.f32 %v1475, %v1863
      %v1922 = vadd.f32 %v1476, %v1902
      %v1923 = vadd.f32 %v1477, %v1904
      %v1924 = vld [vmem:[%s165 + $0x4] sm:$0xff]
      %v1925 = vpack.c.bf16 %v1924, %v1924
      %s1926 = scalar_lea.vmem %s1, 512
      %v1927 = vld [vmem:[%s1926] sm:$0xff]
      %v1928 = vld [vmem:[%s1926 + $0x8] sm:$0xff]
      %v1929 = vld [vmem:[%s1926 + $0x10] sm:$0xff]
      %v1930 = vld [vmem:[%s1926 + $0x18] sm:$0xff]
      %v1931 = vld [vmem:[%s1926 + $0x20] sm:$0xff]
      %v1932 = vld [vmem:[%s1926 + $0x28] sm:$0xff]
      %v1933 = vld [vmem:[%s1926 + $0x30] sm:$0xff]
      %v1934 = vld [vmem:[%s1926 + $0x38] sm:$0xff]
      %v1935 = vld [vmem:[%s1926 + $0x40] sm:$0xff]
      %v1936 = vld [vmem:[%s1926 + $0x48] sm:$0xff]
      %v1937 = vld [vmem:[%s1926 + $0x50] sm:$0xff]
      %v1938 = vld [vmem:[%s1926 + $0x58] sm:$0xff]
      %v1939 = vld [vmem:[%s1926 + $0x60] sm:$0xff]
      %v1940 = vld [vmem:[%s1926 + $0x68] sm:$0xff]
      %v1941 = vld [vmem:[%s1926 + $0x70] sm:$0xff]
      %v1942 = vld [vmem:[%s1926 + $0x78] sm:$0xff]
      %v1959 = vunpack.c.l.b16 %v1927
      %v1960 = vunpack.c.h.b16 %v1927
      %v1961 = vunpack.c.l.b16 %v1928
      %v1962 = vunpack.c.h.b16 %v1928
      %v1963 = vunpack.c.l.b16 %v1929
      %v1964 = vunpack.c.h.b16 %v1929
      %v1965 = vunpack.c.l.b16 %v1930
      %v1966 = vunpack.c.h.b16 %v1930
      %v1967 = vunpack.c.l.b16 %v1931
      %v1968 = vunpack.c.h.b16 %v1931
      %v1969 = vunpack.c.l.b16 %v1932
      %v1970 = vunpack.c.h.b16 %v1932
      %v1971 = vunpack.c.l.b16 %v1933
      %v1972 = vunpack.c.h.b16 %v1933
      %v1973 = vunpack.c.l.b16 %v1934
      %v1974 = vunpack.c.h.b16 %v1934
      %v1975 = vunpack.c.l.b16 %v1935
      %v1976 = vunpack.c.h.b16 %v1935
      %v1977 = vunpack.c.l.b16 %v1936
      %v1978 = vunpack.c.h.b16 %v1936
      %v1979 = vunpack.c.l.b16 %v1937
      %v1980 = vunpack.c.h.b16 %v1937
      %v1981 = vunpack.c.l.b16 %v1938
      %v1982 = vunpack.c.h.b16 %v1938
      %v1983 = vunpack.c.l.b16 %v1939
      %v1984 = vunpack.c.h.b16 %v1939
      %v1985 = vunpack.c.l.b16 %v1940
      %v1986 = vunpack.c.h.b16 %v1940
      %v1987 = vunpack.c.l.b16 %v1941
      %v1988 = vunpack.c.h.b16 %v1941
      %v1989 = vunpack.c.l.b16 %v1942
      %v1990 = vunpack.c.h.b16 %v1942
      %v1991 = vpack.c.b16 %v1975, %v1959
      %v1992 = vpack.c.b16 %v1976, %v1960
      %v1993 = vpack.c.b16 %v1977, %v1961
      %v1994 = vpack.c.b16 %v1978, %v1962
      %v1995 = vpack.c.b16 %v1979, %v1963
      %v1996 = vpack.c.b16 %v1980, %v1964
      %v1997 = vpack.c.b16 %v1981, %v1965
      %v1998 = vpack.c.b16 %v1982, %v1966
      %v1999 = vpack.c.b16 %v1983, %v1967
      %v2000 = vpack.c.b16 %v1984, %v1968
      %v2001 = vpack.c.b16 %v1985, %v1969
      %v2002 = vpack.c.b16 %v1986, %v1970
      %v2003 = vpack.c.b16 %v1987, %v1971
      %v2004 = vpack.c.b16 %v1988, %v1972
      %v2005 = vpack.c.b16 %v1989, %v1973
      %v2006 = vpack.c.b16 %v1990, %v1974
      %v2024 = vsel %vm289, %v1925, 0
      %2026 = vmatprep.subr.bf16.mxu0 %v1992
      %2027 = vmatpush1.bf16.msra.mxu0 %v1991
      %2028 = vmatprep.subr.bf16.mxu0 0
      %2029 = vmatpush1.bf16.msra.mxu0 0
      %2030 = vmatprep.subr.bf16.mxu0 0
      %2031 = vmatpush1.bf16.msra.mxu0 0
      %2032 = vmatprep.subr.bf16.mxu0 0
      %2033 = vmatpush1.bf16.msra.mxu0 0
      %2034 = vmatprep.subr.bf16.mxu0 0
      %2035 = vmatpush1.bf16.msra.mxu0 0
      %2036 = vmatprep.subr.bf16.mxu0 0
      %2037 = vmatpush1.bf16.msra.mxu0 0
      %2038 = vmatprep.subr.bf16.mxu0 0
      %2039 = vmatpush1.bf16.msra.mxu0 0
      %2040 = vmatprep.subr.bf16.mxu0 0
      %2041 = vmatpush1.bf16.msra.mxu0 0
      %2042 = vmatprep.subr.bf16.mxu0 0
      %2043 = vmatpush1.bf16.msra.mxu0 0
      %2044 = vmatprep.subr.bf16.mxu0 0
      %2045 = vmatpush1.bf16.msra.mxu0 0
      %2046 = vmatprep.subr.bf16.mxu0 0
      %2047 = vmatpush1.bf16.msra.mxu0 0
      %2048 = vmatprep.subr.bf16.mxu0 0
      %2049 = vmatpush1.bf16.msra.mxu0 0
      %2050 = vmatprep.subr.bf16.mxu0 0
      %2051 = vmatpush1.bf16.msra.mxu0 0
      %2052 = vmatprep.subr.bf16.mxu0 0
      %2053 = vmatpush1.bf16.msra.mxu0 0
      %2054 = vmatprep.subr.bf16.mxu0 0
      %2055 = vmatpush1.bf16.msra.mxu0 0
      %2056 = vmatprep.subr.bf16.mxu0 0
      %2057 = vmatpush1.bf16.msra.mxu0 0
      %2058 = vmatprep.mubr.bf16.mxu0 0
      %2059 = vmatmul.mubr.bf16.gmra.mrb[0].mxu0 %v2024
      %v2060 = vpop.f32.mrb[0].mxu0
      %v2061 = vadd.f32 0.0, %v2060
      %v2062 = vpop.f32.mrb[0].mxu0
      %v2063 = vadd.f32 0.0, %v2062
      %v2064 = vpop.f32.mrb[0].mxu0
      %v2065 = vpop.f32.mrb[0].mxu0
      %2066 = vdwg.mxu0
      %2067 = vmatprep.subr.bf16.mxu0 %v1994
      %2068 = vmatpush1.bf16.msra.mxu0 %v1993
      %2069 = vmatprep.subr.bf16.mxu0 0
      %2070 = vmatpush1.bf16.msra.mxu0 0
      %2071 = vmatprep.subr.bf16.mxu0 0
      %2072 = vmatpush1.bf16.msra.mxu0 0
      %2073 = vmatprep.subr.bf16.mxu0 0
      %2074 = vmatpush1.bf16.msra.mxu0 0
      %2075 = vmatprep.subr.bf16.mxu0 0
      %2076 = vmatpush1.bf16.msra.mxu0 0
      %2077 = vmatprep.subr.bf16.mxu0 0
      %2078 = vmatpush1.bf16.msra.mxu0 0
      %2079 = vmatprep.subr.bf16.mxu0 0
      %2080 = vmatpush1.bf16.msra.mxu0 0
      %2081 = vmatprep.subr.bf16.mxu0 0
      %2082 = vmatpush1.bf16.msra.mxu0 0
      %2083 = vmatprep.subr.bf16.mxu0 0
      %2084 = vmatpush1.bf16.msra.mxu0 0
      %2085 = vmatprep.subr.bf16.mxu0 0
      %2086 = vmatpush1.bf16.msra.mxu0 0
      %2087 = vmatprep.subr.bf16.mxu0 0
      %2088 = vmatpush1.bf16.msra.mxu0 0
      %2089 = vmatprep.subr.bf16.mxu0 0
      %2090 = vmatpush1.bf16.msra.mxu0 0
      %2091 = vmatprep.subr.bf16.mxu0 0
      %2092 = vmatpush1.bf16.msra.mxu0 0
      %2093 = vmatprep.subr.bf16.mxu0 0
      %2094 = vmatpush1.bf16.msra.mxu0 0
      %2095 = vmatprep.subr.bf16.mxu0 0
      %2096 = vmatpush1.bf16.msra.mxu0 0
      %2097 = vmatprep.subr.bf16.mxu0 0
      %2098 = vmatpush1.bf16.msra.mxu0 0
      %2099 = vmatprep.mubr.bf16.mxu0 0
      %2100 = vmatmul.mubr.bf16.gmra.mrb[0].mxu0 %v2024
      %v2101 = vpop.f32.mrb[0].mxu0
      %v2102 = vadd.f32 0.0, %v2101
      %v2103 = vpop.f32.mrb[0].mxu0
      %v2104 = vadd.f32 0.0, %v2103
      %v2105 = vpop.f32.mrb[0].mxu0
      %v2106 = vpop.f32.mrb[0].mxu0
      %2107 = vdwg.mxu0
      %2108 = vmatprep.subr.bf16.mxu0 %v1996
      %2109 = vmatpush1.bf16.msra.mxu0 %v1995
      %2110 = vmatprep.subr.bf16.mxu0 0
      %2111 = vmatpush1.bf16.msra.mxu0 0
      %2112 = vmatprep.subr.bf16.mxu0 0
      %2113 = vmatpush1.bf16.msra.mxu0 0
      %2114 = vmatprep.subr.bf16.mxu0 0
      %2115 = vmatpush1.bf16.msra.mxu0 0
      %2116 = vmatprep.subr.bf16.mxu0 0
      %2117 = vmatpush1.bf16.msra.mxu0 0
      %2118 = vmatprep.subr.bf16.mxu0 0
      %2119 = vmatpush1.bf16.msra.mxu0 0
      %2120 = vmatprep.subr.bf16.mxu0 0
      %2121 = vmatpush1.bf16.msra.mxu0 0
      %2122 = vmatprep.subr.bf16.mxu0 0
      %2123 = vmatpush1.bf16.msra.mxu0 0
      %2124 = vmatprep.subr.bf16.mxu0 0
      %2125 = vmatpush1.bf16.msra.mxu0 0
      %2126 = vmatprep.subr.bf16.mxu0 0
      %2127 = vmatpush1.bf16.msra.mxu0 0
      %2128 = vmatprep.subr.bf16.mxu0 0
      %2129 = vmatpush1.bf16.msra.mxu0 0
      %2130 = vmatprep.subr.bf16.mxu0 0
      %2131 = vmatpush1.bf16.msra.mxu0 0
      %2132 = vmatprep.subr.bf16.mxu0 0
      %2133 = vmatpush1.bf16.msra.mxu0 0
      %2134 = vmatprep.subr.bf16.mxu0 0
      %2135 = vmatpush1.bf16.msra.mxu0 0
      %2136 = vmatprep.subr.bf16.mxu0 0
      %2137 = vmatpush1.bf16.msra.mxu0 0
      %2138 = vmatprep.subr.bf16.mxu0 0
      %2139 = vmatpush1.bf16.msra.mxu0 0
      %2140 = vmatprep.mubr.bf16.mxu0 0
      %2141 = vmatmul.mubr.bf16.gmra.mrb[0].mxu0 %v2024
      %v2142 = vpop.f32.mrb[0].mxu0
      %v2143 = vadd.f32 0.0, %v2142
      %v2144 = vpop.f32.mrb[0].mxu0
      %v2145 = vadd.f32 0.0, %v2144
      %v2146 = vpop.f32.mrb[0].mxu0
      %v2147 = vpop.f32.mrb[0].mxu0
      %2148 = vdwg.mxu0
      %2149 = vmatprep.subr.bf16.mxu0 %v1998
      %2150 = vmatpush1.bf16.msra.mxu0 %v1997
      %2151 = vmatprep.subr.bf16.mxu0 0
      %2152 = vmatpush1.bf16.msra.mxu0 0
      %2153 = vmatprep.subr.bf16.mxu0 0
      %2154 = vmatpush1.bf16.msra.mxu0 0
      %2155 = vmatprep.subr.bf16.mxu0 0
      %2156 = vmatpush1.bf16.msra.mxu0 0
      %2157 = vmatprep.subr.bf16.mxu0 0
      %2158 = vmatpush1.bf16.msra.mxu0 0
      %2159 = vmatprep.subr.bf16.mxu0 0
      %2160 = vmatpush1.bf16.msra.mxu0 0
      %2161 = vmatprep.subr.bf16.mxu0 0
      %2162 = vmatpush1.bf16.msra.mxu0 0
      %2163 = vmatprep.subr.bf16.mxu0 0
      %2164 = vmatpush1.bf16.msra.mxu0 0
      %2165 = vmatprep.subr.bf16.mxu0 0
      %2166 = vmatpush1.bf16.msra.mxu0 0
      %2167 = vmatprep.subr.bf16.mxu0 0
      %2168 = vmatpush1.bf16.msra.mxu0 0
      %2169 = vmatprep.subr.bf16.mxu0 0
      %2170 = vmatpush1.bf16.msra.mxu0 0
      %2171 = vmatprep.subr.bf16.mxu0 0
      %2172 = vmatpush1.bf16.msra.mxu0 0
      %2173 = vmatprep.subr.bf16.mxu0 0
      %2174 = vmatpush1.bf16.msra.mxu0 0
      %2175 = vmatprep.subr.bf16.mxu0 0
      %2176 = vmatpush1.bf16.msra.mxu0 0
      %2177 = vmatprep.subr.bf16.mxu0 0
      %2178 = vmatpush1.bf16.msra.mxu0 0
      %2179 = vmatprep.subr.bf16.mxu0 0
      %2180 = vmatpush1.bf16.msra.mxu0 0
      %2181 = vmatprep.mubr.bf16.mxu0 0
      %2182 = vmatmul.mubr.bf16.gmra.mrb[0].mxu0 %v2024
      %v2183 = vpop.f32.mrb[0].mxu0
      %v2184 = vadd.f32 0.0, %v2183
      %v2185 = vpop.f32.mrb[0].mxu0
      %v2186 = vadd.f32 0.0, %v2185
      %v2187 = vpop.f32.mrb[0].mxu0
      %v2188 = vpop.f32.mrb[0].mxu0
      %2189 = vdwg.mxu0
      %2190 = vmatprep.subr.bf16.mxu0 %v2000
      %2191 = vmatpush1.bf16.msra.mxu0 %v1999
      %2192 = vmatprep.subr.bf16.mxu0 0
      %2193 = vmatpush1.bf16.msra.mxu0 0
      %2194 = vmatprep.subr.bf16.mxu0 0
      %2195 = vmatpush1.bf16.msra.mxu0 0
      %2196 = vmatprep.subr.bf16.mxu0 0
      %2197 = vmatpush1.bf16.msra.mxu0 0
      %2198 = vmatprep.subr.bf16.mxu0 0
      %2199 = vmatpush1.bf16.msra.mxu0 0
      %2200 = vmatprep.subr.bf16.mxu0 0
      %2201 = vmatpush1.bf16.msra.mxu0 0
      %2202 = vmatprep.subr.bf16.mxu0 0
      %2203 = vmatpush1.bf16.msra.mxu0 0
      %2204 = vmatprep.subr.bf16.mxu0 0
      %2205 = vmatpush1.bf16.msra.mxu0 0
      %2206 = vmatprep.subr.bf16.mxu0 0
      %2207 = vmatpush1.bf16.msra.mxu0 0
      %2208 = vmatprep.subr.bf16.mxu0 0
      %2209 = vmatpush1.bf16.msra.mxu0 0
      %2210 = vmatprep.subr.bf16.mxu0 0
      %2211 = vmatpush1.bf16.msra.mxu0 0
      %2212 = vmatprep.subr.bf16.mxu0 0
      %2213 = vmatpush1.bf16.msra.mxu0 0
      %2214 = vmatprep.subr.bf16.mxu0 0
      %2215 = vmatpush1.bf16.msra.mxu0 0
      %2216 = vmatprep.subr.bf16.mxu0 0
      %2217 = vmatpush1.bf16.msra.mxu0 0
      %2218 = vmatprep.subr.bf16.mxu0 0
      %2219 = vmatpush1.bf16.msra.mxu0 0
      %2220 = vmatprep.subr.bf16.mxu0 0
      %2221 = vmatpush1.bf16.msra.mxu0 0
      %2222 = vmatprep.mubr.bf16.mxu0 0
      %2223 = vmatmul.mubr.bf16.gmra.mrb[0].mxu0 %v2024
      %v2224 = vpop.f32.mrb[0].mxu0
      %v2225 = vadd.f32 0.0, %v2224
      %v2226 = vpop.f32.mrb[0].mxu0
      %v2227 = vadd.f32 0.0, %v2226
      %v2228 = vpop.f32.mrb[0].mxu0
      %v2229 = vpop.f32.mrb[0].mxu0
      %2230 = vdwg.mxu0
      %2231 = vmatprep.subr.bf16.mxu0 %v2002
      %2232 = vmatpush1.bf16.msra.mxu0 %v2001
      %2233 = vmatprep.subr.bf16.mxu0 0
      %2234 = vmatpush1.bf16.msra.mxu0 0
      %2235 = vmatprep.subr.bf16.mxu0 0
      %2236 = vmatpush1.bf16.msra.mxu0 0
      %2237 = vmatprep.subr.bf16.mxu0 0
      %2238 = vmatpush1.bf16.msra.mxu0 0
      %2239 = vmatprep.subr.bf16.mxu0 0
      %2240 = vmatpush1.bf16.msra.mxu0 0
      %2241 = vmatprep.subr.bf16.mxu0 0
      %2242 = vmatpush1.bf16.msra.mxu0 0
      %2243 = vmatprep.subr.bf16.mxu0 0
      %2244 = vmatpush1.bf16.msra.mxu0 0
      %2245 = vmatprep.subr.bf16.mxu0 0
      %2246 = vmatpush1.bf16.msra.mxu0 0
      %2247 = vmatprep.subr.bf16.mxu0 0
      %2248 = vmatpush1.bf16.msra.mxu0 0
      %2249 = vmatprep.subr.bf16.mxu0 0
      %2250 = vmatpush1.bf16.msra.mxu0 0
      %2251 = vmatprep.subr.bf16.mxu0 0
      %2252 = vmatpush1.bf16.msra.mxu0 0
      %2253 = vmatprep.subr.bf16.mxu0 0
      %2254 = vmatpush1.bf16.msra.mxu0 0
      %2255 = vmatprep.subr.bf16.mxu0 0
      %2256 = vmatpush1.bf16.msra.mxu0 0
      %2257 = vmatprep.subr.bf16.mxu0 0
      %2258 = vmatpush1.bf16.msra.mxu0 0
      %2259 = vmatprep.subr.bf16.mxu0 0
      %2260 = vmatpush1.bf16.msra.mxu0 0
      %2261 = vmatprep.subr.bf16.mxu0 0
      %2262 = vmatpush1.bf16.msra.mxu0 0
      %2263 = vmatprep.mubr.bf16.mxu0 0
      %2264 = vmatmul.mubr.bf16.gmra.mrb[0].mxu0 %v2024
      %v2265 = vpop.f32.mrb[0].mxu0
      %v2266 = vadd.f32 0.0, %v2265
      %v2267 = vpop.f32.mrb[0].mxu0
      %v2268 = vadd.f32 0.0, %v2267
      %v2269 = vpop.f32.mrb[0].mxu0
      %v2270 = vpop.f32.mrb[0].mxu0
      %2271 = vdwg.mxu0
      %2272 = vmatprep.subr.bf16.mxu0 %v2004
      %2273 = vmatpush1.bf16.msra.mxu0 %v2003
      %2274 = vmatprep.subr.bf16.mxu0 0
      %2275 = vmatpush1.bf16.msra.mxu0 0
      %2276 = vmatprep.subr.bf16.mxu0 0
      %2277 = vmatpush1.bf16.msra.mxu0 0
      %2278 = vmatprep.subr.bf16.mxu0 0
      %2279 = vmatpush1.bf16.msra.mxu0 0
      %2280 = vmatprep.subr.bf16.mxu0 0
      %2281 = vmatpush1.bf16.msra.mxu0 0
      %2282 = vmatprep.subr.bf16.mxu0 0
      %2283 = vmatpush1.bf16.msra.mxu0 0
      %2284 = vmatprep.subr.bf16.mxu0 0
      %2285 = vmatpush1.bf16.msra.mxu0 0
      %2286 = vmatprep.subr.bf16.mxu0 0
      %2287 = vmatpush1.bf16.msra.mxu0 0
      %2288 = vmatprep.subr.bf16.mxu0 0
      %2289 = vmatpush1.bf16.msra.mxu0 0
      %2290 = vmatprep.subr.bf16.mxu0 0
      %2291 = vmatpush1.bf16.msra.mxu0 0
      %2292 = vmatprep.subr.bf16.mxu0 0
      %2293 = vmatpush1.bf16.msra.mxu0 0
      %2294 = vmatprep.subr.bf16.mxu0 0
      %2295 = vmatpush1.bf16.msra.mxu0 0
      %2296 = vmatprep.subr.bf16.mxu0 0
      %2297 = vmatpush1.bf16.msra.mxu0 0
      %2298 = vmatprep.subr.bf16.mxu0 0
      %2299 = vmatpush1.bf16.msra.mxu0 0
      %2300 = vmatprep.subr.bf16.mxu0 0
      %2301 = vmatpush1.bf16.msra.mxu0 0
      %2302 = vmatprep.subr.bf16.mxu0 0
      %2303 = vmatpush1.bf16.msra.mxu0 0
      %2304 = vmatprep.mubr.bf16.mxu0 0
      %2305 = vmatmul.mubr.bf16.gmra.mrb[0].mxu0 %v2024
      %v2306 = vpop.f32.mrb[0].mxu0
      %v2307 = vadd.f32 0.0, %v2306
      %v2308 = vpop.f32.mrb[0].mxu0
      %v2309 = vadd.f32 0.0, %v2308
      %v2310 = vpop.f32.mrb[0].mxu0
      %v2311 = vpop.f32.mrb[0].mxu0
      %2312 = vdwg.mxu0
      %2313 = vmatprep.subr.bf16.mxu0 %v2006
      %2314 = vmatpush1.bf16.msra.mxu0 %v2005
      %2315 = vmatprep.subr.bf16.mxu0 0
      %2316 = vmatpush1.bf16.msra.mxu0 0
      %2317 = vmatprep.subr.bf16.mxu0 0
      %2318 = vmatpush1.bf16.msra.mxu0 0
      %2319 = vmatprep.subr.bf16.mxu0 0
      %2320 = vmatpush1.bf16.msra.mxu0 0
      %2321 = vmatprep.subr.bf16.mxu0 0
      %2322 = vmatpush1.bf16.msra.mxu0 0
      %2323 = vmatprep.subr.bf16.mxu0 0
      %2324 = vmatpush1.bf16.msra.mxu0 0
      %2325 = vmatprep.subr.bf16.mxu0 0
      %2326 = vmatpush1.bf16.msra.mxu0 0
      %2327 = vmatprep.subr.bf16.mxu0 0
      %2328 = vmatpush1.bf16.msra.mxu0 0
      %2329 = vmatprep.subr.bf16.mxu0 0
      %2330 = vmatpush1.bf16.msra.mxu0 0
      %2331 = vmatprep.subr.bf16.mxu0 0
      %2332 = vmatpush1.bf16.msra.mxu0 0
      %2333 = vmatprep.subr.bf16.mxu0 0
      %2334 = vmatpush1.bf16.msra.mxu0 0
      %2335 = vmatprep.subr.bf16.mxu0 0
      %2336 = vmatpush1.bf16.msra.mxu0 0
      %2337 = vmatprep.subr.bf16.mxu0 0
      %2338 = vmatpush1.bf16.msra.mxu0 0
      %2339 = vmatprep.subr.bf16.mxu0 0
      %2340 = vmatpush1.bf16.msra.mxu0 0
      %2341 = vmatprep.subr.bf16.mxu0 0
      %2342 = vmatpush1.bf16.msra.mxu0 0
      %2343 = vmatprep.subr.bf16.mxu0 0
      %2344 = vmatpush1.bf16.msra.mxu0 0
      %2345 = vmatprep.mubr.bf16.mxu0 0
      %2346 = vmatmul.mubr.bf16.gmra.mrb[0].mxu0 %v2024
      %v2347 = vpop.f32.mrb[0].mxu0
      %v2348 = vadd.f32 0.0, %v2347
      %v2349 = vpop.f32.mrb[0].mxu0
      %v2350 = vadd.f32 0.0, %v2349
      %v2351 = vpop.f32.mrb[0].mxu0
      %v2352 = vpop.f32.mrb[0].mxu0
      %2353 = vdwg.mxu0
      %v2354 = vadd.f32 %v1908, %v2061
      %v2355 = vadd.f32 %v1909, %v2063
      %v2356 = vadd.f32 %v1910, %v2102
      %v2357 = vadd.f32 %v1911, %v2104
      %v2358 = vadd.f32 %v1912, %v2143
      %v2359 = vadd.f32 %v1913, %v2145
      %v2360 = vadd.f32 %v1914, %v2184
      %v2361 = vadd.f32 %v1915, %v2186
      %v2362 = vadd.f32 %v1916, %v2225
      %v2363 = vadd.f32 %v1917, %v2227
      %v2364 = vadd.f32 %v1918, %v2266
      %v2365 = vadd.f32 %v1919, %v2268
      %v2366 = vadd.f32 %v1920, %v2307
      %v2367 = vadd.f32 %v1921, %v2309
      %v2368 = vadd.f32 %v1922, %v2348
      %v2369 = vadd.f32 %v1923, %v2350
      %v2370 = vld [vmem:[%s165 + $0x5] sm:$0xff]
      %v2371 = vpack.c.bf16 %v2370, %v2370
      %s2372 = scalar_lea.vmem %s1, 640
      %v2373 = vld [vmem:[%s2372] sm:$0xff]
      %v2374 = vld [vmem:[%s2372 + $0x8] sm:$0xff]
      %v2375 = vld [vmem:[%s2372 + $0x10] sm:$0xff]
      %v2376 = vld [vmem:[%s2372 + $0x18] sm:$0xff]
      %v2377 = vld [vmem:[%s2372 + $0x20] sm:$0xff]
      %v2378 = vld [vmem:[%s2372 + $0x28] sm:$0xff]
      %v2379 = vld [vmem:[%s2372 + $0x30] sm:$0xff]
      %v2380 = vld [vmem:[%s2372 + $0x38] sm:$0xff]
      %v2381 = vld [vmem:[%s2372 + $0x40] sm:$0xff]
      %v2382 = vld [vmem:[%s2372 + $0x48] sm:$0xff]
      %v2383 = vld [vmem:[%s2372 + $0x50] sm:$0xff]
      %v2384 = vld [vmem:[%s2372 + $0x58] sm:$0xff]
      %v2385 = vld [vmem:[%s2372 + $0x60] sm:$0xff]
      %v2386 = vld [vmem:[%s2372 + $0x68] sm:$0xff]
      %v2387 = vld [vmem:[%s2372 + $0x70] sm:$0xff]
      %v2388 = vld [vmem:[%s2372 + $0x78] sm:$0xff]
      %v2405 = vunpack.c.l.b16 %v2373
      %v2406 = vunpack.c.h.b16 %v2373
      %v2407 = vunpack.c.l.b16 %v2374
      %v2408 = vunpack.c.h.b16 %v2374
      %v2409 = vunpack.c.l.b16 %v2375
      %v2410 = vunpack.c.h.b16 %v2375
      %v2411 = vunpack.c.l.b16 %v2376
      %v2412 = vunpack.c.h.b16 %v2376
      %v2413 = vunpack.c.l.b16 %v2377
      %v2414 = vunpack.c.h.b16 %v2377
      %v2415 = vunpack.c.l.b16 %v2378
      %v2416 = vunpack.c.h.b16 %v2378
      %v2417 = vunpack.c.l.b16 %v2379
      %v2418 = vunpack.c.h.b16 %v2379
      %v2419 = vunpack.c.l.b16 %v2380
      %v2420 = vunpack.c.h.b16 %v2380
      %v2421 = vunpack.c.l.b16 %v2381
      %v2422 = vunpack.c.h.b16 %v2381
      %v2423 = vunpack.c.l.b16 %v2382
      %v2424 = vunpack.c.h.b16 %v2382
      %v2425 = vunpack.c.l.b16 %v2383
      %v2426 = vunpack.c.h.b16 %v2383
      %v2427 = vunpack.c.l.b16 %v2384
      %v2428 = vunpack.c.h.b16 %v2384
      %v2429 = vunpack.c.l.b16 %v2385
      %v2430 = vunpack.c.h.b16 %v2385
      %v2431 = vunpack.c.l.b16 %v2386
      %v2432 = vunpack.c.h.b16 %v2386
      %v2433 = vunpack.c.l.b16 %v2387
      %v2434 = vunpack.c.h.b16 %v2387
      %v2435 = vunpack.c.l.b16 %v2388
      %v2436 = vunpack.c.h.b16 %v2388
      %v2437 = vpack.c.b16 %v2421, %v2405
      %v2438 = vpack.c.b16 %v2422, %v2406
      %v2439 = vpack.c.b16 %v2423, %v2407
      %v2440 = vpack.c.b16 %v2424, %v2408
      %v2441 = vpack.c.b16 %v2425, %v2409
      %v2442 = vpack.c.b16 %v2426, %v2410
      %v2443 = vpack.c.b16 %v2427, %v2411
      %v2444 = vpack.c.b16 %v2428, %v2412
      %v2445 = vpack.c.b16 %v2429, %v2413
      %v2446 = vpack.c.b16 %v2430, %v2414
      %v2447 = vpack.c.b16 %v2431, %v2415
      %v2448 = vpack.c.b16 %v2432, %v2416
      %v2449 = vpack.c.b16 %v2433, %v2417
      %v2450 = vpack.c.b16 %v2434, %v2418
      %v2451 = vpack.c.b16 %v2435, %v2419
      %v2452 = vpack.c.b16 %v2436, %v2420
      %v2470 = vsel %vm289, %v2371, 0
      %2472 = vmatprep.subr.bf16.mxu0 %v2438
      %2473 = vmatpush1.bf16.msra.mxu0 %v2437
      %2474 = vmatprep.subr.bf16.mxu0 0
      %2475 = vmatpush1.bf16.msra.mxu0 0
      %2476 = vmatprep.subr.bf16.mxu0 0
      %2477 = vmatpush1.bf16.msra.mxu0 0
      %2478 = vmatprep.subr.bf16.mxu0 0
      %2479 = vmatpush1.bf16.msra.mxu0 0
      %2480 = vmatprep.subr.bf16.mxu0 0
      %2481 = vmatpush1.bf16.msra.mxu0 0
      %2482 = vmatprep.subr.bf16.mxu0 0
      %2483 = vmatpush1.bf16.msra.mxu0 0
      %2484 = vmatprep.subr.bf16.mxu0 0
      %2485 = vmatpush1.bf16.msra.mxu0 0
      %2486 = vmatprep.subr.bf16.mxu0 0
      %2487 = vmatpush1.bf16.msra.mxu0 0
      %2488 = vmatprep.subr.bf16.mxu0 0
      %2489 = vmatpush1.bf16.msra.mxu0 0
      %2490 = vmatprep.subr.bf16.mxu0 0
      %2491 = vmatpush1.bf16.msra.mxu0 0
      %2492 = vmatprep.subr.bf16.mxu0 0
      %2493 = vmatpush1.bf16.msra.mxu0 0
      %2494 = vmatprep.subr.bf16.mxu0 0
      %2495 = vmatpush1.bf16.msra.mxu0 0
      %2496 = vmatprep.subr.bf16.mxu0 0
      %2497 = vmatpush1.bf16.msra.mxu0 0
      %2498 = vmatprep.subr.bf16.mxu0 0
      %2499 = vmatpush1.bf16.msra.mxu0 0
      %2500 = vmatprep.subr.bf16.mxu0 0
      %2501 = vmatpush1.bf16.msra.mxu0 0
      %2502 = vmatprep.subr.bf16.mxu0 0
      %2503 = vmatpush1.bf16.msra.mxu0 0
      %2504 = vmatprep.mubr.bf16.mxu0 0
      %2505 = vmatmul.mubr.bf16.gmra.mrb[0].mxu0 %v2470
      %v2506 = vpop.f32.mrb[0].mxu0
      %v2507 = vadd.f32 0.0, %v2506
      %v2508 = vpop.f32.mrb[0].mxu0
      %v2509 = vadd.f32 0.0, %v2508
      %v2510 = vpop.f32.mrb[0].mxu0
      %v2511 = vpop.f32.mrb[0].mxu0
      %2512 = vdwg.mxu0
      %2513 = vmatprep.subr.bf16.mxu0 %v2440
      %2514 = vmatpush1.bf16.msra.mxu0 %v2439
      %2515 = vmatprep.subr.bf16.mxu0 0
      %2516 = vmatpush1.bf16.msra.mxu0 0
      %2517 = vmatprep.subr.bf16.mxu0 0
      %2518 = vmatpush1.bf16.msra.mxu0 0
      %2519 = vmatprep.subr.bf16.mxu0 0
      %2520 = vmatpush1.bf16.msra.mxu0 0
      %2521 = vmatprep.subr.bf16.mxu0 0
      %2522 = vmatpush1.bf16.msra.mxu0 0
      %2523 = vmatprep.subr.bf16.mxu0 0
      %2524 = vmatpush1.bf16.msra.mxu0 0
      %2525 = vmatprep.subr.bf16.mxu0 0
      %2526 = vmatpush1.bf16.msra.mxu0 0
      %2527 = vmatprep.subr.bf16.mxu0 0
      %2528 = vmatpush1.bf16.msra.mxu0 0
      %2529 = vmatprep.subr.bf16.mxu0 0
      %2530 = vmatpush1.bf16.msra.mxu0 0
      %2531 = vmatprep.subr.bf16.mxu0 0
      %2532 = vmatpush1.bf16.msra.mxu0 0
      %2533 = vmatprep.subr.bf16.mxu0 0
      %2534 = vmatpush1.bf16.msra.mxu0 0
      %2535 = vmatprep.subr.bf16.mxu0 0
      %2536 = vmatpush1.bf16.msra.mxu0 0
      %2537 = vmatprep.subr.bf16.mxu0 0
      %2538 = vmatpush1.bf16.msra.mxu0 0
      %2539 = vmatprep.subr.bf16.mxu0 0
      %2540 = vmatpush1.bf16.msra.mxu0 0
      %2541 = vmatprep.subr.bf16.mxu0 0
      %2542 = vmatpush1.bf16.msra.mxu0 0
      %2543 = vmatprep.subr.bf16.mxu0 0
      %2544 = vmatpush1.bf16.msra.mxu0 0
      %2545 = vmatprep.mubr.bf16.mxu0 0
      %2546 = vmatmul.mubr.bf16.gmra.mrb[0].mxu0 %v2470
      %v2547 = vpop.f32.mrb[0].mxu0
      %v2548 = vadd.f32 0.0, %v2547
      %v2549 = vpop.f32.mrb[0].mxu0
      %v2550 = vadd.f32 0.0, %v2549
      %v2551 = vpop.f32.mrb[0].mxu0
      %v2552 = vpop.f32.mrb[0].mxu0
      %2553 = vdwg.mxu0
      %2554 = vmatprep.subr.bf16.mxu0 %v2442
      %2555 = vmatpush1.bf16.msra.mxu0 %v2441
      %2556 = vmatprep.subr.bf16.mxu0 0
      %2557 = vmatpush1.bf16.msra.mxu0 0
      %2558 = vmatprep.subr.bf16.mxu0 0
      %2559 = vmatpush1.bf16.msra.mxu0 0
      %2560 = vmatprep.subr.bf16.mxu0 0
      %2561 = vmatpush1.bf16.msra.mxu0 0
      %2562 = vmatprep.subr.bf16.mxu0 0
      %2563 = vmatpush1.bf16.msra.mxu0 0
      %2564 = vmatprep.subr.bf16.mxu0 0
      %2565 = vmatpush1.bf16.msra.mxu0 0
      %2566 = vmatprep.subr.bf16.mxu0 0
      %2567 = vmatpush1.bf16.msra.mxu0 0
      %2568 = vmatprep.subr.bf16.mxu0 0
      %2569 = vmatpush1.bf16.msra.mxu0 0
      %2570 = vmatprep.subr.bf16.mxu0 0
      %2571 = vmatpush1.bf16.msra.mxu0 0
      %2572 = vmatprep.subr.bf16.mxu0 0
      %2573 = vmatpush1.bf16.msra.mxu0 0
      %2574 = vmatprep.subr.bf16.mxu0 0
      %2575 = vmatpush1.bf16.msra.mxu0 0
      %2576 = vmatprep.subr.bf16.mxu0 0
      %2577 = vmatpush1.bf16.msra.mxu0 0
      %2578 = vmatprep.subr.bf16.mxu0 0
      %2579 = vmatpush1.bf16.msra.mxu0 0
      %2580 = vmatprep.subr.bf16.mxu0 0
      %2581 = vmatpush1.bf16.msra.mxu0 0
      %2582 = vmatprep.subr.bf16.mxu0 0
      %2583 = vmatpush1.bf16.msra.mxu0 0
      %2584 = vmatprep.subr.bf16.mxu0 0
      %2585 = vmatpush1.bf16.msra.mxu0 0
      %2586 = vmatprep.mubr.bf16.mxu0 0
      %2587 = vmatmul.mubr.bf16.gmra.mrb[0].mxu0 %v2470
      %v2588 = vpop.f32.mrb[0].mxu0
      %v2589 = vadd.f32 0.0, %v2588
      %v2590 = vpop.f32.mrb[0].mxu0
      %v2591 = vadd.f32 0.0, %v2590
      %v2592 = vpop.f32.mrb[0].mxu0
      %v2593 = vpop.f32.mrb[0].mxu0
      %2594 = vdwg.mxu0
      %2595 = vmatprep.subr.bf16.mxu0 %v2444
      %2596 = vmatpush1.bf16.msra.mxu0 %v2443
      %2597 = vmatprep.subr.bf16.mxu0 0
      %2598 = vmatpush1.bf16.msra.mxu0 0
      %2599 = vmatprep.subr.bf16.mxu0 0
      %2600 = vmatpush1.bf16.msra.mxu0 0
      %2601 = vmatprep.subr.bf16.mxu0 0
      %2602 = vmatpush1.bf16.msra.mxu0 0
      %2603 = vmatprep.subr.bf16.mxu0 0
      %2604 = vmatpush1.bf16.msra.mxu0 0
      %2605 = vmatprep.subr.bf16.mxu0 0
      %2606 = vmatpush1.bf16.msra.mxu0 0
      %2607 = vmatprep.subr.bf16.mxu0 0
      %2608 = vmatpush1.bf16.msra.mxu0 0
      %2609 = vmatprep.subr.bf16.mxu0 0
      %2610 = vmatpush1.bf16.msra.mxu0 0
      %2611 = vmatprep.subr.bf16.mxu0 0
      %2612 = vmatpush1.bf16.msra.mxu0 0
      %2613 = vmatprep.subr.bf16.mxu0 0
      %2614 = vmatpush1.bf16.msra.mxu0 0
      %2615 = vmatprep.subr.bf16.mxu0 0
      %2616 = vmatpush1.bf16.msra.mxu0 0
      %2617 = vmatprep.subr.bf16.mxu0 0
      %2618 = vmatpush1.bf16.msra.mxu0 0
      %2619 = vmatprep.subr.bf16.mxu0 0
      %2620 = vmatpush1.bf16.msra.mxu0 0
      %2621 = vmatprep.subr.bf16.mxu0 0
      %2622 = vmatpush1.bf16.msra.mxu0 0
      %2623 = vmatprep.subr.bf16.mxu0 0
      %2624 = vmatpush1.bf16.msra.mxu0 0
      %2625 = vmatprep.subr.bf16.mxu0 0
      %2626 = vmatpush1.bf16.msra.mxu0 0
      %2627 = vmatprep.mubr.bf16.mxu0 0
      %2628 = vmatmul.mubr.bf16.gmra.mrb[0].mxu0 %v2470
      %v2629 = vpop.f32.mrb[0].mxu0
      %v2630 = vadd.f32 0.0, %v2629
      %v2631 = vpop.f32.mrb[0].mxu0
      %v2632 = vadd.f32 0.0, %v2631
      %v2633 = vpop.f32.mrb[0].mxu0
      %v2634 = vpop.f32.mrb[0].mxu0
      %2635 = vdwg.mxu0
      %2636 = vmatprep.subr.bf16.mxu0 %v2446
      %2637 = vmatpush1.bf16.msra.mxu0 %v2445
      %2638 = vmatprep.subr.bf16.mxu0 0
      %2639 = vmatpush1.bf16.msra.mxu0 0
      %2640 = vmatprep.subr.bf16.mxu0 0
      %2641 = vmatpush1.bf16.msra.mxu0 0
      %2642 = vmatprep.subr.bf16.mxu0 0
      %2643 = vmatpush1.bf16.msra.mxu0 0
      %2644 = vmatprep.subr.bf16.mxu0 0
      %2645 = vmatpush1.bf16.msra.mxu0 0
      %2646 = vmatprep.subr.bf16.mxu0 0
      %2647 = vmatpush1.bf16.msra.mxu0 0
      %2648 = vmatprep.subr.bf16.mxu0 0
      %2649 = vmatpush1.bf16.msra.mxu0 0
      %2650 = vmatprep.subr.bf16.mxu0 0
      %2651 = vmatpush1.bf16.msra.mxu0 0
      %2652 = vmatprep.subr.bf16.mxu0 0
      %2653 = vmatpush1.bf16.msra.mxu0 0
      %2654 = vmatprep.subr.bf16.mxu0 0
      %2655 = vmatpush1.bf16.msra.mxu0 0
      %2656 = vmatprep.subr.bf16.mxu0 0
      %2657 = vmatpush1.bf16.msra.mxu0 0
      %2658 = vmatprep.subr.bf16.mxu0 0
      %2659 = vmatpush1.bf16.msra.mxu0 0
      %2660 = vmatprep.subr.bf16.mxu0 0
      %2661 = vmatpush1.bf16.msra.mxu0 0
      %2662 = vmatprep.subr.bf16.mxu0 0
      %2663 = vmatpush1.bf16.msra.mxu0 0
      %2664 = vmatprep.subr.bf16.mxu0 0
      %2665 = vmatpush1.bf16.msra.mxu0 0
      %2666 = vmatprep.subr.bf16.mxu0 0
      %2667 = vmatpush1.bf16.msra.mxu0 0
      %2668 = vmatprep.mubr.bf16.mxu0 0
      %2669 = vmatmul.mubr.bf16.gmra.mrb[0].mxu0 %v2470
      %v2670 = vpop.f32.mrb[0].mxu0
      %v2671 = vadd.f32 0.0, %v2670
      %v2672 = vpop.f32.mrb[0].mxu0
      %v2673 = vadd.f32 0.0, %v2672
      %v2674 = vpop.f32.mrb[0].mxu0
      %v2675 = vpop.f32.mrb[0].mxu0
      %2676 = vdwg.mxu0
      %2677 = vmatprep.subr.bf16.mxu0 %v2448
      %2678 = vmatpush1.bf16.msra.mxu0 %v2447
      %2679 = vmatprep.subr.bf16.mxu0 0
      %2680 = vmatpush1.bf16.msra.mxu0 0
      %2681 = vmatprep.subr.bf16.mxu0 0
      %2682 = vmatpush1.bf16.msra.mxu0 0
      %2683 = vmatprep.subr.bf16.mxu0 0
      %2684 = vmatpush1.bf16.msra.mxu0 0
      %2685 = vmatprep.subr.bf16.mxu0 0
      %2686 = vmatpush1.bf16.msra.mxu0 0
      %2687 = vmatprep.subr.bf16.mxu0 0
      %2688 = vmatpush1.bf16.msra.mxu0 0
      %2689 = vmatprep.subr.bf16.mxu0 0
      %2690 = vmatpush1.bf16.msra.mxu0 0
      %2691 = vmatprep.subr.bf16.mxu0 0
      %2692 = vmatpush1.bf16.msra.mxu0 0
      %2693 = vmatprep.subr.bf16.mxu0 0
      %2694 = vmatpush1.bf16.msra.mxu0 0
      %2695 = vmatprep.subr.bf16.mxu0 0
      %2696 = vmatpush1.bf16.msra.mxu0 0
      %2697 = vmatprep.subr.bf16.mxu0 0
      %2698 = vmatpush1.bf16.msra.mxu0 0
      %2699 = vmatprep.subr.bf16.mxu0 0
      %2700 = vmatpush1.bf16.msra.mxu0 0
      %2701 = vmatprep.subr.bf16.mxu0 0
      %2702 = vmatpush1.bf16.msra.mxu0 0
      %2703 = vmatprep.subr.bf16.mxu0 0
      %2704 = vmatpush1.bf16.msra.mxu0 0
      %2705 = vmatprep.subr.bf16.mxu0 0
      %2706 = vmatpush1.bf16.msra.mxu0 0
      %2707 = vmatprep.subr.bf16.mxu0 0
      %2708 = vmatpush1.bf16.msra.mxu0 0
      %2709 = vmatprep.mubr.bf16.mxu0 0
      %2710 = vmatmul.mubr.bf16.gmra.mrb[0].mxu0 %v2470
      %v2711 = vpop.f32.mrb[0].mxu0
      %v2712 = vadd.f32 0.0, %v2711
      %v2713 = vpop.f32.mrb[0].mxu0
      %v2714 = vadd.f32 0.0, %v2713
      %v2715 = vpop.f32.mrb[0].mxu0
      %v2716 = vpop.f32.mrb[0].mxu0
      %2717 = vdwg.mxu0
      %2718 = vmatprep.subr.bf16.mxu0 %v2450
      %2719 = vmatpush1.bf16.msra.mxu0 %v2449
      %2720 = vmatprep.subr.bf16.mxu0 0
      %2721 = vmatpush1.bf16.msra.mxu0 0
      %2722 = vmatprep.subr.bf16.mxu0 0
      %2723 = vmatpush1.bf16.msra.mxu0 0
      %2724 = vmatprep.subr.bf16.mxu0 0
      %2725 = vmatpush1.bf16.msra.mxu0 0
      %2726 = vmatprep.subr.bf16.mxu0 0
      %2727 = vmatpush1.bf16.msra.mxu0 0
      %2728 = vmatprep.subr.bf16.mxu0 0
      %2729 = vmatpush1.bf16.msra.mxu0 0
      %2730 = vmatprep.subr.bf16.mxu0 0
      %2731 = vmatpush1.bf16.msra.mxu0 0
      %2732 = vmatprep.subr.bf16.mxu0 0
      %2733 = vmatpush1.bf16.msra.mxu0 0
      %2734 = vmatprep.subr.bf16.mxu0 0
      %2735 = vmatpush1.bf16.msra.mxu0 0
      %2736 = vmatprep.subr.bf16.mxu0 0
      %2737 = vmatpush1.bf16.msra.mxu0 0
      %2738 = vmatprep.subr.bf16.mxu0 0
      %2739 = vmatpush1.bf16.msra.mxu0 0
      %2740 = vmatprep.subr.bf16.mxu0 0
      %2741 = vmatpush1.bf16.msra.mxu0 0
      %2742 = vmatprep.subr.bf16.mxu0 0
      %2743 = vmatpush1.bf16.msra.mxu0 0
      %2744 = vmatprep.subr.bf16.mxu0 0
      %2745 = vmatpush1.bf16.msra.mxu0 0
      %2746 = vmatprep.subr.bf16.mxu0 0
      %2747 = vmatpush1.bf16.msra.mxu0 0
      %2748 = vmatprep.subr.bf16.mxu0 0
      %2749 = vmatpush1.bf16.msra.mxu0 0
      %2750 = vmatprep.mubr.bf16.mxu0 0
      %2751 = vmatmul.mubr.bf16.gmra.mrb[0].mxu0 %v2470
      %v2752 = vpop.f32.mrb[0].mxu0
      %v2753 = vadd.f32 0.0, %v2752
      %v2754 = vpop.f32.mrb[0].mxu0
      %v2755 = vadd.f32 0.0, %v2754
      %v2756 = vpop.f32.mrb[0].mxu0
      %v2757 = vpop.f32.mrb[0].mxu0
      %2758 = vdwg.mxu0
      %2759 = vmatprep.subr.bf16.mxu0 %v2452
      %2760 = vmatpush1.bf16.msra.mxu0 %v2451
      %2761 = vmatprep.subr.bf16.mxu0 0
      %2762 = vmatpush1.bf16.msra.mxu0 0
      %2763 = vmatprep.subr.bf16.mxu0 0
      %2764 = vmatpush1.bf16.msra.mxu0 0
      %2765 = vmatprep.subr.bf16.mxu0 0
      %2766 = vmatpush1.bf16.msra.mxu0 0
      %2767 = vmatprep.subr.bf16.mxu0 0
      %2768 = vmatpush1.bf16.msra.mxu0 0
      %2769 = vmatprep.subr.bf16.mxu0 0
      %2770 = vmatpush1.bf16.msra.mxu0 0
      %2771 = vmatprep.subr.bf16.mxu0 0
      %2772 = vmatpush1.bf16.msra.mxu0 0
      %2773 = vmatprep.subr.bf16.mxu0 0
      %2774 = vmatpush1.bf16.msra.mxu0 0
      %2775 = vmatprep.subr.bf16.mxu0 0
      %2776 = vmatpush1.bf16.msra.mxu0 0
      %2777 = vmatprep.subr.bf16.mxu0 0
      %2778 = vmatpush1.bf16.msra.mxu0 0
      %2779 = vmatprep.subr.bf16.mxu0 0
      %2780 = vmatpush1.bf16.msra.mxu0 0
      %2781 = vmatprep.subr.bf16.mxu0 0
      %2782 = vmatpush1.bf16.msra.mxu0 0
      %2783 = vmatprep.subr.bf16.mxu0 0
      %2784 = vmatpush1.bf16.msra.mxu0 0
      %2785 = vmatprep.subr.bf16.mxu0 0
      %2786 = vmatpush1.bf16.msra.mxu0 0
      %2787 = vmatprep.subr.bf16.mxu0 0
      %2788 = vmatpush1.bf16.msra.mxu0 0
      %2789 = vmatprep.subr.bf16.mxu0 0
      %2790 = vmatpush1.bf16.msra.mxu0 0
      %2791 = vmatprep.mubr.bf16.mxu0 0
      %2792 = vmatmul.mubr.bf16.gmra.mrb[0].mxu0 %v2470
      %v2793 = vpop.f32.mrb[0].mxu0
      %v2794 = vadd.f32 0.0, %v2793
      %v2795 = vpop.f32.mrb[0].mxu0
      %v2796 = vadd.f32 0.0, %v2795
      %v2797 = vpop.f32.mrb[0].mxu0
      %v2798 = vpop.f32.mrb[0].mxu0
      %2799 = vdwg.mxu0
      %v2800 = vadd.f32 %v2354, %v2507
      %v2801 = vadd.f32 %v2355, %v2509
      %v2802 = vadd.f32 %v2356, %v2548
      %v2803 = vadd.f32 %v2357, %v2550
      %v2804 = vadd.f32 %v2358, %v2589
      %v2805 = vadd.f32 %v2359, %v2591
      %v2806 = vadd.f32 %v2360, %v2630
      %v2807 = vadd.f32 %v2361, %v2632
      %v2808 = vadd.f32 %v2362, %v2671
      %v2809 = vadd.f32 %v2363, %v2673
      %v2810 = vadd.f32 %v2364, %v2712
      %v2811 = vadd.f32 %v2365, %v2714
      %v2812 = vadd.f32 %v2366, %v2753
      %v2813 = vadd.f32 %v2367, %v2755
      %v2814 = vadd.f32 %v2368, %v2794
      %v2815 = vadd.f32 %v2369, %v2796
      %v2816 = vld [vmem:[%s165 + $0x6] sm:$0xff]
      %v2817 = vpack.c.bf16 %v2816, %v2816
      %s2818 = scalar_lea.vmem %s1, 768
      %v2819 = vld [vmem:[%s2818] sm:$0xff]
      %v2820 = vld [vmem:[%s2818 + $0x8] sm:$0xff]
      %v2821 = vld [vmem:[%s2818 + $0x10] sm:$0xff]
      %v2822 = vld [vmem:[%s2818 + $0x18] sm:$0xff]
      %v2823 = vld [vmem:[%s2818 + $0x20] sm:$0xff]
      %v2824 = vld [vmem:[%s2818 + $0x28] sm:$0xff]
      %v2825 = vld [vmem:[%s2818 + $0x30] sm:$0xff]
      %v2826 = vld [vmem:[%s2818 + $0x38] sm:$0xff]
      %v2827 = vld [vmem:[%s2818 + $0x40] sm:$0xff]
      %v2828 = vld [vmem:[%s2818 + $0x48] sm:$0xff]
      %v2829 = vld [vmem:[%s2818 + $0x50] sm:$0xff]
      %v2830 = vld [vmem:[%s2818 + $0x58] sm:$0xff]
      %v2831 = vld [vmem:[%s2818 + $0x60] sm:$0xff]
      %v2832 = vld [vmem:[%s2818 + $0x68] sm:$0xff]
      %v2833 = vld [vmem:[%s2818 + $0x70] sm:$0xff]
      %v2834 = vld [vmem:[%s2818 + $0x78] sm:$0xff]
      %v2851 = vunpack.c.l.b16 %v2819
      %v2852 = vunpack.c.h.b16 %v2819
      %v2853 = vunpack.c.l.b16 %v2820
      %v2854 = vunpack.c.h.b16 %v2820
      %v2855 = vunpack.c.l.b16 %v2821
      %v2856 = vunpack.c.h.b16 %v2821
      %v2857 = vunpack.c.l.b16 %v2822
      %v2858 = vunpack.c.h.b16 %v2822
      %v2859 = vunpack.c.l.b16 %v2823
      %v2860 = vunpack.c.h.b16 %v2823
      %v2861 = vunpack.c.l.b16 %v2824
      %v2862 = vunpack.c.h.b16 %v2824
      %v2863 = vunpack.c.l.b16 %v2825
      %v2864 = vunpack.c.h.b16 %v2825
      %v2865 = vunpack.c.l.b16 %v2826
      %v2866 = vunpack.c.h.b16 %v2826
      %v2867 = vunpack.c.l.b16 %v2827
      %v2868 = vunpack.c.h.b16 %v2827
      %v2869 = vunpack.c.l.b16 %v2828
      %v2870 = vunpack.c.h.b16 %v2828
      %v2871 = vunpack.c.l.b16 %v2829
      %v2872 = vunpack.c.h.b16 %v2829
      %v2873 = vunpack.c.l.b16 %v2830
      %v2874 = vunpack.c.h.b16 %v2830
      %v2875 = vunpack.c.l.b16 %v2831
      %v2876 = vunpack.c.h.b16 %v2831
      %v2877 = vunpack.c.l.b16 %v2832
      %v2878 = vunpack.c.h.b16 %v2832
      %v2879 = vunpack.c.l.b16 %v2833
      %v2880 = vunpack.c.h.b16 %v2833
      %v2881 = vunpack.c.l.b16 %v2834
      %v2882 = vunpack.c.h.b16 %v2834
      %v2883 = vpack.c.b16 %v2867, %v2851
      %v2884 = vpack.c.b16 %v2868, %v2852
      %v2885 = vpack.c.b16 %v2869, %v2853
      %v2886 = vpack.c.b16 %v2870, %v2854
      %v2887 = vpack.c.b16 %v2871, %v2855
      %v2888 = vpack.c.b16 %v2872, %v2856
      %v2889 = vpack.c.b16 %v2873, %v2857
      %v2890 = vpack.c.b16 %v2874, %v2858
      %v2891 = vpack.c.b16 %v2875, %v2859
      %v2892 = vpack.c.b16 %v2876, %v2860
      %v2893 = vpack.c.b16 %v2877, %v2861
      %v2894 = vpack.c.b16 %v2878, %v2862
      %v2895 = vpack.c.b16 %v2879, %v2863
      %v2896 = vpack.c.b16 %v2880, %v2864
      %v2897 = vpack.c.b16 %v2881, %v2865
      %v2898 = vpack.c.b16 %v2882, %v2866
      %v2916 = vsel %vm289, %v2817, 0
      %2918 = vmatprep.subr.bf16.mxu0 %v2884
      %2919 = vmatpush1.bf16.msra.mxu0 %v2883
      %2920 = vmatprep.subr.bf16.mxu0 0
      %2921 = vmatpush1.bf16.msra.mxu0 0
      %2922 = vmatprep.subr.bf16.mxu0 0
      %2923 = vmatpush1.bf16.msra.mxu0 0
      %2924 = vmatprep.subr.bf16.mxu0 0
      %2925 = vmatpush1.bf16.msra.mxu0 0
      %2926 = vmatprep.subr.bf16.mxu0 0
      %2927 = vmatpush1.bf16.msra.mxu0 0
      %2928 = vmatprep.subr.bf16.mxu0 0
      %2929 = vmatpush1.bf16.msra.mxu0 0
      %2930 = vmatprep.subr.bf16.mxu0 0
      %2931 = vmatpush1.bf16.msra.mxu0 0
      %2932 = vmatprep.subr.bf16.mxu0 0
      %2933 = vmatpush1.bf16.msra.mxu0 0
      %2934 = vmatprep.subr.bf16.mxu0 0
      %2935 = vmatpush1.bf16.msra.mxu0 0
      %2936 = vmatprep.subr.bf16.mxu0 0
      %2937 = vmatpush1.bf16.msra.mxu0 0
      %2938 = vmatprep.subr.bf16.mxu0 0
      %2939 = vmatpush1.bf16.msra.mxu0 0
      %2940 = vmatprep.subr.bf16.mxu0 0
      %2941 = vmatpush1.bf16.msra.mxu0 0
      %2942 = vmatprep.subr.bf16.mxu0 0
      %2943 = vmatpush1.bf16.msra.mxu0 0
      %2944 = vmatprep.subr.bf16.mxu0 0
      %2945 = vmatpush1.bf16.msra.mxu0 0
      %2946 = vmatprep.subr.bf16.mxu0 0
      %2947 = vmatpush1.bf16.msra.mxu0 0
      %2948 = vmatprep.subr.bf16.mxu0 0
      %2949 = vmatpush1.bf16.msra.mxu0 0
      %2950 = vmatprep.mubr.bf16.mxu0 0
      %2951 = vmatmul.mubr.bf16.gmra.mrb[0].mxu0 %v2916
      %v2952 = vpop.f32.mrb[0].mxu0
      %v2953 = vadd.f32 0.0, %v2952
      %v2954 = vpop.f32.mrb[0].mxu0
      %v2955 = vadd.f32 0.0, %v2954
      %v2956 = vpop.f32.mrb[0].mxu0
      %v2957 = vpop.f32.mrb[0].mxu0
      %2958 = vdwg.mxu0
      %2959 = vmatprep.subr.bf16.mxu0 %v2886
      %2960 = vmatpush1.bf16.msra.mxu0 %v2885
      %2961 = vmatprep.subr.bf16.mxu0 0
      %2962 = vmatpush1.bf16.msra.mxu0 0
      %2963 = vmatprep.subr.bf16.mxu0 0
      %2964 = vmatpush1.bf16.msra.mxu0 0
      %2965 = vmatprep.subr.bf16.mxu0 0
      %2966 = vmatpush1.bf16.msra.mxu0 0
      %2967 = vmatprep.subr.bf16.mxu0 0
      %2968 = vmatpush1.bf16.msra.mxu0 0
      %2969 = vmatprep.subr.bf16.mxu0 0
      %2970 = vmatpush1.bf16.msra.mxu0 0
      %2971 = vmatprep.subr.bf16.mxu0 0
      %2972 = vmatpush1.bf16.msra.mxu0 0
      %2973 = vmatprep.subr.bf16.mxu0 0
      %2974 = vmatpush1.bf16.msra.mxu0 0
      %2975 = vmatprep.subr.bf16.mxu0 0
      %2976 = vmatpush1.bf16.msra.mxu0 0
      %2977 = vmatprep.subr.bf16.mxu0 0
      %2978 = vmatpush1.bf16.msra.mxu0 0
      %2979 = vmatprep.subr.bf16.mxu0 0
      %2980 = vmatpush1.bf16.msra.mxu0 0
      %2981 = vmatprep.subr.bf16.mxu0 0
      %2982 = vmatpush1.bf16.msra.mxu0 0
      %2983 = vmatprep.subr.bf16.mxu0 0
      %2984 = vmatpush1.bf16.msra.mxu0 0
      %2985 = vmatprep.subr.bf16.mxu0 0
      %2986 = vmatpush1.bf16.msra.mxu0 0
      %2987 = vmatprep.subr.bf16.mxu0 0
      %2988 = vmatpush1.bf16.msra.mxu0 0
      %2989 = vmatprep.subr.bf16.mxu0 0
      %2990 = vmatpush1.bf16.msra.mxu0 0
      %2991 = vmatprep.mubr.bf16.mxu0 0
      %2992 = vmatmul.mubr.bf16.gmra.mrb[0].mxu0 %v2916
      %v2993 = vpop.f32.mrb[0].mxu0
      %v2994 = vadd.f32 0.0, %v2993
      %v2995 = vpop.f32.mrb[0].mxu0
      %v2996 = vadd.f32 0.0, %v2995
      %v2997 = vpop.f32.mrb[0].mxu0
      %v2998 = vpop.f32.mrb[0].mxu0
      %2999 = vdwg.mxu0
      %3000 = vmatprep.subr.bf16.mxu0 %v2888
      %3001 = vmatpush1.bf16.msra.mxu0 %v2887
      %3002 = vmatprep.subr.bf16.mxu0 0
      %3003 = vmatpush1.bf16.msra.mxu0 0
      %3004 = vmatprep.subr.bf16.mxu0 0
      %3005 = vmatpush1.bf16.msra.mxu0 0
      %3006 = vmatprep.subr.bf16.mxu0 0
      %3007 = vmatpush1.bf16.msra.mxu0 0
      %3008 = vmatprep.subr.bf16.mxu0 0
      %3009 = vmatpush1.bf16.msra.mxu0 0
      %3010 = vmatprep.subr.bf16.mxu0 0
      %3011 = vmatpush1.bf16.msra.mxu0 0
      %3012 = vmatprep.subr.bf16.mxu0 0
      %3013 = vmatpush1.bf16.msra.mxu0 0
      %3014 = vmatprep.subr.bf16.mxu0 0
      %3015 = vmatpush1.bf16.msra.mxu0 0
      %3016 = vmatprep.subr.bf16.mxu0 0
      %3017 = vmatpush1.bf16.msra.mxu0 0
      %3018 = vmatprep.subr.bf16.mxu0 0
      %3019 = vmatpush1.bf16.msra.mxu0 0
      %3020 = vmatprep.subr.bf16.mxu0 0
      %3021 = vmatpush1.bf16.msra.mxu0 0
      %3022 = vmatprep.subr.bf16.mxu0 0
      %3023 = vmatpush1.bf16.msra.mxu0 0
      %3024 = vmatprep.subr.bf16.mxu0 0
      %3025 = vmatpush1.bf16.msra.mxu0 0
      %3026 = vmatprep.subr.bf16.mxu0 0
      %3027 = vmatpush1.bf16.msra.mxu0 0
      %3028 = vmatprep.subr.bf16.mxu0 0
      %3029 = vmatpush1.bf16.msra.mxu0 0
      %3030 = vmatprep.subr.bf16.mxu0 0
      %3031 = vmatpush1.bf16.msra.mxu0 0
      %3032 = vmatprep.mubr.bf16.mxu0 0
      %3033 = vmatmul.mubr.bf16.gmra.mrb[0].mxu0 %v2916
      %v3034 = vpop.f32.mrb[0].mxu0
      %v3035 = vadd.f32 0.0, %v3034
      %v3036 = vpop.f32.mrb[0].mxu0
      %v3037 = vadd.f32 0.0, %v3036
      %v3038 = vpop.f32.mrb[0].mxu0
      %v3039 = vpop.f32.mrb[0].mxu0
      %3040 = vdwg.mxu0
      %3041 = vmatprep.subr.bf16.mxu0 %v2890
      %3042 = vmatpush1.bf16.msra.mxu0 %v2889
      %3043 = vmatprep.subr.bf16.mxu0 0
      %3044 = vmatpush1.bf16.msra.mxu0 0
      %3045 = vmatprep.subr.bf16.mxu0 0
      %3046 = vmatpush1.bf16.msra.mxu0 0
      %3047 = vmatprep.subr.bf16.mxu0 0
      %3048 = vmatpush1.bf16.msra.mxu0 0
      %3049 = vmatprep.subr.bf16.mxu0 0
      %3050 = vmatpush1.bf16.msra.mxu0 0
      %3051 = vmatprep.subr.bf16.mxu0 0
      %3052 = vmatpush1.bf16.msra.mxu0 0
      %3053 = vmatprep.subr.bf16.mxu0 0
      %3054 = vmatpush1.bf16.msra.mxu0 0
      %3055 = vmatprep.subr.bf16.mxu0 0
      %3056 = vmatpush1.bf16.msra.mxu0 0
      %3057 = vmatprep.subr.bf16.mxu0 0
      %3058 = vmatpush1.bf16.msra.mxu0 0
      %3059 = vmatprep.subr.bf16.mxu0 0
      %3060 = vmatpush1.bf16.msra.mxu0 0
      %3061 = vmatprep.subr.bf16.mxu0 0
      %3062 = vmatpush1.bf16.msra.mxu0 0
      %3063 = vmatprep.subr.bf16.mxu0 0
      %3064 = vmatpush1.bf16.msra.mxu0 0
      %3065 = vmatprep.subr.bf16.mxu0 0
      %3066 = vmatpush1.bf16.msra.mxu0 0
      %3067 = vmatprep.subr.bf16.mxu0 0
      %3068 = vmatpush1.bf16.msra.mxu0 0
      %3069 = vmatprep.subr.bf16.mxu0 0
      %3070 = vmatpush1.bf16.msra.mxu0 0
      %3071 = vmatprep.subr.bf16.mxu0 0
      %3072 = vmatpush1.bf16.msra.mxu0 0
      %3073 = vmatprep.mubr.bf16.mxu0 0
      %3074 = vmatmul.mubr.bf16.gmra.mrb[0].mxu0 %v2916
      %v3075 = vpop.f32.mrb[0].mxu0
      %v3076 = vadd.f32 0.0, %v3075
      %v3077 = vpop.f32.mrb[0].mxu0
      %v3078 = vadd.f32 0.0, %v3077
      %v3079 = vpop.f32.mrb[0].mxu0
      %v3080 = vpop.f32.mrb[0].mxu0
      %3081 = vdwg.mxu0
      %3082 = vmatprep.subr.bf16.mxu0 %v2892
      %3083 = vmatpush1.bf16.msra.mxu0 %v2891
      %3084 = vmatprep.subr.bf16.mxu0 0
      %3085 = vmatpush1.bf16.msra.mxu0 0
      %3086 = vmatprep.subr.bf16.mxu0 0
      %3087 = vmatpush1.bf16.msra.mxu0 0
      %3088 = vmatprep.subr.bf16.mxu0 0
      %3089 = vmatpush1.bf16.msra.mxu0 0
      %3090 = vmatprep.subr.bf16.mxu0 0
      %3091 = vmatpush1.bf16.msra.mxu0 0
      %3092 = vmatprep.subr.bf16.mxu0 0
      %3093 = vmatpush1.bf16.msra.mxu0 0
      %3094 = vmatprep.subr.bf16.mxu0 0
      %3095 = vmatpush1.bf16.msra.mxu0 0
      %3096 = vmatprep.subr.bf16.mxu0 0
      %3097 = vmatpush1.bf16.msra.mxu0 0
      %3098 = vmatprep.subr.bf16.mxu0 0
      %3099 = vmatpush1.bf16.msra.mxu0 0
      %3100 = vmatprep.subr.bf16.mxu0 0
      %3101 = vmatpush1.bf16.msra.mxu0 0
      %3102 = vmatprep.subr.bf16.mxu0 0
      %3103 = vmatpush1.bf16.msra.mxu0 0
      %3104 = vmatprep.subr.bf16.mxu0 0
      %3105 = vmatpush1.bf16.msra.mxu0 0
      %3106 = vmatprep.subr.bf16.mxu0 0
      %3107 = vmatpush1.bf16.msra.mxu0 0
      %3108 = vmatprep.subr.bf16.mxu0 0
      %3109 = vmatpush1.bf16.msra.mxu0 0
      %3110 = vmatprep.subr.bf16.mxu0 0
      %3111 = vmatpush1.bf16.msra.mxu0 0
      %3112 = vmatprep.subr.bf16.mxu0 0
      %3113 = vmatpush1.bf16.msra.mxu0 0
      %3114 = vmatprep.mubr.bf16.mxu0 0
      %3115 = vmatmul.mubr.bf16.gmra.mrb[0].mxu0 %v2916
      %v3116 = vpop.f32.mrb[0].mxu0
      %v3117 = vadd.f32 0.0, %v3116
      %v3118 = vpop.f32.mrb[0].mxu0
      %v3119 = vadd.f32 0.0, %v3118
      %v3120 = vpop.f32.mrb[0].mxu0
      %v3121 = vpop.f32.mrb[0].mxu0
      %3122 = vdwg.mxu0
      %3123 = vmatprep.subr.bf16.mxu0 %v2894
      %3124 = vmatpush1.bf16.msra.mxu0 %v2893
      %3125 = vmatprep.subr.bf16.mxu0 0
      %3126 = vmatpush1.bf16.msra.mxu0 0
      %3127 = vmatprep.subr.bf16.mxu0 0
      %3128 = vmatpush1.bf16.msra.mxu0 0
      %3129 = vmatprep.subr.bf16.mxu0 0
      %3130 = vmatpush1.bf16.msra.mxu0 0
      %3131 = vmatprep.subr.bf16.mxu0 0
      %3132 = vmatpush1.bf16.msra.mxu0 0
      %3133 = vmatprep.subr.bf16.mxu0 0
      %3134 = vmatpush1.bf16.msra.mxu0 0
      %3135 = vmatprep.subr.bf16.mxu0 0
      %3136 = vmatpush1.bf16.msra.mxu0 0
      %3137 = vmatprep.subr.bf16.mxu0 0
      %3138 = vmatpush1.bf16.msra.mxu0 0
      %3139 = vmatprep.subr.bf16.mxu0 0
      %3140 = vmatpush1.bf16.msra.mxu0 0
      %3141 = vmatprep.subr.bf16.mxu0 0
      %3142 = vmatpush1.bf16.msra.mxu0 0
      %3143 = vmatprep.subr.bf16.mxu0 0
      %3144 = vmatpush1.bf16.msra.mxu0 0
      %3145 = vmatprep.subr.bf16.mxu0 0
      %3146 = vmatpush1.bf16.msra.mxu0 0
      %3147 = vmatprep.subr.bf16.mxu0 0
      %3148 = vmatpush1.bf16.msra.mxu0 0
      %3149 = vmatprep.subr.bf16.mxu0 0
      %3150 = vmatpush1.bf16.msra.mxu0 0
      %3151 = vmatprep.subr.bf16.mxu0 0
      %3152 = vmatpush1.bf16.msra.mxu0 0
      %3153 = vmatprep.subr.bf16.mxu0 0
      %3154 = vmatpush1.bf16.msra.mxu0 0
      %3155 = vmatprep.mubr.bf16.mxu0 0
      %3156 = vmatmul.mubr.bf16.gmra.mrb[0].mxu0 %v2916
      %v3157 = vpop.f32.mrb[0].mxu0
      %v3158 = vadd.f32 0.0, %v3157
      %v3159 = vpop.f32.mrb[0].mxu0
      %v3160 = vadd.f32 0.0, %v3159
      %v3161 = vpop.f32.mrb[0].mxu0
      %v3162 = vpop.f32.mrb[0].mxu0
      %3163 = vdwg.mxu0
      %3164 = vmatprep.subr.bf16.mxu0 %v2896
      %3165 = vmatpush1.bf16.msra.mxu0 %v2895
      %3166 = vmatprep.subr.bf16.mxu0 0
      %3167 = vmatpush1.bf16.msra.mxu0 0
      %3168 = vmatprep.subr.bf16.mxu0 0
      %3169 = vmatpush1.bf16.msra.mxu0 0
      %3170 = vmatprep.subr.bf16.mxu0 0
      %3171 = vmatpush1.bf16.msra.mxu0 0
      %3172 = vmatprep.subr.bf16.mxu0 0
      %3173 = vmatpush1.bf16.msra.mxu0 0
      %3174 = vmatprep.subr.bf16.mxu0 0
      %3175 = vmatpush1.bf16.msra.mxu0 0
      %3176 = vmatprep.subr.bf16.mxu0 0
      %3177 = vmatpush1.bf16.msra.mxu0 0
      %3178 = vmatprep.subr.bf16.mxu0 0
      %3179 = vmatpush1.bf16.msra.mxu0 0
      %3180 = vmatprep.subr.bf16.mxu0 0
      %3181 = vmatpush1.bf16.msra.mxu0 0
      %3182 = vmatprep.subr.bf16.mxu0 0
      %3183 = vmatpush1.bf16.msra.mxu0 0
      %3184 = vmatprep.subr.bf16.mxu0 0
      %3185 = vmatpush1.bf16.msra.mxu0 0
      %3186 = vmatprep.subr.bf16.mxu0 0
      %3187 = vmatpush1.bf16.msra.mxu0 0
      %3188 = vmatprep.subr.bf16.mxu0 0
      %3189 = vmatpush1.bf16.msra.mxu0 0
      %3190 = vmatprep.subr.bf16.mxu0 0
      %3191 = vmatpush1.bf16.msra.mxu0 0
      %3192 = vmatprep.subr.bf16.mxu0 0
      %3193 = vmatpush1.bf16.msra.mxu0 0
      %3194 = vmatprep.subr.bf16.mxu0 0
      %3195 = vmatpush1.bf16.msra.mxu0 0
      %3196 = vmatprep.mubr.bf16.mxu0 0
      %3197 = vmatmul.mubr.bf16.gmra.mrb[0].mxu0 %v2916
      %v3198 = vpop.f32.mrb[0].mxu0
      %v3199 = vadd.f32 0.0, %v3198
      %v3200 = vpop.f32.mrb[0].mxu0
      %v3201 = vadd.f32 0.0, %v3200
      %v3202 = vpop.f32.mrb[0].mxu0
      %v3203 = vpop.f32.mrb[0].mxu0
      %3204 = vdwg.mxu0
      %3205 = vmatprep.subr.bf16.mxu0 %v2898
      %3206 = vmatpush1.bf16.msra.mxu0 %v2897
      %3207 = vmatprep.subr.bf16.mxu0 0
      %3208 = vmatpush1.bf16.msra.mxu0 0
      %3209 = vmatprep.subr.bf16.mxu0 0
      %3210 = vmatpush1.bf16.msra.mxu0 0
      %3211 = vmatprep.subr.bf16.mxu0 0
      %3212 = vmatpush1.bf16.msra.mxu0 0
      %3213 = vmatprep.subr.bf16.mxu0 0
      %3214 = vmatpush1.bf16.msra.mxu0 0
      %3215 = vmatprep.subr.bf16.mxu0 0
      %3216 = vmatpush1.bf16.msra.mxu0 0
      %3217 = vmatprep.subr.bf16.mxu0 0
      %3218 = vmatpush1.bf16.msra.mxu0 0
      %3219 = vmatprep.subr.bf16.mxu0 0
      %3220 = vmatpush1.bf16.msra.mxu0 0
      %3221 = vmatprep.subr.bf16.mxu0 0
      %3222 = vmatpush1.bf16.msra.mxu0 0
      %3223 = vmatprep.subr.bf16.mxu0 0
      %3224 = vmatpush1.bf16.msra.mxu0 0
      %3225 = vmatprep.subr.bf16.mxu0 0
      %3226 = vmatpush1.bf16.msra.mxu0 0
      %3227 = vmatprep.subr.bf16.mxu0 0
      %3228 = vmatpush1.bf16.msra.mxu0 0
      %3229 = vmatprep.subr.bf16.mxu0 0
      %3230 = vmatpush1.bf16.msra.mxu0 0
      %3231 = vmatprep.subr.bf16.mxu0 0
      %3232 = vmatpush1.bf16.msra.mxu0 0
      %3233 = vmatprep.subr.bf16.mxu0 0
      %3234 = vmatpush1.bf16.msra.mxu0 0
      %3235 = vmatprep.subr.bf16.mxu0 0
      %3236 = vmatpush1.bf16.msra.mxu0 0
      %3237 = vmatprep.mubr.bf16.mxu0 0
      %3238 = vmatmul.mubr.bf16.gmra.mrb[0].mxu0 %v2916
      %v3239 = vpop.f32.mrb[0].mxu0
      %v3240 = vadd.f32 0.0, %v3239
      %v3241 = vpop.f32.mrb[0].mxu0
      %v3242 = vadd.f32 0.0, %v3241
      %v3243 = vpop.f32.mrb[0].mxu0
      %v3244 = vpop.f32.mrb[0].mxu0
      %3245 = vdwg.mxu0
      %v3246 = vadd.f32 %v2800, %v2953
      %v3247 = vadd.f32 %v2801, %v2955
      %v3248 = vadd.f32 %v2802, %v2994
      %v3249 = vadd.f32 %v2803, %v2996
      %v3250 = vadd.f32 %v2804, %v3035
      %v3251 = vadd.f32 %v2805, %v3037
      %v3252 = vadd.f32 %v2806, %v3076
      %v3253 = vadd.f32 %v2807, %v3078
      %v3254 = vadd.f32 %v2808, %v3117
      %v3255 = vadd.f32 %v2809, %v3119
      %v3256 = vadd.f32 %v2810, %v3158
      %v3257 = vadd.f32 %v2811, %v3160
      %v3258 = vadd.f32 %v2812, %v3199
      %v3259 = vadd.f32 %v2813, %v3201
      %v3260 = vadd.f32 %v2814, %v3240
      %v3261 = vadd.f32 %v2815, %v3242
      %v3262 = vld [vmem:[%s165 + $0x7] sm:$0xff]
      %v3263 = vpack.c.bf16 %v3262, %v3262
      %s3264 = scalar_lea.vmem %s1, 896
      %v3265 = vld [vmem:[%s3264] sm:$0xff]
      %v3266 = vld [vmem:[%s3264 + $0x8] sm:$0xff]
      %v3267 = vld [vmem:[%s3264 + $0x10] sm:$0xff]
      %v3268 = vld [vmem:[%s3264 + $0x18] sm:$0xff]
      %v3269 = vld [vmem:[%s3264 + $0x20] sm:$0xff]
      %v3270 = vld [vmem:[%s3264 + $0x28] sm:$0xff]
      %v3271 = vld [vmem:[%s3264 + $0x30] sm:$0xff]
      %v3272 = vld [vmem:[%s3264 + $0x38] sm:$0xff]
      %v3273 = vld [vmem:[%s3264 + $0x40] sm:$0xff]
      %v3274 = vld [vmem:[%s3264 + $0x48] sm:$0xff]
      %v3275 = vld [vmem:[%s3264 + $0x50] sm:$0xff]
      %v3276 = vld [vmem:[%s3264 + $0x58] sm:$0xff]
      %v3277 = vld [vmem:[%s3264 + $0x60] sm:$0xff]
      %v3278 = vld [vmem:[%s3264 + $0x68] sm:$0xff]
      %v3279 = vld [vmem:[%s3264 + $0x70] sm:$0xff]
      %v3280 = vld [vmem:[%s3264 + $0x78] sm:$0xff]
      %v3297 = vunpack.c.l.b16 %v3265
      %v3298 = vunpack.c.h.b16 %v3265
      %v3299 = vunpack.c.l.b16 %v3266
      %v3300 = vunpack.c.h.b16 %v3266
      %v3301 = vunpack.c.l.b16 %v3267
      %v3302 = vunpack.c.h.b16 %v3267
      %v3303 = vunpack.c.l.b16 %v3268
      %v3304 = vunpack.c.h.b16 %v3268
      %v3305 = vunpack.c.l.b16 %v3269
      %v3306 = vunpack.c.h.b16 %v3269
      %v3307 = vunpack.c.l.b16 %v3270
      %v3308 = vunpack.c.h.b16 %v3270
      %v3309 = vunpack.c.l.b16 %v3271
      %v3310 = vunpack.c.h.b16 %v3271
      %v3311 = vunpack.c.l.b16 %v3272
      %v3312 = vunpack.c.h.b16 %v3272
      %v3313 = vunpack.c.l.b16 %v3273
      %v3314 = vunpack.c.h.b16 %v3273
      %v3315 = vunpack.c.l.b16 %v3274
      %v3316 = vunpack.c.h.b16 %v3274
      %v3317 = vunpack.c.l.b16 %v3275
      %v3318 = vunpack.c.h.b16 %v3275
      %v3319 = vunpack.c.l.b16 %v3276
      %v3320 = vunpack.c.h.b16 %v3276
      %v3321 = vunpack.c.l.b16 %v3277
      %v3322 = vunpack.c.h.b16 %v3277
      %v3323 = vunpack.c.l.b16 %v3278
      %v3324 = vunpack.c.h.b16 %v3278
      %v3325 = vunpack.c.l.b16 %v3279
      %v3326 = vunpack.c.h.b16 %v3279
      %v3327 = vunpack.c.l.b16 %v3280
      %v3328 = vunpack.c.h.b16 %v3280
      %v3329 = vpack.c.b16 %v3313, %v3297
      %v3330 = vpack.c.b16 %v3314, %v3298
      %v3331 = vpack.c.b16 %v3315, %v3299
      %v3332 = vpack.c.b16 %v3316, %v3300
      %v3333 = vpack.c.b16 %v3317, %v3301
      %v3334 = vpack.c.b16 %v3318, %v3302
      %v3335 = vpack.c.b16 %v3319, %v3303
      %v3336 = vpack.c.b16 %v3320, %v3304
      %v3337 = vpack.c.b16 %v3321, %v3305
      %v3338 = vpack.c.b16 %v3322, %v3306
      %v3339 = vpack.c.b16 %v3323, %v3307
      %v3340 = vpack.c.b16 %v3324, %v3308
      %v3341 = vpack.c.b16 %v3325, %v3309
      %v3342 = vpack.c.b16 %v3326, %v3310
      %v3343 = vpack.c.b16 %v3327, %v3311
      %v3344 = vpack.c.b16 %v3328, %v3312
      %v3362 = vsel %vm289, %v3263, 0
      %3364 = vmatprep.subr.bf16.mxu0 %v3330
      %3365 = vmatpush1.bf16.msra.mxu0 %v3329
      %3366 = vmatprep.subr.bf16.mxu0 0
      %3367 = vmatpush1.bf16.msra.mxu0 0
      %3368 = vmatprep.subr.bf16.mxu0 0
      %3369 = vmatpush1.bf16.msra.mxu0 0
      %3370 = vmatprep.subr.bf16.mxu0 0
      %3371 = vmatpush1.bf16.msra.mxu0 0
      %3372 = vmatprep.subr.bf16.mxu0 0
      %3373 = vmatpush1.bf16.msra.mxu0 0
      %3374 = vmatprep.subr.bf16.mxu0 0
      %3375 = vmatpush1.bf16.msra.mxu0 0
      %3376 = vmatprep.subr.bf16.mxu0 0
      %3377 = vmatpush1.bf16.msra.mxu0 0
      %3378 = vmatprep.subr.bf16.mxu0 0
      %3379 = vmatpush1.bf16.msra.mxu0 0
      %3380 = vmatprep.subr.bf16.mxu0 0
      %3381 = vmatpush1.bf16.msra.mxu0 0
      %3382 = vmatprep.subr.bf16.mxu0 0
      %3383 = vmatpush1.bf16.msra.mxu0 0
      %3384 = vmatprep.subr.bf16.mxu0 0
      %3385 = vmatpush1.bf16.msra.mxu0 0
      %3386 = vmatprep.subr.bf16.mxu0 0
      %3387 = vmatpush1.bf16.msra.mxu0 0
      %3388 = vmatprep.subr.bf16.mxu0 0
      %3389 = vmatpush1.bf16.msra.mxu0 0
      %3390 = vmatprep.subr.bf16.mxu0 0
      %3391 = vmatpush1.bf16.msra.mxu0 0
      %3392 = vmatprep.subr.bf16.mxu0 0
      %3393 = vmatpush1.bf16.msra.mxu0 0
      %3394 = vmatprep.subr.bf16.mxu0 0
      %3395 = vmatpush1.bf16.msra.mxu0 0
      %3396 = vmatprep.mubr.bf16.mxu0 0
      %3397 = vmatmul.mubr.bf16.gmra.mrb[0].mxu0 %v3362
      %v3398 = vpop.f32.mrb[0].mxu0
      %v3399 = vadd.f32 0.0, %v3398
      %v3400 = vpop.f32.mrb[0].mxu0
      %v3401 = vadd.f32 0.0, %v3400
      %v3402 = vpop.f32.mrb[0].mxu0
      %v3403 = vpop.f32.mrb[0].mxu0
      %3404 = vdwg.mxu0
      %3405 = vmatprep.subr.bf16.mxu0 %v3332
      %3406 = vmatpush1.bf16.msra.mxu0 %v3331
      %3407 = vmatprep.subr.bf16.mxu0 0
      %3408 = vmatpush1.bf16.msra.mxu0 0
      %3409 = vmatprep.subr.bf16.mxu0 0
      %3410 = vmatpush1.bf16.msra.mxu0 0
      %3411 = vmatprep.subr.bf16.mxu0 0
      %3412 = vmatpush1.bf16.msra.mxu0 0
      %3413 = vmatprep.subr.bf16.mxu0 0
      %3414 = vmatpush1.bf16.msra.mxu0 0
      %3415 = vmatprep.subr.bf16.mxu0 0
      %3416 = vmatpush1.bf16.msra.mxu0 0
      %3417 = vmatprep.subr.bf16.mxu0 0
      %3418 = vmatpush1.bf16.msra.mxu0 0
      %3419 = vmatprep.subr.bf16.mxu0 0
      %3420 = vmatpush1.bf16.msra.mxu0 0
      %3421 = vmatprep.subr.bf16.mxu0 0
      %3422 = vmatpush1.bf16.msra.mxu0 0
      %3423 = vmatprep.subr.bf16.mxu0 0
      %3424 = vmatpush1.bf16.msra.mxu0 0
      %3425 = vmatprep.subr.bf16.mxu0 0
      %3426 = vmatpush1.bf16.msra.mxu0 0
      %3427 = vmatprep.subr.bf16.mxu0 0
      %3428 = vmatpush1.bf16.msra.mxu0 0
      %3429 = vmatprep.subr.bf16.mxu0 0
      %3430 = vmatpush1.bf16.msra.mxu0 0
      %3431 = vmatprep.subr.bf16.mxu0 0
      %3432 = vmatpush1.bf16.msra.mxu0 0
      %3433 = vmatprep.subr.bf16.mxu0 0
      %3434 = vmatpush1.bf16.msra.mxu0 0
      %3435 = vmatprep.subr.bf16.mxu0 0
      %3436 = vmatpush1.bf16.msra.mxu0 0
      %3437 = vmatprep.mubr.bf16.mxu0 0
      %3438 = vmatmul.mubr.bf16.gmra.mrb[0].mxu0 %v3362
      %v3439 = vpop.f32.mrb[0].mxu0
      %v3440 = vadd.f32 0.0, %v3439
      %v3441 = vpop.f32.mrb[0].mxu0
      %v3442 = vadd.f32 0.0, %v3441
      %v3443 = vpop.f32.mrb[0].mxu0
      %v3444 = vpop.f32.mrb[0].mxu0
      %3445 = vdwg.mxu0
      %3446 = vmatprep.subr.bf16.mxu0 %v3334
      %3447 = vmatpush1.bf16.msra.mxu0 %v3333
      %3448 = vmatprep.subr.bf16.mxu0 0
      %3449 = vmatpush1.bf16.msra.mxu0 0
      %3450 = vmatprep.subr.bf16.mxu0 0
      %3451 = vmatpush1.bf16.msra.mxu0 0
      %3452 = vmatprep.subr.bf16.mxu0 0
      %3453 = vmatpush1.bf16.msra.mxu0 0
      %3454 = vmatprep.subr.bf16.mxu0 0
      %3455 = vmatpush1.bf16.msra.mxu0 0
      %3456 = vmatprep.subr.bf16.mxu0 0
      %3457 = vmatpush1.bf16.msra.mxu0 0
      %3458 = vmatprep.subr.bf16.mxu0 0
      %3459 = vmatpush1.bf16.msra.mxu0 0
      %3460 = vmatprep.subr.bf16.mxu0 0
      %3461 = vmatpush1.bf16.msra.mxu0 0
      %3462 = vmatprep.subr.bf16.mxu0 0
      %3463 = vmatpush1.bf16.msra.mxu0 0
      %3464 = vmatprep.subr.bf16.mxu0 0
      %3465 = vmatpush1.bf16.msra.mxu0 0
      %3466 = vmatprep.subr.bf16.mxu0 0
      %3467 = vmatpush1.bf16.msra.mxu0 0
      %3468 = vmatprep.subr.bf16.mxu0 0
      %3469 = vmatpush1.bf16.msra.mxu0 0
      %3470 = vmatprep.subr.bf16.mxu0 0
      %3471 = vmatpush1.bf16.msra.mxu0 0
      %3472 = vmatprep.subr.bf16.mxu0 0
      %3473 = vmatpush1.bf16.msra.mxu0 0
      %3474 = vmatprep.subr.bf16.mxu0 0
      %3475 = vmatpush1.bf16.msra.mxu0 0
      %3476 = vmatprep.subr.bf16.mxu0 0
      %3477 = vmatpush1.bf16.msra.mxu0 0
      %3478 = vmatprep.mubr.bf16.mxu0 0
      %3479 = vmatmul.mubr.bf16.gmra.mrb[0].mxu0 %v3362
      %v3480 = vpop.f32.mrb[0].mxu0
      %v3481 = vadd.f32 0.0, %v3480
      %v3482 = vpop.f32.mrb[0].mxu0
      %v3483 = vadd.f32 0.0, %v3482
      %v3484 = vpop.f32.mrb[0].mxu0
      %v3485 = vpop.f32.mrb[0].mxu0
      %3486 = vdwg.mxu0
      %3487 = vmatprep.subr.bf16.mxu0 %v3336
      %3488 = vmatpush1.bf16.msra.mxu0 %v3335
      %3489 = vmatprep.subr.bf16.mxu0 0
      %3490 = vmatpush1.bf16.msra.mxu0 0
      %3491 = vmatprep.subr.bf16.mxu0 0
      %3492 = vmatpush1.bf16.msra.mxu0 0
      %3493 = vmatprep.subr.bf16.mxu0 0
      %3494 = vmatpush1.bf16.msra.mxu0 0
      %3495 = vmatprep.subr.bf16.mxu0 0
      %3496 = vmatpush1.bf16.msra.mxu0 0
      %3497 = vmatprep.subr.bf16.mxu0 0
      %3498 = vmatpush1.bf16.msra.mxu0 0
      %3499 = vmatprep.subr.bf16.mxu0 0
      %3500 = vmatpush1.bf16.msra.mxu0 0
      %3501 = vmatprep.subr.bf16.mxu0 0
      %3502 = vmatpush1.bf16.msra.mxu0 0
      %3503 = vmatprep.subr.bf16.mxu0 0
      %3504 = vmatpush1.bf16.msra.mxu0 0
      %3505 = vmatprep.subr.bf16.mxu0 0
      %3506 = vmatpush1.bf16.msra.mxu0 0
      %3507 = vmatprep.subr.bf16.mxu0 0
      %3508 = vmatpush1.bf16.msra.mxu0 0
      %3509 = vmatprep.subr.bf16.mxu0 0
      %3510 = vmatpush1.bf16.msra.mxu0 0
      %3511 = vmatprep.subr.bf16.mxu0 0
      %3512 = vmatpush1.bf16.msra.mxu0 0
      %3513 = vmatprep.subr.bf16.mxu0 0
      %3514 = vmatpush1.bf16.msra.mxu0 0
      %3515 = vmatprep.subr.bf16.mxu0 0
      %3516 = vmatpush1.bf16.msra.mxu0 0
      %3517 = vmatprep.subr.bf16.mxu0 0
      %3518 = vmatpush1.bf16.msra.mxu0 0
      %3519 = vmatprep.mubr.bf16.mxu0 0
      %3520 = vmatmul.mubr.bf16.gmra.mrb[0].mxu0 %v3362
      %v3521 = vpop.f32.mrb[0].mxu0
      %v3522 = vadd.f32 0.0, %v3521
      %v3523 = vpop.f32.mrb[0].mxu0
      %v3524 = vadd.f32 0.0, %v3523
      %v3525 = vpop.f32.mrb[0].mxu0
      %v3526 = vpop.f32.mrb[0].mxu0
      %3527 = vdwg.mxu0
      %3528 = vmatprep.subr.bf16.mxu0 %v3338
      %3529 = vmatpush1.bf16.msra.mxu0 %v3337
      %3530 = vmatprep.subr.bf16.mxu0 0
      %3531 = vmatpush1.bf16.msra.mxu0 0
      %3532 = vmatprep.subr.bf16.mxu0 0
      %3533 = vmatpush1.bf16.msra.mxu0 0
      %3534 = vmatprep.subr.bf16.mxu0 0
      %3535 = vmatpush1.bf16.msra.mxu0 0
      %3536 = vmatprep.subr.bf16.mxu0 0
      %3537 = vmatpush1.bf16.msra.mxu0 0
      %3538 = vmatprep.subr.bf16.mxu0 0
      %3539 = vmatpush1.bf16.msra.mxu0 0
      %3540 = vmatprep.subr.bf16.mxu0 0
      %3541 = vmatpush1.bf16.msra.mxu0 0
      %3542 = vmatprep.subr.bf16.mxu0 0
      %3543 = vmatpush1.bf16.msra.mxu0 0
      %3544 = vmatprep.subr.bf16.mxu0 0
      %3545 = vmatpush1.bf16.msra.mxu0 0
      %3546 = vmatprep.subr.bf16.mxu0 0
      %3547 = vmatpush1.bf16.msra.mxu0 0
      %3548 = vmatprep.subr.bf16.mxu0 0
      %3549 = vmatpush1.bf16.msra.mxu0 0
      %3550 = vmatprep.subr.bf16.mxu0 0
      %3551 = vmatpush1.bf16.msra.mxu0 0
      %3552 = vmatprep.subr.bf16.mxu0 0
      %3553 = vmatpush1.bf16.msra.mxu0 0
      %3554 = vmatprep.subr.bf16.mxu0 0
      %3555 = vmatpush1.bf16.msra.mxu0 0
      %3556 = vmatprep.subr.bf16.mxu0 0
      %3557 = vmatpush1.bf16.msra.mxu0 0
      %3558 = vmatprep.subr.bf16.mxu0 0
      %3559 = vmatpush1.bf16.msra.mxu0 0
      %3560 = vmatprep.mubr.bf16.mxu0 0
      %3561 = vmatmul.mubr.bf16.gmra.mrb[0].mxu0 %v3362
      %v3562 = vpop.f32.mrb[0].mxu0
      %v3563 = vadd.f32 0.0, %v3562
      %v3564 = vpop.f32.mrb[0].mxu0
      %v3565 = vadd.f32 0.0, %v3564
      %v3566 = vpop.f32.mrb[0].mxu0
      %v3567 = vpop.f32.mrb[0].mxu0
      %3568 = vdwg.mxu0
      %3569 = vmatprep.subr.bf16.mxu0 %v3340
      %3570 = vmatpush1.bf16.msra.mxu0 %v3339
      %3571 = vmatprep.subr.bf16.mxu0 0
      %3572 = vmatpush1.bf16.msra.mxu0 0
      %3573 = vmatprep.subr.bf16.mxu0 0
      %3574 = vmatpush1.bf16.msra.mxu0 0
      %3575 = vmatprep.subr.bf16.mxu0 0
      %3576 = vmatpush1.bf16.msra.mxu0 0
      %3577 = vmatprep.subr.bf16.mxu0 0
      %3578 = vmatpush1.bf16.msra.mxu0 0
      %3579 = vmatprep.subr.bf16.mxu0 0
      %3580 = vmatpush1.bf16.msra.mxu0 0
      %3581 = vmatprep.subr.bf16.mxu0 0
      %3582 = vmatpush1.bf16.msra.mxu0 0
      %3583 = vmatprep.subr.bf16.mxu0 0
      %3584 = vmatpush1.bf16.msra.mxu0 0
      %3585 = vmatprep.subr.bf16.mxu0 0
      %3586 = vmatpush1.bf16.msra.mxu0 0
      %3587 = vmatprep.subr.bf16.mxu0 0
      %3588 = vmatpush1.bf16.msra.mxu0 0
      %3589 = vmatprep.subr.bf16.mxu0 0
      %3590 = vmatpush1.bf16.msra.mxu0 0
      %3591 = vmatprep.subr.bf16.mxu0 0
      %3592 = vmatpush1.bf16.msra.mxu0 0
      %3593 = vmatprep.subr.bf16.mxu0 0
      %3594 = vmatpush1.bf16.msra.mxu0 0
      %3595 = vmatprep.subr.bf16.mxu0 0
      %3596 = vmatpush1.bf16.msra.mxu0 0
      %3597 = vmatprep.subr.bf16.mxu0 0
      %3598 = vmatpush1.bf16.msra.mxu0 0
      %3599 = vmatprep.subr.bf16.mxu0 0
      %3600 = vmatpush1.bf16.msra.mxu0 0
      %3601 = vmatprep.mubr.bf16.mxu0 0
      %3602 = vmatmul.mubr.bf16.gmra.mrb[0].mxu0 %v3362
      %v3603 = vpop.f32.mrb[0].mxu0
      %v3604 = vadd.f32 0.0, %v3603
      %v3605 = vpop.f32.mrb[0].mxu0
      %v3606 = vadd.f32 0.0, %v3605
      %v3607 = vpop.f32.mrb[0].mxu0
      %v3608 = vpop.f32.mrb[0].mxu0
      %3609 = vdwg.mxu0
      %3610 = vmatprep.subr.bf16.mxu0 %v3342
      %3611 = vmatpush1.bf16.msra.mxu0 %v3341
      %3612 = vmatprep.subr.bf16.mxu0 0
      %3613 = vmatpush1.bf16.msra.mxu0 0
      %3614 = vmatprep.subr.bf16.mxu0 0
      %3615 = vmatpush1.bf16.msra.mxu0 0
      %3616 = vmatprep.subr.bf16.mxu0 0
      %3617 = vmatpush1.bf16.msra.mxu0 0
      %3618 = vmatprep.subr.bf16.mxu0 0
      %3619 = vmatpush1.bf16.msra.mxu0 0
      %3620 = vmatprep.subr.bf16.mxu0 0
      %3621 = vmatpush1.bf16.msra.mxu0 0
      %3622 = vmatprep.subr.bf16.mxu0 0
      %3623 = vmatpush1.bf16.msra.mxu0 0
      %3624 = vmatprep.subr.bf16.mxu0 0
      %3625 = vmatpush1.bf16.msra.mxu0 0
      %3626 = vmatprep.subr.bf16.mxu0 0
      %3627 = vmatpush1.bf16.msra.mxu0 0
      %3628 = vmatprep.subr.bf16.mxu0 0
      %3629 = vmatpush1.bf16.msra.mxu0 0
      %3630 = vmatprep.subr.bf16.mxu0 0
      %3631 = vmatpush1.bf16.msra.mxu0 0
      %3632 = vmatprep.subr.bf16.mxu0 0
      %3633 = vmatpush1.bf16.msra.mxu0 0
      %3634 = vmatprep.subr.bf16.mxu0 0
      %3635 = vmatpush1.bf16.msra.mxu0 0
      %3636 = vmatprep.subr.bf16.mxu0 0
      %3637 = vmatpush1.bf16.msra.mxu0 0
      %3638 = vmatprep.subr.bf16.mxu0 0
      %3639 = vmatpush1.bf16.msra.mxu0 0
      %3640 = vmatprep.subr.bf16.mxu0 0
      %3641 = vmatpush1.bf16.msra.mxu0 0
      %3642 = vmatprep.mubr.bf16.mxu0 0
      %3643 = vmatmul.mubr.bf16.gmra.mrb[0].mxu0 %v3362
      %v3644 = vpop.f32.mrb[0].mxu0
      %v3645 = vadd.f32 0.0, %v3644
      %v3646 = vpop.f32.mrb[0].mxu0
      %v3647 = vadd.f32 0.0, %v3646
      %v3648 = vpop.f32.mrb[0].mxu0
      %v3649 = vpop.f32.mrb[0].mxu0
      %3650 = vdwg.mxu0
      %3651 = vmatprep.subr.bf16.mxu0 %v3344
      %3652 = vmatpush1.bf16.msra.mxu0 %v3343
      %3653 = vmatprep.subr.bf16.mxu0 0
      %3654 = vmatpush1.bf16.msra.mxu0 0
      %3655 = vmatprep.subr.bf16.mxu0 0
      %3656 = vmatpush1.bf16.msra.mxu0 0
      %3657 = vmatprep.subr.bf16.mxu0 0
      %3658 = vmatpush1.bf16.msra.mxu0 0
      %3659 = vmatprep.subr.bf16.mxu0 0
      %3660 = vmatpush1.bf16.msra.mxu0 0
      %3661 = vmatprep.subr.bf16.mxu0 0
      %3662 = vmatpush1.bf16.msra.mxu0 0
      %3663 = vmatprep.subr.bf16.mxu0 0
      %3664 = vmatpush1.bf16.msra.mxu0 0
      %3665 = vmatprep.subr.bf16.mxu0 0
      %3666 = vmatpush1.bf16.msra.mxu0 0
      %3667 = vmatprep.subr.bf16.mxu0 0
      %3668 = vmatpush1.bf16.msra.mxu0 0
      %3669 = vmatprep.subr.bf16.mxu0 0
      %3670 = vmatpush1.bf16.msra.mxu0 0
      %3671 = vmatprep.subr.bf16.mxu0 0
      %3672 = vmatpush1.bf16.msra.mxu0 0
      %3673 = vmatprep.subr.bf16.mxu0 0
      %3674 = vmatpush1.bf16.msra.mxu0 0
      %3675 = vmatprep.subr.bf16.mxu0 0
      %3676 = vmatpush1.bf16.msra.mxu0 0
      %3677 = vmatprep.subr.bf16.mxu0 0
      %3678 = vmatpush1.bf16.msra.mxu0 0
      %3679 = vmatprep.subr.bf16.mxu0 0
      %3680 = vmatpush1.bf16.msra.mxu0 0
      %3681 = vmatprep.subr.bf16.mxu0 0
      %3682 = vmatpush1.bf16.msra.mxu0 0
      %3683 = vmatprep.mubr.bf16.mxu0 0
      %3684 = vmatmul.mubr.bf16.gmra.mrb[0].mxu0 %v3362
      %v3685 = vpop.f32.mrb[0].mxu0
      %v3686 = vadd.f32 0.0, %v3685
      %v3687 = vpop.f32.mrb[0].mxu0
      %v3688 = vadd.f32 0.0, %v3687
      %v3689 = vpop.f32.mrb[0].mxu0
      %v3690 = vpop.f32.mrb[0].mxu0
      %3691 = vdwg.mxu0
      %v3692 = vadd.f32 %v3246, %v3399
      %v3693 = vadd.f32 %v3247, %v3401
      %v3694 = vadd.f32 %v3248, %v3440
      %v3695 = vadd.f32 %v3249, %v3442
      %v3696 = vadd.f32 %v3250, %v3481
      %v3697 = vadd.f32 %v3251, %v3483
      %v3698 = vadd.f32 %v3252, %v3522
      %v3699 = vadd.f32 %v3253, %v3524
      %v3700 = vadd.f32 %v3254, %v3563
      %v3701 = vadd.f32 %v3255, %v3565
      %v3702 = vadd.f32 %v3256, %v3604
      %v3703 = vadd.f32 %v3257, %v3606
      %v3704 = vadd.f32 %v3258, %v3645
      %v3705 = vadd.f32 %v3259, %v3647
      %v3706 = vadd.f32 %v3260, %v3686
      %v3707 = vadd.f32 %v3261, %v3688
      %v3708 = vld [vmem:[%s165 + $0x8] sm:$0xff]
      %v3709 = vpack.c.bf16 %v3708, %v3708
      %s3710 = scalar_lea.vmem %s1, 1024
      %v3711 = vld [vmem:[%s3710] sm:$0xff]
      %v3712 = vld [vmem:[%s3710 + $0x8] sm:$0xff]
      %v3713 = vld [vmem:[%s3710 + $0x10] sm:$0xff]
      %v3714 = vld [vmem:[%s3710 + $0x18] sm:$0xff]
      %v3715 = vld [vmem:[%s3710 + $0x20] sm:$0xff]
      %v3716 = vld [vmem:[%s3710 + $0x28] sm:$0xff]
      %v3717 = vld [vmem:[%s3710 + $0x30] sm:$0xff]
      %v3718 = vld [vmem:[%s3710 + $0x38] sm:$0xff]
      %v3719 = vld [vmem:[%s3710 + $0x40] sm:$0xff]
      %v3720 = vld [vmem:[%s3710 + $0x48] sm:$0xff]
      %v3721 = vld [vmem:[%s3710 + $0x50] sm:$0xff]
      %v3722 = vld [vmem:[%s3710 + $0x58] sm:$0xff]
      %v3723 = vld [vmem:[%s3710 + $0x60] sm:$0xff]
      %v3724 = vld [vmem:[%s3710 + $0x68] sm:$0xff]
      %v3725 = vld [vmem:[%s3710 + $0x70] sm:$0xff]
      %v3726 = vld [vmem:[%s3710 + $0x78] sm:$0xff]
      %v3743 = vunpack.c.l.b16 %v3711
      %v3744 = vunpack.c.h.b16 %v3711
      %v3745 = vunpack.c.l.b16 %v3712
      %v3746 = vunpack.c.h.b16 %v3712
      %v3747 = vunpack.c.l.b16 %v3713
      %v3748 = vunpack.c.h.b16 %v3713
      %v3749 = vunpack.c.l.b16 %v3714
      %v3750 = vunpack.c.h.b16 %v3714
      %v3751 = vunpack.c.l.b16 %v3715
      %v3752 = vunpack.c.h.b16 %v3715
      %v3753 = vunpack.c.l.b16 %v3716
      %v3754 = vunpack.c.h.b16 %v3716
      %v3755 = vunpack.c.l.b16 %v3717
      %v3756 = vunpack.c.h.b16 %v3717
      %v3757 = vunpack.c.l.b16 %v3718
      %v3758 = vunpack.c.h.b16 %v3718
      %v3759 = vunpack.c.l.b16 %v3719
      %v3760 = vunpack.c.h.b16 %v3719
      %v3761 = vunpack.c.l.b16 %v3720
      %v3762 = vunpack.c.h.b16 %v3720
      %v3763 = vunpack.c.l.b16 %v3721
      %v3764 = vunpack.c.h.b16 %v3721
      %v3765 = vunpack.c.l.b16 %v3722
      %v3766 = vunpack.c.h.b16 %v3722
      %v3767 = vunpack.c.l.b16 %v3723
      %v3768 = vunpack.c.h.b16 %v3723
      %v3769 = vunpack.c.l.b16 %v3724
      %v3770 = vunpack.c.h.b16 %v3724
      %v3771 = vunpack.c.l.b16 %v3725
      %v3772 = vunpack.c.h.b16 %v3725
      %v3773 = vunpack.c.l.b16 %v3726
      %v3774 = vunpack.c.h.b16 %v3726
      %v3775 = vpack.c.b16 %v3759, %v3743
      %v3776 = vpack.c.b16 %v3760, %v3744
      %v3777 = vpack.c.b16 %v3761, %v3745
      %v3778 = vpack.c.b16 %v3762, %v3746
      %v3779 = vpack.c.b16 %v3763, %v3747
      %v3780 = vpack.c.b16 %v3764, %v3748
      %v3781 = vpack.c.b16 %v3765, %v3749
      %v3782 = vpack.c.b16 %v3766, %v3750
      %v3783 = vpack.c.b16 %v3767, %v3751
      %v3784 = vpack.c.b16 %v3768, %v3752
      %v3785 = vpack.c.b16 %v3769, %v3753
      %v3786 = vpack.c.b16 %v3770, %v3754
      %v3787 = vpack.c.b16 %v3771, %v3755
      %v3788 = vpack.c.b16 %v3772, %v3756
      %v3789 = vpack.c.b16 %v3773, %v3757
      %v3790 = vpack.c.b16 %v3774, %v3758
      %v3808 = vsel %vm289, %v3709, 0
      %3810 = vmatprep.subr.bf16.mxu0 %v3776
      %3811 = vmatpush1.bf16.msra.mxu0 %v3775
      %3812 = vmatprep.subr.bf16.mxu0 0
      %3813 = vmatpush1.bf16.msra.mxu0 0
      %3814 = vmatprep.subr.bf16.mxu0 0
      %3815 = vmatpush1.bf16.msra.mxu0 0
      %3816 = vmatprep.subr.bf16.mxu0 0
      %3817 = vmatpush1.bf16.msra.mxu0 0
      %3818 = vmatprep.subr.bf16.mxu0 0
      %3819 = vmatpush1.bf16.msra.mxu0 0
      %3820 = vmatprep.subr.bf16.mxu0 0
      %3821 = vmatpush1.bf16.msra.mxu0 0
      %3822 = vmatprep.subr.bf16.mxu0 0
      %3823 = vmatpush1.bf16.msra.mxu0 0
      %3824 = vmatprep.subr.bf16.mxu0 0
      %3825 = vmatpush1.bf16.msra.mxu0 0
      %3826 = vmatprep.subr.bf16.mxu0 0
      %3827 = vmatpush1.bf16.msra.mxu0 0
      %3828 = vmatprep.subr.bf16.mxu0 0
      %3829 = vmatpush1.bf16.msra.mxu0 0
      %3830 = vmatprep.subr.bf16.mxu0 0
      %3831 = vmatpush1.bf16.msra.mxu0 0
      %3832 = vmatprep.subr.bf16.mxu0 0
      %3833 = vmatpush1.bf16.msra.mxu0 0
      %3834 = vmatprep.subr.bf16.mxu0 0
      %3835 = vmatpush1.bf16.msra.mxu0 0
      %3836 = vmatprep.subr.bf16.mxu0 0
      %3837 = vmatpush1.bf16.msra.mxu0 0
      %3838 = vmatprep.subr.bf16.mxu0 0
      %3839 = vmatpush1.bf16.msra.mxu0 0
      %3840 = vmatprep.subr.bf16.mxu0 0
      %3841 = vmatpush1.bf16.msra.mxu0 0
      %3842 = vmatprep.mubr.bf16.mxu0 0
      %3843 = vmatmul.mubr.bf16.gmra.mrb[0].mxu0 %v3808
      %v3844 = vpop.f32.mrb[0].mxu0
      %v3845 = vadd.f32 0.0, %v3844
      %v3846 = vpop.f32.mrb[0].mxu0
      %v3847 = vadd.f32 0.0, %v3846
      %v3848 = vpop.f32.mrb[0].mxu0
      %v3849 = vpop.f32.mrb[0].mxu0
      %3850 = vdwg.mxu0
      %3851 = vmatprep.subr.bf16.mxu0 %v3778
      %3852 = vmatpush1.bf16.msra.mxu0 %v3777
      %3853 = vmatprep.subr.bf16.mxu0 0
      %3854 = vmatpush1.bf16.msra.mxu0 0
      %3855 = vmatprep.subr.bf16.mxu0 0
      %3856 = vmatpush1.bf16.msra.mxu0 0
      %3857 = vmatprep.subr.bf16.mxu0 0
      %3858 = vmatpush1.bf16.msra.mxu0 0
      %3859 = vmatprep.subr.bf16.mxu0 0
      %3860 = vmatpush1.bf16.msra.mxu0 0
      %3861 = vmatprep.subr.bf16.mxu0 0
      %3862 = vmatpush1.bf16.msra.mxu0 0
      %3863 = vmatprep.subr.bf16.mxu0 0
      %3864 = vmatpush1.bf16.msra.mxu0 0
      %3865 = vmatprep.subr.bf16.mxu0 0
      %3866 = vmatpush1.bf16.msra.mxu0 0
      %3867 = vmatprep.subr.bf16.mxu0 0
      %3868 = vmatpush1.bf16.msra.mxu0 0
      %3869 = vmatprep.subr.bf16.mxu0 0
      %3870 = vmatpush1.bf16.msra.mxu0 0
      %3871 = vmatprep.subr.bf16.mxu0 0
      %3872 = vmatpush1.bf16.msra.mxu0 0
      %3873 = vmatprep.subr.bf16.mxu0 0
      %3874 = vmatpush1.bf16.msra.mxu0 0
      %3875 = vmatprep.subr.bf16.mxu0 0
      %3876 = vmatpush1.bf16.msra.mxu0 0
      %3877 = vmatprep.subr.bf16.mxu0 0
      %3878 = vmatpush1.bf16.msra.mxu0 0
      %3879 = vmatprep.subr.bf16.mxu0 0
      %3880 = vmatpush1.bf16.msra.mxu0 0
      %3881 = vmatprep.subr.bf16.mxu0 0
      %3882 = vmatpush1.bf16.msra.mxu0 0
      %3883 = vmatprep.mubr.bf16.mxu0 0
      %3884 = vmatmul.mubr.bf16.gmra.mrb[0].mxu0 %v3808
      %v3885 = vpop.f32.mrb[0].mxu0
      %v3886 = vadd.f32 0.0, %v3885
      %v3887 = vpop.f32.mrb[0].mxu0
      %v3888 = vadd.f32 0.0, %v3887
      %v3889 = vpop.f32.mrb[0].mxu0
      %v3890 = vpop.f32.mrb[0].mxu0
      %3891 = vdwg.mxu0
      %3892 = vmatprep.subr.bf16.mxu0 %v3780
      %3893 = vmatpush1.bf16.msra.mxu0 %v3779
      %3894 = vmatprep.subr.bf16.mxu0 0
      %3895 = vmatpush1.bf16.msra.mxu0 0
      %3896 = vmatprep.subr.bf16.mxu0 0
      %3897 = vmatpush1.bf16.msra.mxu0 0
      %3898 = vmatprep.subr.bf16.mxu0 0
      %3899 = vmatpush1.bf16.msra.mxu0 0
      %3900 = vmatprep.subr.bf16.mxu0 0
      %3901 = vmatpush1.bf16.msra.mxu0 0
      %3902 = vmatprep.subr.bf16.mxu0 0
      %3903 = vmatpush1.bf16.msra.mxu0 0
      %3904 = vmatprep.subr.bf16.mxu0 0
      %3905 = vmatpush1.bf16.msra.mxu0 0
      %3906 = vmatprep.subr.bf16.mxu0 0
      %3907 = vmatpush1.bf16.msra.mxu0 0
      %3908 = vmatprep.subr.bf16.mxu0 0
      %3909 = vmatpush1.bf16.msra.mxu0 0
      %3910 = vmatprep.subr.bf16.mxu0 0
      %3911 = vmatpush1.bf16.msra.mxu0 0
      %3912 = vmatprep.subr.bf16.mxu0 0
      %3913 = vmatpush1.bf16.msra.mxu0 0
      %3914 = vmatprep.subr.bf16.mxu0 0
      %3915 = vmatpush1.bf16.msra.mxu0 0
      %3916 = vmatprep.subr.bf16.mxu0 0
      %3917 = vmatpush1.bf16.msra.mxu0 0
      %3918 = vmatprep.subr.bf16.mxu0 0
      %3919 = vmatpush1.bf16.msra.mxu0 0
      %3920 = vmatprep.subr.bf16.mxu0 0
      %3921 = vmatpush1.bf16.msra.mxu0 0
      %3922 = vmatprep.subr.bf16.mxu0 0
      %3923 = vmatpush1.bf16.msra.mxu0 0
      %3924 = vmatprep.mubr.bf16.mxu0 0
      %3925 = vmatmul.mubr.bf16.gmra.mrb[0].mxu0 %v3808
      %v3926 = vpop.f32.mrb[0].mxu0
      %v3927 = vadd.f32 0.0, %v3926
      %v3928 = vpop.f32.mrb[0].mxu0
      %v3929 = vadd.f32 0.0, %v3928
      %v3930 = vpop.f32.mrb[0].mxu0
      %v3931 = vpop.f32.mrb[0].mxu0
      %3932 = vdwg.mxu0
      %3933 = vmatprep.subr.bf16.mxu0 %v3782
      %3934 = vmatpush1.bf16.msra.mxu0 %v3781
      %3935 = vmatprep.subr.bf16.mxu0 0
      %3936 = vmatpush1.bf16.msra.mxu0 0
      %3937 = vmatprep.subr.bf16.mxu0 0
      %3938 = vmatpush1.bf16.msra.mxu0 0
      %3939 = vmatprep.subr.bf16.mxu0 0
      %3940 = vmatpush1.bf16.msra.mxu0 0
      %3941 = vmatprep.subr.bf16.mxu0 0
      %3942 = vmatpush1.bf16.msra.mxu0 0
      %3943 = vmatprep.subr.bf16.mxu0 0
      %3944 = vmatpush1.bf16.msra.mxu0 0
      %3945 = vmatprep.subr.bf16.mxu0 0
      %3946 = vmatpush1.bf16.msra.mxu0 0
      %3947 = vmatprep.subr.bf16.mxu0 0
      %3948 = vmatpush1.bf16.msra.mxu0 0
      %3949 = vmatprep.subr.bf16.mxu0 0
      %3950 = vmatpush1.bf16.msra.mxu0 0
      %3951 = vmatprep.subr.bf16.mxu0 0
      %3952 = vmatpush1.bf16.msra.mxu0 0
      %3953 = vmatprep.subr.bf16.mxu0 0
      %3954 = vmatpush1.bf16.msra.mxu0 0
      %3955 = vmatprep.subr.bf16.mxu0 0
      %3956 = vmatpush1.bf16.msra.mxu0 0
      %3957 = vmatprep.subr.bf16.mxu0 0
      %3958 = vmatpush1.bf16.msra.mxu0 0
      %3959 = vmatprep.subr.bf16.mxu0 0
      %3960 = vmatpush1.bf16.msra.mxu0 0
      %3961 = vmatprep.subr.bf16.mxu0 0
      %3962 = vmatpush1.bf16.msra.mxu0 0
      %3963 = vmatprep.subr.bf16.mxu0 0
      %3964 = vmatpush1.bf16.msra.mxu0 0
      %3965 = vmatprep.mubr.bf16.mxu0 0
      %3966 = vmatmul.mubr.bf16.gmra.mrb[0].mxu0 %v3808
      %v3967 = vpop.f32.mrb[0].mxu0
      %v3968 = vadd.f32 0.0, %v3967
      %v3969 = vpop.f32.mrb[0].mxu0
      %v3970 = vadd.f32 0.0, %v3969
      %v3971 = vpop.f32.mrb[0].mxu0
      %v3972 = vpop.f32.mrb[0].mxu0
      %3973 = vdwg.mxu0
      %3974 = vmatprep.subr.bf16.mxu0 %v3784
      %3975 = vmatpush1.bf16.msra.mxu0 %v3783
      %3976 = vmatprep.subr.bf16.mxu0 0
      %3977 = vmatpush1.bf16.msra.mxu0 0
      %3978 = vmatprep.subr.bf16.mxu0 0
      %3979 = vmatpush1.bf16.msra.mxu0 0
      %3980 = vmatprep.subr.bf16.mxu0 0
      %3981 = vmatpush1.bf16.msra.mxu0 0
      %3982 = vmatprep.subr.bf16.mxu0 0
      %3983 = vmatpush1.bf16.msra.mxu0 0
      %3984 = vmatprep.subr.bf16.mxu0 0
      %3985 = vmatpush1.bf16.msra.mxu0 0
      %3986 = vmatprep.subr.bf16.mxu0 0
      %3987 = vmatpush1.bf16.msra.mxu0 0
      %3988 = vmatprep.subr.bf16.mxu0 0
      %3989 = vmatpush1.bf16.msra.mxu0 0
      %3990 = vmatprep.subr.bf16.mxu0 0
      %3991 = vmatpush1.bf16.msra.mxu0 0
      %3992 = vmatprep.subr.bf16.mxu0 0
      %3993 = vmatpush1.bf16.msra.mxu0 0
      %3994 = vmatprep.subr.bf16.mxu0 0
      %3995 = vmatpush1.bf16.msra.mxu0 0
      %3996 = vmatprep.subr.bf16.mxu0 0
      %3997 = vmatpush1.bf16.msra.mxu0 0
      %3998 = vmatprep.subr.bf16.mxu0 0
      %3999 = vmatpush1.bf16.msra.mxu0 0
      %4000 = vmatprep.subr.bf16.mxu0 0
      %4001 = vmatpush1.bf16.msra.mxu0 0
      %4002 = vmatprep.subr.bf16.mxu0 0
      %4003 = vmatpush1.bf16.msra.mxu0 0
      %4004 = vmatprep.subr.bf16.mxu0 0
      %4005 = vmatpush1.bf16.msra.mxu0 0
      %4006 = vmatprep.mubr.bf16.mxu0 0
      %4007 = vmatmul.mubr.bf16.gmra.mrb[0].mxu0 %v3808
      %v4008 = vpop.f32.mrb[0].mxu0
      %v4009 = vadd.f32 0.0, %v4008
      %v4010 = vpop.f32.mrb[0].mxu0
      %v4011 = vadd.f32 0.0, %v4010
      %v4012 = vpop.f32.mrb[0].mxu0
      %v4013 = vpop.f32.mrb[0].mxu0
      %4014 = vdwg.mxu0
      %4015 = vmatprep.subr.bf16.mxu0 %v3786
      %4016 = vmatpush1.bf16.msra.mxu0 %v3785
      %4017 = vmatprep.subr.bf16.mxu0 0
      %4018 = vmatpush1.bf16.msra.mxu0 0
      %4019 = vmatprep.subr.bf16.mxu0 0
      %4020 = vmatpush1.bf16.msra.mxu0 0
      %4021 = vmatprep.subr.bf16.mxu0 0
      %4022 = vmatpush1.bf16.msra.mxu0 0
      %4023 = vmatprep.subr.bf16.mxu0 0
      %4024 = vmatpush1.bf16.msra.mxu0 0
      %4025 = vmatprep.subr.bf16.mxu0 0
      %4026 = vmatpush1.bf16.msra.mxu0 0
      %4027 = vmatprep.subr.bf16.mxu0 0
      %4028 = vmatpush1.bf16.msra.mxu0 0
      %4029 = vmatprep.subr.bf16.mxu0 0
      %4030 = vmatpush1.bf16.msra.mxu0 0
      %4031 = vmatprep.subr.bf16.mxu0 0
      %4032 = vmatpush1.bf16.msra.mxu0 0
      %4033 = vmatprep.subr.bf16.mxu0 0
      %4034 = vmatpush1.bf16.msra.mxu0 0
      %4035 = vmatprep.subr.bf16.mxu0 0
      %4036 = vmatpush1.bf16.msra.mxu0 0
      %4037 = vmatprep.subr.bf16.mxu0 0
      %4038 = vmatpush1.bf16.msra.mxu0 0
      %4039 = vmatprep.subr.bf16.mxu0 0
      %4040 = vmatpush1.bf16.msra.mxu0 0
      %4041 = vmatprep.subr.bf16.mxu0 0
      %4042 = vmatpush1.bf16.msra.mxu0 0
      %4043 = vmatprep.subr.bf16.mxu0 0
      %4044 = vmatpush1.bf16.msra.mxu0 0
      %4045 = vmatprep.subr.bf16.mxu0 0
      %4046 = vmatpush1.bf16.msra.mxu0 0
      %4047 = vmatprep.mubr.bf16.mxu0 0
      %4048 = vmatmul.mubr.bf16.gmra.mrb[0].mxu0 %v3808
      %v4049 = vpop.f32.mrb[0].mxu0
      %v4050 = vadd.f32 0.0, %v4049
      %v4051 = vpop.f32.mrb[0].mxu0
      %v4052 = vadd.f32 0.0, %v4051
      %v4053 = vpop.f32.mrb[0].mxu0
      %v4054 = vpop.f32.mrb[0].mxu0
      %4055 = vdwg.mxu0
      %4056 = vmatprep.subr.bf16.mxu0 %v3788
      %4057 = vmatpush1.bf16.msra.mxu0 %v3787
      %4058 = vmatprep.subr.bf16.mxu0 0
      %4059 = vmatpush1.bf16.msra.mxu0 0
      %4060 = vmatprep.subr.bf16.mxu0 0
      %4061 = vmatpush1.bf16.msra.mxu0 0
      %4062 = vmatprep.subr.bf16.mxu0 0
      %4063 = vmatpush1.bf16.msra.mxu0 0
      %4064 = vmatprep.subr.bf16.mxu0 0
      %4065 = vmatpush1.bf16.msra.mxu0 0
      %4066 = vmatprep.subr.bf16.mxu0 0
      %4067 = vmatpush1.bf16.msra.mxu0 0
      %4068 = vmatprep.subr.bf16.mxu0 0
      %4069 = vmatpush1.bf16.msra.mxu0 0
      %4070 = vmatprep.subr.bf16.mxu0 0
      %4071 = vmatpush1.bf16.msra.mxu0 0
      %4072 = vmatprep.subr.bf16.mxu0 0
      %4073 = vmatpush1.bf16.msra.mxu0 0
      %4074 = vmatprep.subr.bf16.mxu0 0
      %4075 = vmatpush1.bf16.msra.mxu0 0
      %4076 = vmatprep.subr.bf16.mxu0 0
      %4077 = vmatpush1.bf16.msra.mxu0 0
      %4078 = vmatprep.subr.bf16.mxu0 0
      %4079 = vmatpush1.bf16.msra.mxu0 0
      %4080 = vmatprep.subr.bf16.mxu0 0
      %4081 = vmatpush1.bf16.msra.mxu0 0
      %4082 = vmatprep.subr.bf16.mxu0 0
      %4083 = vmatpush1.bf16.msra.mxu0 0
      %4084 = vmatprep.subr.bf16.mxu0 0
      %4085 = vmatpush1.bf16.msra.mxu0 0
      %4086 = vmatprep.subr.bf16.mxu0 0
      %4087 = vmatpush1.bf16.msra.mxu0 0
      %4088 = vmatprep.mubr.bf16.mxu0 0
      %4089 = vmatmul.mubr.bf16.gmra.mrb[0].mxu0 %v3808
      %v4090 = vpop.f32.mrb[0].mxu0
      %v4091 = vadd.f32 0.0, %v4090
      %v4092 = vpop.f32.mrb[0].mxu0
      %v4093 = vadd.f32 0.0, %v4092
      %v4094 = vpop.f32.mrb[0].mxu0
      %v4095 = vpop.f32.mrb[0].mxu0
      %4096 = vdwg.mxu0
      %4097 = vmatprep.subr.bf16.mxu0 %v3790
      %4098 = vmatpush1.bf16.msra.mxu0 %v3789
      %4099 = vmatprep.subr.bf16.mxu0 0
      %4100 = vmatpush1.bf16.msra.mxu0 0
      %4101 = vmatprep.subr.bf16.mxu0 0
      %4102 = vmatpush1.bf16.msra.mxu0 0
      %4103 = vmatprep.subr.bf16.mxu0 0
      %4104 = vmatpush1.bf16.msra.mxu0 0
      %4105 = vmatprep.subr.bf16.mxu0 0
      %4106 = vmatpush1.bf16.msra.mxu0 0
      %4107 = vmatprep.subr.bf16.mxu0 0
      %4108 = vmatpush1.bf16.msra.mxu0 0
      %4109 = vmatprep.subr.bf16.mxu0 0
      %4110 = vmatpush1.bf16.msra.mxu0 0
      %4111 = vmatprep.subr.bf16.mxu0 0
      %4112 = vmatpush1.bf16.msra.mxu0 0
      %4113 = vmatprep.subr.bf16.mxu0 0
      %4114 = vmatpush1.bf16.msra.mxu0 0
      %4115 = vmatprep.subr.bf16.mxu0 0
      %4116 = vmatpush1.bf16.msra.mxu0 0
      %4117 = vmatprep.subr.bf16.mxu0 0
      %4118 = vmatpush1.bf16.msra.mxu0 0
      %4119 = vmatprep.subr.bf16.mxu0 0
      %4120 = vmatpush1.bf16.msra.mxu0 0
      %4121 = vmatprep.subr.bf16.mxu0 0
      %4122 = vmatpush1.bf16.msra.mxu0 0
      %4123 = vmatprep.subr.bf16.mxu0 0
      %4124 = vmatpush1.bf16.msra.mxu0 0
      %4125 = vmatprep.subr.bf16.mxu0 0
      %4126 = vmatpush1.bf16.msra.mxu0 0
      %4127 = vmatprep.subr.bf16.mxu0 0
      %4128 = vmatpush1.bf16.msra.mxu0 0
      %4129 = vmatprep.mubr.bf16.mxu0 0
      %4130 = vmatmul.mubr.bf16.gmra.mrb[0].mxu0 %v3808
      %v4131 = vpop.f32.mrb[0].mxu0
      %v4132 = vadd.f32 0.0, %v4131
      %v4133 = vpop.f32.mrb[0].mxu0
      %v4134 = vadd.f32 0.0, %v4133
      %v4135 = vpop.f32.mrb[0].mxu0
      %v4136 = vpop.f32.mrb[0].mxu0
      %4137 = vdwg.mxu0
      %v4138 = vadd.f32 %v3692, %v3845
      %v4139 = vadd.f32 %v3693, %v3847
      %v4140 = vadd.f32 %v3694, %v3886
      %v4141 = vadd.f32 %v3695, %v3888
      %v4142 = vadd.f32 %v3696, %v3927
      %v4143 = vadd.f32 %v3697, %v3929
      %v4144 = vadd.f32 %v3698, %v3968
      %v4145 = vadd.f32 %v3699, %v3970
      %v4146 = vadd.f32 %v3700, %v4009
      %v4147 = vadd.f32 %v3701, %v4011
      %v4148 = vadd.f32 %v3702, %v4050
      %v4149 = vadd.f32 %v3703, %v4052
      %v4150 = vadd.f32 %v3704, %v4091
      %v4151 = vadd.f32 %v3705, %v4093
      %v4152 = vadd.f32 %v3706, %v4132
      %v4153 = vadd.f32 %v3707, %v4134
      %v4154 = vld [vmem:[%s2] sm:$0xff]
      %v4155 = vld [vmem:[%s2 + $0x8] sm:$0xff]
      %v4158 = vlaneseq
      %v4159 = vshrl.u32 %v4158, 7
      %v4160 = vsub.s32 0, %v4159
      %v4161 = vrot.slane %v4154, %v4160
      %v4162 = vlaneseq
      %v4163 = vshrl.u32 %v4162, 7
      %v4164 = vsub.s32 1, %v4163
      %v4165 = vrot.slane %v4154, %v4164
      %v4166 = vlaneseq
      %v4167 = vshrl.u32 %v4166, 7
      %v4168 = vsub.s32 2, %v4167
      %v4169 = vrot.slane %v4154, %v4168
      %v4170 = vlaneseq
      %v4171 = vshrl.u32 %v4170, 7
      %v4172 = vsub.s32 3, %v4171
      %v4173 = vrot.slane %v4154, %v4172
      %v4174 = vlaneseq
      %v4175 = vshrl.u32 %v4174, 7
      %v4176 = vsub.s32 4, %v4175
      %v4177 = vrot.slane %v4154, %v4176
      %v4178 = vlaneseq
      %v4179 = vshrl.u32 %v4178, 7
      %v4180 = vsub.s32 5, %v4179
      %v4181 = vrot.slane %v4154, %v4180
      %v4182 = vlaneseq
      %v4183 = vshrl.u32 %v4182, 7
      %v4184 = vsub.s32 6, %v4183
      %v4185 = vrot.slane %v4154, %v4184
      %v4186 = vlaneseq
      %v4187 = vshrl.u32 %v4186, 7
      %v4188 = vsub.s32 7, %v4187
      %v4189 = vrot.slane %v4154, %v4188
      %v4190 = vlaneseq
      %v4191 = vshrl.u32 %v4190, 7
      %v4192 = vsub.s32 0, %v4191
      %v4193 = vrot.slane %v4155, %v4192
      %v4194 = vlaneseq
      %v4195 = vshrl.u32 %v4194, 7
      %v4196 = vsub.s32 1, %v4195
      %v4197 = vrot.slane %v4155, %v4196
      %v4198 = vlaneseq
      %v4199 = vshrl.u32 %v4198, 7
      %v4200 = vsub.s32 2, %v4199
      %v4201 = vrot.slane %v4155, %v4200
      %v4202 = vlaneseq
      %v4203 = vshrl.u32 %v4202, 7
      %v4204 = vsub.s32 3, %v4203
      %v4205 = vrot.slane %v4155, %v4204
      %v4206 = vlaneseq
      %v4207 = vshrl.u32 %v4206, 7
      %v4208 = vsub.s32 4, %v4207
      %v4209 = vrot.slane %v4155, %v4208
      %v4210 = vlaneseq
      %v4211 = vshrl.u32 %v4210, 7
      %v4212 = vsub.s32 5, %v4211
      %v4213 = vrot.slane %v4155, %v4212
      %v4214 = vlaneseq
      %v4215 = vshrl.u32 %v4214, 7
      %v4216 = vsub.s32 6, %v4215
      %v4217 = vrot.slane %v4155, %v4216
      %v4218 = vlaneseq
      %v4219 = vshrl.u32 %v4218, 7
      %v4220 = vsub.s32 7, %v4219
      %v4221 = vrot.slane %v4155, %v4220
      %v4238 = vadd.f32 %v4138, %v4161
      %v4239 = vadd.f32 %v4139, %v4165
      %v4240 = vadd.f32 %v4140, %v4169
      %v4241 = vadd.f32 %v4141, %v4173
      %v4242 = vadd.f32 %v4142, %v4177
      %v4243 = vadd.f32 %v4143, %v4181
      %v4244 = vadd.f32 %v4144, %v4185
      %v4245 = vadd.f32 %v4145, %v4189
      %v4246 = vadd.f32 %v4146, %v4193
      %v4247 = vadd.f32 %v4147, %v4197
      %v4248 = vadd.f32 %v4148, %v4201
      %v4249 = vadd.f32 %v4149, %v4205
      %v4250 = vadd.f32 %v4150, %v4209
      %v4251 = vadd.f32 %v4151, %v4213
      %v4252 = vadd.f32 %v4152, %v4217
      %v4253 = vadd.f32 %v4153, %v4221
      %v4254 = vmax.f32 %v4238, 0.0
      %v4255 = vmax.f32 %v4239, 0.0
      %v4256 = vmax.f32 %v4240, 0.0
      %v4257 = vmax.f32 %v4241, 0.0
      %v4258 = vmax.f32 %v4242, 0.0
      %v4259 = vmax.f32 %v4243, 0.0
      %v4260 = vmax.f32 %v4244, 0.0
      %v4261 = vmax.f32 %v4245, 0.0
      %v4262 = vmax.f32 %v4246, 0.0
      %v4263 = vmax.f32 %v4247, 0.0
      %v4264 = vmax.f32 %v4248, 0.0
      %v4265 = vmax.f32 %v4249, 0.0
      %v4266 = vmax.f32 %v4250, 0.0
      %v4267 = vmax.f32 %v4251, 0.0
      %v4268 = vmax.f32 %v4252, 0.0
      %v4269 = vmax.f32 %v4253, 0.0
      %4270 = vst [vmem:[%s170] sm:$0xff] %v4254
      %4271 = vst [vmem:[%s170 + $0x8] sm:$0xff] %v4255
      %4272 = vst [vmem:[%s170 + $0x10] sm:$0xff] %v4256
      %4273 = vst [vmem:[%s170 + $0x18] sm:$0xff] %v4257
      %4274 = vst [vmem:[%s170 + $0x20] sm:$0xff] %v4258
      %4275 = vst [vmem:[%s170 + $0x28] sm:$0xff] %v4259
      %4276 = vst [vmem:[%s170 + $0x30] sm:$0xff] %v4260
      %4277 = vst [vmem:[%s170 + $0x38] sm:$0xff] %v4261
      %4278 = vst [vmem:[%s170 + $0x40] sm:$0xff] %v4262
      %4279 = vst [vmem:[%s170 + $0x48] sm:$0xff] %v4263
      %4280 = vst [vmem:[%s170 + $0x50] sm:$0xff] %v4264
      %4281 = vst [vmem:[%s170 + $0x58] sm:$0xff] %v4265
      %4282 = vst [vmem:[%s170 + $0x60] sm:$0xff] %v4266
      %4283 = vst [vmem:[%s170 + $0x68] sm:$0xff] %v4267
      %4284 = vst [vmem:[%s170 + $0x70] sm:$0xff] %v4268
      %4285 = vst [vmem:[%s170 + $0x78] sm:$0xff] %v4269
      %p4286 = scmp.lt.s32.totalorder %s14, 1
      %s4287 = scalar_select %p4286, %s14, 1
      %s4288 = smul.addr %s4287, 16
      %s4289 = smul.addr %s4288, 8
      %s4290 = scalar_lea.vmem %s3, %s4289
      // Predicated region
      $region33: #{conv_layer_forward.1} parent=31 // pred_check
        %p4291 = pneg %p100
      $region34: #{conv_layer_forward.1} parent=31 // pred_check_branch
        %4293 = sbr.rel (%p4291) target = $region36
      $region35: #{conv_layer_forward.1} parent=31 // pred_region
        _
      $region36: #{conv_layer_forward.1} parent=31 // pred_fallthru
        _
    $region32: #{conv_layer_forward.1} parent=5 // pred_fallthru
      _
    %p4294 = scmp.le.s32.totalorder 2, %s9
    // Predicated region
    $region37: #{conv_layer_forward.1} parent=5 // pred_check
      %p4295 = pneg %p4294
    $region38: #{conv_layer_forward.1} parent=5 // pred_check_branch
      %4297 = sbr.rel (%p4295) target = $region40
    $region39: #{conv_layer_forward.1} parent=5 // pred_region
      %s4298 = ssub.s32 %s9, 2
      // Predicated region
      $region41: #{conv_layer_forward.1} parent=39 // pred_check
        %p4299 = pneg %p106
      $region42: #{conv_layer_forward.1} parent=39 // pred_check_branch
        %4301 = sbr.rel (%p4299) target = $region44
      $region43: #{conv_layer_forward.1} parent=39 // pred_region
        %p4302 = scmp.lt.s32.totalorder %s15, 1
        %s4303 = scalar_select %p4302, %s15, 1
        %s4304 = smul.addr %s4303, 16
        %s4305 = smul.addr %s4304, 8
        %s4306 = scalar_lea.vmem %s3, %s4305
      $region44: #{conv_layer_forward.1} parent=39 // pred_fallthru
        _
    $region40: #{conv_layer_forward.1} parent=5 // pred_fallthru
      _
  $region6: #{conv_layer_forward.1} parent=0 // loop_footer
    %s13 = sadd.s32 1, %s9
  $region7: #{conv_layer_forward.1} parent=0 // loop_footer_branch
    %8 = sbr.rel target = $region3
  $region8: #{conv_layer_forward.1} parent=0 // loop_exit
    _

</llo_original>
